<compile_context>
chip_gen: v7x
topology: tpu7x:2x2x1
jax: 0.10.0
libtpu: 0.0.40
codegen_flags: <defaults>
</compile_context>

<pallas_src>
import functools

import jax
import jax.numpy as jnp
from jax.experimental import pallas as pl
from jax.experimental.pallas import tpu as pltpu


# ----------------------------- config (consistent with the module) -------------------------------
N_HIDDEN = 32
N_LAYERS = 2
DICT_SIZE = {"fr": 24, "en": 20}
MAX_LEN = {"fr": 8, "en": 6}
BATCH = 2
V_PAD = 128  # lane-dense padded width for the fc logits output slab


# ----------------------------- in-kernel GRU cell (1 MXU dot, PyTorch semantics) ------------------
def _gru_step(x, h, w_pack, b_pack, H):
    """PyTorch-semantics GRU cell.

    x, h   : (B, H)
    w_pack : (2H, 6H) block-diagonal [[Wi, 0], [0, Wh]]  (gate order r|z|n)
    b_pack : (1, 6H)  = [bi | bh]
    """
    xh = jnp.concatenate([x, h], axis=1)                                   # (B, 2H)
    g = jnp.dot(xh, w_pack, preferred_element_type=jnp.float32) + b_pack   # (B, 6H) = [gi | gh]
    gi_r, gi_z, gi_n = g[:, 0:H], g[:, H:2 * H], g[:, 2 * H:3 * H]
    gh_r, gh_z, gh_n = g[:, 3 * H:4 * H], g[:, 4 * H:5 * H], g[:, 5 * H:6 * H]
    r = jax.nn.sigmoid(gi_r + gh_r)
    z = jax.nn.sigmoid(gi_z + gh_z)
    n = jnp.tanh(gi_n + r * gh_n)          # bh_n lives inside gh_n: matches PyTorch
    return (1.0 - z) * n + z * h


# ----------------------------- single fused encoder+decoder kernel --------------------------------
def _seq2seq_kernel(tok_ref, emb_fr_ref, enc_w_ref, enc_b_ref,
                    emb_en_ref, dec_w_ref, dec_b_ref, fcw_ref, fcb_ref,
                    logits_ref, h_out_ref, *, B, S, L, H, T, V_fr, V_en):
    """tok_ref    : (S*B, 1) int32, t-major (row t*B+b = source token of batch b at step t)
       emb_fr_ref : (V_fr, H)      emb_en_ref : (V_en, H)
       enc/dec_w  : (L, 2H, 6H)    enc/dec_b  : (L, 1, 6H)
       fcw_ref    : (H, V_PAD)     fcb_ref    : (1, V_PAD)
       logits_ref : (T*B, V_PAD)   h_out_ref  : (L, B, H)
    """
    # ---------------- encoder ----------------
    # TODO(synk): reference encoder() body is a stub; this is the canonical GRU fill-in.
    # One-hot embedding lookup for ALL source tokens at once (one tiny MXU dot),
    # instead of per-step dynamic-slice gathers.
    col_fr = jax.lax.broadcasted_iota(jnp.int32, (S * B, V_fr), 1)
    onehot_fr = (col_fr == tok_ref[...]).astype(jnp.float32)               # (S*B, V_fr)
    x_all = jnp.dot(onehot_fr, emb_fr_ref[...],
                    preferred_element_type=jnp.float32)                    # (S*B, H)

    hs = [jnp.zeros((B, H), jnp.float32) for _ in range(L)]
    for t in range(S):
        x = x_all[t * B:(t + 1) * B, :]                                    # (B, H), static slice
        for l in range(L):
            hs[l] = _gru_step(x, hs[l], enc_w_ref[l], enc_b_ref[l], H)     # per-use weight load
            x = hs[l]

    # ---------------- greedy decoder (hidden carried in registers, no HBM round trip) -------------
    # TODO(synk): reference decoder() body is a stub; greedy argmax feedback is the
    #             canonical fill-in.  SOS id 0 matches `vec_in = torch.zeros(...)` in the stub.
    x = jnp.broadcast_to(emb_en_ref[0:1, :], (B, H))                       # SOS embedding
    col_en = jax.lax.broadcasted_iota(jnp.int32, (B, V_en), 1)
    logits_steps = []
    for i in range(T):
        for l in range(L):
            hs[l] = _gru_step(x, hs[l], dec_w_ref[l], dec_b_ref[l], H)
            x = hs[l]
        logits = jnp.dot(x, fcw_ref[...],
                         preferred_element_type=jnp.float32) + fcb_ref[...]  # (B, V_PAD)
        logits_steps.append(logits)
        # greedy argmax over the real vocab columns (first-max index, PyTorch-style),
        # then embedding feedback via one-hot matmul (no data-dependent gather).
        lg = logits[:, :V_en]
        m = jnp.max(lg, axis=-1, keepdims=True)
        idx = jnp.min(jnp.where(lg >= m, col_en, V_en), axis=-1, keepdims=True)  # (B, 1)
        onehot = (col_en == idx).astype(jnp.float32)                             # (B, V_en)
        x = jnp.dot(onehot, emb_en_ref[...], preferred_element_type=jnp.float32)  # (B, H)

    # single lane-dense bulk store of all decoder logits (instead of T masked stores)
    logits_ref[...] = jnp.concatenate(logits_steps, axis=0)               # (T*B, V_PAD)
    for l in range(L):
        h_out_ref[l] = hs[l]


# ----------------------------- parameter construction --------------------------------------------
def _pack_gru(wi, wh, bi, bh):
    """Pack per-layer GRU weights block-diagonally: (L,H,3H)x2 -> (L,2H,6H); biases -> (L,1,6H)."""
    L, H, H3 = wi.shape
    zero = jnp.zeros((L, H, H3), jnp.float32)
    top = jnp.concatenate([wi, zero], axis=2)       # (L, H, 6H)
    bot = jnp.concatenate([zero, wh], axis=2)       # (L, H, 6H)
    w_pack = jnp.concatenate([top, bot], axis=1)    # (L, 2H, 6H)
    b_pack = jnp.concatenate([bi, bh], axis=2)      # (L, 1, 6H)
    return w_pack, b_pack


def init_params(key):
    H = N_HIDDEN
    scale = 1.0 / jnp.sqrt(jnp.float32(H))
    keys = jax.random.split(key, 6)

    def gru_stack(k):
        ks = jax.random.split(k, 4)
        # per-gate weights pre-concatenated along the output axis (gate order r, z, n)
        wi = jax.random.uniform(ks[0], (N_LAYERS, H, 3 * H), jnp.float32, -scale, scale)
        wh = jax.random.uniform(ks[1], (N_LAYERS, H, 3 * H), jnp.float32, -scale, scale)
        bi = jax.random.uniform(ks[2], (N_LAYERS, 1, 3 * H), jnp.float32, -scale, scale)
        bh = jax.random.uniform(ks[3], (N_LAYERS, 1, 3 * H), jnp.float32, -scale, scale)
        return _pack_gru(wi, wh, bi, bh)

    V = DICT_SIZE["en"]
    fc_w = jax.random.uniform(keys[4], (H, V), jnp.float32, -scale, scale)
    fc_b = jax.random.uniform(keys[5], (1, V), jnp.float32, -scale, scale)
    enc_w, enc_b = gru_stack(keys[2])
    dec_w, dec_b = gru_stack(keys[3])
    return {
        "fr_embedding": jax.random.normal(keys[0], (DICT_SIZE["fr"], H), jnp.float32),
        "en_embedding": jax.random.normal(keys[1], (DICT_SIZE["en"], H), jnp.float32),
        "enc_w": enc_w, "enc_b": enc_b,
        "dec_w": dec_w, "dec_b": dec_b,
        # fc padded to a lane-dense 128-wide output; real logits sliced out in the wrapper
        "fc_w_pad": jnp.zeros((H, V_PAD), jnp.float32).at[:, :V].set(fc_w),
        "fc_b_pad": jnp.zeros((1, V_PAD), jnp.float32).at[:, :V].set(fc_b),
    }


# ----------------------------- forward pass -------------------------------------------------------
@jax.jit
def seq2seq_forward(params, x_tokens):
    B, S = x_tokens.shape
    H, L = N_HIDDEN, N_LAYERS
    T, V_en = MAX_LEN["en"], DICT_SIZE["en"]
    V_fr = DICT_SIZE["fr"]

    # t-major flattened token ids for the one-shot one-hot embedding matmul
    tok_flat = x_tokens.astype(jnp.int32).T.reshape(S * B, 1)

    kernel = functools.partial(_seq2seq_kernel, B=B, S=S, L=L, H=H, T=T,
                               V_fr=V_fr, V_en=V_en)
    logits_flat, hidden_out = pl.pallas_call(
        kernel,
        in_specs=[pl.BlockSpec(memory_space=pltpu.MemorySpace.VMEM)] * 9,
        out_specs=(
            pl.BlockSpec(memory_space=pltpu.MemorySpace.VMEM),
            pl.BlockSpec(memory_space=pltpu.MemorySpace.VMEM),
        ),
        out_shape=(
            jax.ShapeDtypeStruct((T * B, V_PAD), jnp.float32),
            jax.ShapeDtypeStruct((L, B, H), jnp.float32),
        ),
    )(tok_flat,
      params["fr_embedding"], params["enc_w"], params["enc_b"],
      params["en_embedding"], params["dec_w"], params["dec_b"],
      params["fc_w_pad"], params["fc_b_pad"])

    # (T*B, V_PAD) t-major -> (B, max_len_en, V_en)
    vec_out = logits_flat.reshape(T, B, V_PAD).transpose(1, 0, 2)[:, :, :V_en]
    attn = None                     # skeleton returns None for attention
    return vec_out, hidden_out, attn


# ----------------------------- main ----------------------------------------------------------------
if __name__ == "__main__":
    key = jax.random.PRNGKey(0)
    k_in, k_par = jax.random.split(key)

    # deterministic example input: (B, S_fr) french token ids
    x = jax.random.randint(k_in, (BATCH, MAX_LEN["fr"]), 0, DICT_SIZE["fr"], dtype=jnp.int32)
    params = init_params(k_par)

    vec_out, hidden, attn = seq2seq_forward(params, x)
    jax.block_until_ready(vec_out)
    jax.block_until_ready(hidden)

    assert vec_out.shape == (BATCH, MAX_LEN["en"], DICT_SIZE["en"])
    assert hidden.shape == (N_LAYERS, BATCH, N_HIDDEN)
    assert attn is None
    assert bool(jnp.all(jnp.isfinite(vec_out)))

    print("KERNEL_OK")
</pallas_src>

<mosaic_0001>
module attributes {stable_mosaic.version = 11 : i64} {
  func.func @_seq2seq_kernel(%arg0: memref<16x1xi32, #tpu.memory_space<vmem>>, %arg1: memref<24x32xf32, #tpu.memory_space<vmem>>, %arg2: memref<2x64x192xf32, #tpu.memory_space<vmem>>, %arg3: memref<2x1x192xf32, #tpu.memory_space<vmem>>, %arg4: memref<20x32xf32, #tpu.memory_space<vmem>>, %arg5: memref<2x64x192xf32, #tpu.memory_space<vmem>>, %arg6: memref<2x1x192xf32, #tpu.memory_space<vmem>>, %arg7: memref<32x128xf32, #tpu.memory_space<vmem>>, %arg8: memref<1x128xf32, #tpu.memory_space<vmem>>, %arg9: memref<12x128xf32, #tpu.memory_space<vmem>>, %arg10: memref<2x2x32xf32, #tpu.memory_space<vmem>>) attributes {dimension_semantics = [], scalar_prefetch = 0 : i64, scratch_operands = 0 : i64, tpu.core_type = #tpu.core_type<tc>} {
    %0 = tpu.iota {dimensions = array<i32: 1>} : vector<16x24xi32>
    %c0 = arith.constant 0 : index
    %c0_0 = arith.constant 0 : index
    %1 = vector.load %arg0[%c0, %c0_0] : memref<16x1xi32, #tpu.memory_space<vmem>>, vector<16x1xi32>
    %2 = vector.broadcast %1 : vector<16x1xi32> to vector<16x24xi32>
    %3 = arith.cmpi eq, %0, %2 : vector<16x24xi32>
    %4 = arith.extui %3 : vector<16x24xi1> to vector<16x24xi32>
    %5 = arith.sitofp %4 : vector<16x24xi32> to vector<16x24xf32>
    %c0_1 = arith.constant 0 : index
    %c0_2 = arith.constant 0 : index
    %6 = vector.load %arg1[%c0_1, %c0_2] : memref<24x32xf32, #tpu.memory_space<vmem>>, vector<24x32xf32>
    %cst = arith.constant dense<0.000000e+00> : vector<16x32xf32>
    %7 = tpu.matmul %5, %6, %cst {dimension_numbers = #tpu.dot_dimension_numbers<[1], [0], [0], [1], [0, 0, 1, 1], [], []>} : vector<16x24xf32>, vector<24x32xf32>, vector<16x32xf32> -> vector<16x32xf32>
    %cst_3 = arith.constant 0.000000e+00 : f32
    %8 = vector.broadcast %cst_3 : f32 to vector<2x32xf32>
    %cst_4 = arith.constant 0.000000e+00 : f32
    %9 = vector.broadcast %cst_4 : f32 to vector<2x32xf32>
    %10 = vector.extract_strided_slice %7 {offsets = [0, 0], sizes = [2, 32], strides = [1, 1]} : vector<16x32xf32> to vector<2x32xf32>
    %c0_5 = arith.constant 0 : index
    %c0_6 = arith.constant 0 : index
    %c0_7 = arith.constant 0 : index
    %11 = vector.load %arg2[%c0_5, %c0_6, %c0_7] : memref<2x64x192xf32, #tpu.memory_space<vmem>>, vector<1x64x192xf32>
    %12 = vector.shape_cast %11 : vector<1x64x192xf32> to vector<64x192xf32>
    %c0_8 = arith.constant 0 : index
    %c0_9 = arith.constant 0 : index
    %c0_10 = arith.constant 0 : index
    %13 = vector.load %arg3[%c0_8, %c0_9, %c0_10] : memref<2x1x192xf32, #tpu.memory_space<vmem>>, vector<1x1x192xf32>
    %14 = vector.shape_cast %13 : vector<1x1x192xf32> to vector<1x192xf32>
    %15 = tpu.concatenate %10, %8 in 1 : vector<2x32xf32>, vector<2x32xf32> -> vector<2x64xf32>
    %cst_11 = arith.constant dense<0.000000e+00> : vector<2x192xf32>
    %16 = tpu.matmul %15, %12, %cst_11 {dimension_numbers = #tpu.dot_dimension_numbers<[1], [0], [0], [1], [0, 0, 1, 1], [], []>} : vector<2x64xf32>, vector<64x192xf32>, vector<2x192xf32> -> vector<2x192xf32>
    %17 = vector.broadcast %14 : vector<1x192xf32> to vector<2x192xf32>
    %18 = arith.addf %16, %17 : vector<2x192xf32>
    %19 = vector.extract_strided_slice %18 {offsets = [0, 0], sizes = [2, 32], strides = [1, 1]} : vector<2x192xf32> to vector<2x32xf32>
    %20 = vector.extract_strided_slice %18 {offsets = [0, 32], sizes = [2, 32], strides = [1, 1]} : vector<2x192xf32> to vector<2x32xf32>
    %21 = vector.extract_strided_slice %18 {offsets = [0, 64], sizes = [2, 32], strides = [1, 1]} : vector<2x192xf32> to vector<2x32xf32>
    %22 = vector.extract_strided_slice %18 {offsets = [0, 96], sizes = [2, 32], strides = [1, 1]} : vector<2x192xf32> to vector<2x32xf32>
    %23 = vector.extract_strided_slice %18 {offsets = [0, 128], sizes = [2, 32], strides = [1, 1]} : vector<2x192xf32> to vector<2x32xf32>
    %24 = vector.extract_strided_slice %18 {offsets = [0, 160], sizes = [2, 32], strides = [1, 1]} : vector<2x192xf32> to vector<2x32xf32>
    %25 = arith.addf %19, %22 : vector<2x32xf32>
    %26 = arith.negf %25 : vector<2x32xf32>
    %27 = math.exp %26 : vector<2x32xf32>
    %cst_12 = arith.constant 1.000000e+00 : f32
    %28 = vector.broadcast %cst_12 : f32 to vector<2x32xf32>
    %29 = arith.addf %28, %27 : vector<2x32xf32>
    %30 = arith.divf %28, %29 : vector<2x32xf32>
    %31 = arith.addf %20, %23 : vector<2x32xf32>
    %32 = arith.negf %31 : vector<2x32xf32>
    %33 = math.exp %32 : vector<2x32xf32>
    %cst_13 = arith.constant 1.000000e+00 : f32
    %34 = vector.broadcast %cst_13 : f32 to vector<2x32xf32>
    %35 = arith.addf %34, %33 : vector<2x32xf32>
    %36 = arith.divf %34, %35 : vector<2x32xf32>
    %37 = arith.mulf %30, %24 : vector<2x32xf32>
    %38 = arith.addf %21, %37 : vector<2x32xf32>
    %39 = math.tanh %38 : vector<2x32xf32>
    %cst_14 = arith.constant 1.000000e+00 : f32
    %40 = vector.broadcast %cst_14 : f32 to vector<2x32xf32>
    %41 = arith.subf %40, %36 : vector<2x32xf32>
    %42 = arith.mulf %41, %39 : vector<2x32xf32>
    %43 = arith.mulf %36, %8 : vector<2x32xf32>
    %44 = arith.addf %42, %43 : vector<2x32xf32>
    %c1 = arith.constant 1 : index
    %c0_15 = arith.constant 0 : index
    %c0_16 = arith.constant 0 : index
    %45 = vector.load %arg2[%c1, %c0_15, %c0_16] : memref<2x64x192xf32, #tpu.memory_space<vmem>>, vector<1x64x192xf32>
    %46 = vector.shape_cast %45 : vector<1x64x192xf32> to vector<64x192xf32>
    %c1_17 = arith.constant 1 : index
    %c0_18 = arith.constant 0 : index
    %c0_19 = arith.constant 0 : index
    %47 = vector.load %arg3[%c1_17, %c0_18, %c0_19] : memref<2x1x192xf32, #tpu.memory_space<vmem>>, vector<1x1x192xf32>
    %48 = vector.shape_cast %47 : vector<1x1x192xf32> to vector<1x192xf32>
    %49 = tpu.concatenate %44, %9 in 1 : vector<2x32xf32>, vector<2x32xf32> -> vector<2x64xf32>
    %cst_20 = arith.constant dense<0.000000e+00> : vector<2x192xf32>
    %50 = tpu.matmul %49, %46, %cst_20 {dimension_numbers = #tpu.dot_dimension_numbers<[1], [0], [0], [1], [0, 0, 1, 1], [], []>} : vector<2x64xf32>, vector<64x192xf32>, vector<2x192xf32> -> vector<2x192xf32>
    %51 = vector.broadcast %48 : vector<1x192xf32> to vector<2x192xf32>
    %52 = arith.addf %50, %51 : vector<2x192xf32>
    %53 = vector.extract_strided_slice %52 {offsets = [0, 0], sizes = [2, 32], strides = [1, 1]} : vector<2x192xf32> to vector<2x32xf32>
    %54 = vector.extract_strided_slice %52 {offsets = [0, 32], sizes = [2, 32], strides = [1, 1]} : vector<2x192xf32> to vector<2x32xf32>
    %55 = vector.extract_strided_slice %52 {offsets = [0, 64], sizes = [2, 32], strides = [1, 1]} : vector<2x192xf32> to vector<2x32xf32>
    %56 = vector.extract_strided_slice %52 {offsets = [0, 96], sizes = [2, 32], strides = [1, 1]} : vector<2x192xf32> to vector<2x32xf32>
    %57 = vector.extract_strided_slice %52 {offsets = [0, 128], sizes = [2, 32], strides = [1, 1]} : vector<2x192xf32> to vector<2x32xf32>
    %58 = vector.extract_strided_slice %52 {offsets = [0, 160], sizes = [2, 32], strides = [1, 1]} : vector<2x192xf32> to vector<2x32xf32>
    %59 = arith.addf %53, %56 : vector<2x32xf32>
    %60 = arith.negf %59 : vector<2x32xf32>
    %61 = math.exp %60 : vector<2x32xf32>
    %cst_21 = arith.constant 1.000000e+00 : f32
    %62 = vector.broadcast %cst_21 : f32 to vector<2x32xf32>
    %63 = arith.addf %62, %61 : vector<2x32xf32>
    %64 = arith.divf %62, %63 : vector<2x32xf32>
    %65 = arith.addf %54, %57 : vector<2x32xf32>
    %66 = arith.negf %65 : vector<2x32xf32>
    %67 = math.exp %66 : vector<2x32xf32>
    %cst_22 = arith.constant 1.000000e+00 : f32
    %68 = vector.broadcast %cst_22 : f32 to vector<2x32xf32>
    %69 = arith.addf %68, %67 : vector<2x32xf32>
    %70 = arith.divf %68, %69 : vector<2x32xf32>
    %71 = arith.mulf %64, %58 : vector<2x32xf32>
    %72 = arith.addf %55, %71 : vector<2x32xf32>
    %73 = math.tanh %72 : vector<2x32xf32>
    %cst_23 = arith.constant 1.000000e+00 : f32
    %74 = vector.broadcast %cst_23 : f32 to vector<2x32xf32>
    %75 = arith.subf %74, %70 : vector<2x32xf32>
    %76 = arith.mulf %75, %73 : vector<2x32xf32>
    %77 = arith.mulf %70, %9 : vector<2x32xf32>
    %78 = arith.addf %76, %77 : vector<2x32xf32>
    %79 = vector.extract_strided_slice %7 {offsets = [2, 0], sizes = [2, 32], strides = [1, 1]} : vector<16x32xf32> to vector<2x32xf32>
    %c0_24 = arith.constant 0 : index
    %c0_25 = arith.constant 0 : index
    %c0_26 = arith.constant 0 : index
    %80 = vector.load %arg2[%c0_24, %c0_25, %c0_26] : memref<2x64x192xf32, #tpu.memory_space<vmem>>, vector<1x64x192xf32>
    %81 = vector.shape_cast %80 : vector<1x64x192xf32> to vector<64x192xf32>
    %c0_27 = arith.constant 0 : index
    %c0_28 = arith.constant 0 : index
    %c0_29 = arith.constant 0 : index
    %82 = vector.load %arg3[%c0_27, %c0_28, %c0_29] : memref<2x1x192xf32, #tpu.memory_space<vmem>>, vector<1x1x192xf32>
    %83 = vector.shape_cast %82 : vector<1x1x192xf32> to vector<1x192xf32>
    %84 = tpu.concatenate %79, %44 in 1 : vector<2x32xf32>, vector<2x32xf32> -> vector<2x64xf32>
    %cst_30 = arith.constant dense<0.000000e+00> : vector<2x192xf32>
    %85 = tpu.matmul %84, %81, %cst_30 {dimension_numbers = #tpu.dot_dimension_numbers<[1], [0], [0], [1], [0, 0, 1, 1], [], []>} : vector<2x64xf32>, vector<64x192xf32>, vector<2x192xf32> -> vector<2x192xf32>
    %86 = vector.broadcast %83 : vector<1x192xf32> to vector<2x192xf32>
    %87 = arith.addf %85, %86 : vector<2x192xf32>
    %88 = vector.extract_strided_slice %87 {offsets = [0, 0], sizes = [2, 32], strides = [1, 1]} : vector<2x192xf32> to vector<2x32xf32>
    %89 = vector.extract_strided_slice %87 {offsets = [0, 32], sizes = [2, 32], strides = [1, 1]} : vector<2x192xf32> to vector<2x32xf32>
    %90 = vector.extract_strided_slice %87 {offsets = [0, 64], sizes = [2, 32], strides = [1, 1]} : vector<2x192xf32> to vector<2x32xf32>
    %91 = vector.extract_strided_slice %87 {offsets = [0, 96], sizes = [2, 32], strides = [1, 1]} : vector<2x192xf32> to vector<2x32xf32>
    %92 = vector.extract_strided_slice %87 {offsets = [0, 128], sizes = [2, 32], strides = [1, 1]} : vector<2x192xf32> to vector<2x32xf32>
    %93 = vector.extract_strided_slice %87 {offsets = [0, 160], sizes = [2, 32], strides = [1, 1]} : vector<2x192xf32> to vector<2x32xf32>
    %94 = arith.addf %88, %91 : vector<2x32xf32>
    %95 = arith.negf %94 : vector<2x32xf32>
    %96 = math.exp %95 : vector<2x32xf32>
    %cst_31 = arith.constant 1.000000e+00 : f32
    %97 = vector.broadcast %cst_31 : f32 to vector<2x32xf32>
    %98 = arith.addf %97, %96 : vector<2x32xf32>
    %99 = arith.divf %97, %98 : vector<2x32xf32>
    %100 = arith.addf %89, %92 : vector<2x32xf32>
    %101 = arith.negf %100 : vector<2x32xf32>
    %102 = math.exp %101 : vector<2x32xf32>
    %cst_32 = arith.constant 1.000000e+00 : f32
    %103 = vector.broadcast %cst_32 : f32 to vector<2x32xf32>
    %104 = arith.addf %103, %102 : vector<2x32xf32>
    %105 = arith.divf %103, %104 : vector<2x32xf32>
    %106 = arith.mulf %99, %93 : vector<2x32xf32>
    %107 = arith.addf %90, %106 : vector<2x32xf32>
    %108 = math.tanh %107 : vector<2x32xf32>
    %cst_33 = arith.constant 1.000000e+00 : f32
    %109 = vector.broadcast %cst_33 : f32 to vector<2x32xf32>
    %110 = arith.subf %109, %105 : vector<2x32xf32>
    %111 = arith.mulf %110, %108 : vector<2x32xf32>
    %112 = arith.mulf %105, %44 : vector<2x32xf32>
    %113 = arith.addf %111, %112 : vector<2x32xf32>
    %c1_34 = arith.constant 1 : index
    %c0_35 = arith.constant 0 : index
    %c0_36 = arith.constant 0 : index
    %114 = vector.load %arg2[%c1_34, %c0_35, %c0_36] : memref<2x64x192xf32, #tpu.memory_space<vmem>>, vector<1x64x192xf32>
    %115 = vector.shape_cast %114 : vector<1x64x192xf32> to vector<64x192xf32>
    %c1_37 = arith.constant 1 : index
    %c0_38 = arith.constant 0 : index
    %c0_39 = arith.constant 0 : index
    %116 = vector.load %arg3[%c1_37, %c0_38, %c0_39] : memref<2x1x192xf32, #tpu.memory_space<vmem>>, vector<1x1x192xf32>
    %117 = vector.shape_cast %116 : vector<1x1x192xf32> to vector<1x192xf32>
    %118 = tpu.concatenate %113, %78 in 1 : vector<2x32xf32>, vector<2x32xf32> -> vector<2x64xf32>
    %cst_40 = arith.constant dense<0.000000e+00> : vector<2x192xf32>
    %119 = tpu.matmul %118, %115, %cst_40 {dimension_numbers = #tpu.dot_dimension_numbers<[1], [0], [0], [1], [0, 0, 1, 1], [], []>} : vector<2x64xf32>, vector<64x192xf32>, vector<2x192xf32> -> vector<2x192xf32>
    %120 = vector.broadcast %117 : vector<1x192xf32> to vector<2x192xf32>
    %121 = arith.addf %119, %120 : vector<2x192xf32>
    %122 = vector.extract_strided_slice %121 {offsets = [0, 0], sizes = [2, 32], strides = [1, 1]} : vector<2x192xf32> to vector<2x32xf32>
    %123 = vector.extract_strided_slice %121 {offsets = [0, 32], sizes = [2, 32], strides = [1, 1]} : vector<2x192xf32> to vector<2x32xf32>
    %124 = vector.extract_strided_slice %121 {offsets = [0, 64], sizes = [2, 32], strides = [1, 1]} : vector<2x192xf32> to vector<2x32xf32>
    %125 = vector.extract_strided_slice %121 {offsets = [0, 96], sizes = [2, 32], strides = [1, 1]} : vector<2x192xf32> to vector<2x32xf32>
    %126 = vector.extract_strided_slice %121 {offsets = [0, 128], sizes = [2, 32], strides = [1, 1]} : vector<2x192xf32> to vector<2x32xf32>
    %127 = vector.extract_strided_slice %121 {offsets = [0, 160], sizes = [2, 32], strides = [1, 1]} : vector<2x192xf32> to vector<2x32xf32>
    %128 = arith.addf %122, %125 : vector<2x32xf32>
    %129 = arith.negf %128 : vector<2x32xf32>
    %130 = math.exp %129 : vector<2x32xf32>
    %cst_41 = arith.constant 1.000000e+00 : f32
    %131 = vector.broadcast %cst_41 : f32 to vector<2x32xf32>
    %132 = arith.addf %131, %130 : vector<2x32xf32>
    %133 = arith.divf %131, %132 : vector<2x32xf32>
    %134 = arith.addf %123, %126 : vector<2x32xf32>
    %135 = arith.negf %134 : vector<2x32xf32>
    %136 = math.exp %135 : vector<2x32xf32>
    %cst_42 = arith.constant 1.000000e+00 : f32
    %137 = vector.broadcast %cst_42 : f32 to vector<2x32xf32>
    %138 = arith.addf %137, %136 : vector<2x32xf32>
    %139 = arith.divf %137, %138 : vector<2x32xf32>
    %140 = arith.mulf %133, %127 : vector<2x32xf32>
    %141 = arith.addf %124, %140 : vector<2x32xf32>
    %142 = math.tanh %141 : vector<2x32xf32>
    %cst_43 = arith.constant 1.000000e+00 : f32
    %143 = vector.broadcast %cst_43 : f32 to vector<2x32xf32>
    %144 = arith.subf %143, %139 : vector<2x32xf32>
    %145 = arith.mulf %144, %142 : vector<2x32xf32>
    %146 = arith.mulf %139, %78 : vector<2x32xf32>
    %147 = arith.addf %145, %146 : vector<2x32xf32>
    %148 = vector.extract_strided_slice %7 {offsets = [4, 0], sizes = [2, 32], strides = [1, 1]} : vector<16x32xf32> to vector<2x32xf32>
    %c0_44 = arith.constant 0 : index
    %c0_45 = arith.constant 0 : index
    %c0_46 = arith.constant 0 : index
    %149 = vector.load %arg2[%c0_44, %c0_45, %c0_46] : memref<2x64x192xf32, #tpu.memory_space<vmem>>, vector<1x64x192xf32>
    %150 = vector.shape_cast %149 : vector<1x64x192xf32> to vector<64x192xf32>
    %c0_47 = arith.constant 0 : index
    %c0_48 = arith.constant 0 : index
    %c0_49 = arith.constant 0 : index
    %151 = vector.load %arg3[%c0_47, %c0_48, %c0_49] : memref<2x1x192xf32, #tpu.memory_space<vmem>>, vector<1x1x192xf32>
    %152 = vector.shape_cast %151 : vector<1x1x192xf32> to vector<1x192xf32>
    %153 = tpu.concatenate %148, %113 in 1 : vector<2x32xf32>, vector<2x32xf32> -> vector<2x64xf32>
    %cst_50 = arith.constant dense<0.000000e+00> : vector<2x192xf32>
    %154 = tpu.matmul %153, %150, %cst_50 {dimension_numbers = #tpu.dot_dimension_numbers<[1], [0], [0], [1], [0, 0, 1, 1], [], []>} : vector<2x64xf32>, vector<64x192xf32>, vector<2x192xf32> -> vector<2x192xf32>
    %155 = vector.broadcast %152 : vector<1x192xf32> to vector<2x192xf32>
    %156 = arith.addf %154, %155 : vector<2x192xf32>
    %157 = vector.extract_strided_slice %156 {offsets = [0, 0], sizes = [2, 32], strides = [1, 1]} : vector<2x192xf32> to vector<2x32xf32>
    %158 = vector.extract_strided_slice %156 {offsets = [0, 32], sizes = [2, 32], strides = [1, 1]} : vector<2x192xf32> to vector<2x32xf32>
    %159 = vector.extract_strided_slice %156 {offsets = [0, 64], sizes = [2, 32], strides = [1, 1]} : vector<2x192xf32> to vector<2x32xf32>
    %160 = vector.extract_strided_slice %156 {offsets = [0, 96], sizes = [2, 32], strides = [1, 1]} : vector<2x192xf32> to vector<2x32xf32>
    %161 = vector.extract_strided_slice %156 {offsets = [0, 128], sizes = [2, 32], strides = [1, 1]} : vector<2x192xf32> to vector<2x32xf32>
    %162 = vector.extract_strided_slice %156 {offsets = [0, 160], sizes = [2, 32], strides = [1, 1]} : vector<2x192xf32> to vector<2x32xf32>
    %163 = arith.addf %157, %160 : vector<2x32xf32>
    %164 = arith.negf %163 : vector<2x32xf32>
    %165 = math.exp %164 : vector<2x32xf32>
    %cst_51 = arith.constant 1.000000e+00 : f32
    %166 = vector.broadcast %cst_51 : f32 to vector<2x32xf32>
    %167 = arith.addf %166, %165 : vector<2x32xf32>
    %168 = arith.divf %166, %167 : vector<2x32xf32>
    %169 = arith.addf %158, %161 : vector<2x32xf32>
    %170 = arith.negf %169 : vector<2x32xf32>
    %171 = math.exp %170 : vector<2x32xf32>
    %cst_52 = arith.constant 1.000000e+00 : f32
    %172 = vector.broadcast %cst_52 : f32 to vector<2x32xf32>
    %173 = arith.addf %172, %171 : vector<2x32xf32>
    %174 = arith.divf %172, %173 : vector<2x32xf32>
    %175 = arith.mulf %168, %162 : vector<2x32xf32>
    %176 = arith.addf %159, %175 : vector<2x32xf32>
    %177 = math.tanh %176 : vector<2x32xf32>
    %cst_53 = arith.constant 1.000000e+00 : f32
    %178 = vector.broadcast %cst_53 : f32 to vector<2x32xf32>
    %179 = arith.subf %178, %174 : vector<2x32xf32>
    %180 = arith.mulf %179, %177 : vector<2x32xf32>
    %181 = arith.mulf %174, %113 : vector<2x32xf32>
    %182 = arith.addf %180, %181 : vector<2x32xf32>
    %c1_54 = arith.constant 1 : index
    %c0_55 = arith.constant 0 : index
    %c0_56 = arith.constant 0 : index
    %183 = vector.load %arg2[%c1_54, %c0_55, %c0_56] : memref<2x64x192xf32, #tpu.memory_space<vmem>>, vector<1x64x192xf32>
    %184 = vector.shape_cast %183 : vector<1x64x192xf32> to vector<64x192xf32>
    %c1_57 = arith.constant 1 : index
    %c0_58 = arith.constant 0 : index
    %c0_59 = arith.constant 0 : index
    %185 = vector.load %arg3[%c1_57, %c0_58, %c0_59] : memref<2x1x192xf32, #tpu.memory_space<vmem>>, vector<1x1x192xf32>
    %186 = vector.shape_cast %185 : vector<1x1x192xf32> to vector<1x192xf32>
    %187 = tpu.concatenate %182, %147 in 1 : vector<2x32xf32>, vector<2x32xf32> -> vector<2x64xf32>
    %cst_60 = arith.constant dense<0.000000e+00> : vector<2x192xf32>
    %188 = tpu.matmul %187, %184, %cst_60 {dimension_numbers = #tpu.dot_dimension_numbers<[1], [0], [0], [1], [0, 0, 1, 1], [], []>} : vector<2x64xf32>, vector<64x192xf32>, vector<2x192xf32> -> vector<2x192xf32>
    %189 = vector.broadcast %186 : vector<1x192xf32> to vector<2x192xf32>
    %190 = arith.addf %188, %189 : vector<2x192xf32>
    %191 = vector.extract_strided_slice %190 {offsets = [0, 0], sizes = [2, 32], strides = [1, 1]} : vector<2x192xf32> to vector<2x32xf32>
    %192 = vector.extract_strided_slice %190 {offsets = [0, 32], sizes = [2, 32], strides = [1, 1]} : vector<2x192xf32> to vector<2x32xf32>
    %193 = vector.extract_strided_slice %190 {offsets = [0, 64], sizes = [2, 32], strides = [1, 1]} : vector<2x192xf32> to vector<2x32xf32>
    %194 = vector.extract_strided_slice %190 {offsets = [0, 96], sizes = [2, 32], strides = [1, 1]} : vector<2x192xf32> to vector<2x32xf32>
    %195 = vector.extract_strided_slice %190 {offsets = [0, 128], sizes = [2, 32], strides = [1, 1]} : vector<2x192xf32> to vector<2x32xf32>
    %196 = vector.extract_strided_slice %190 {offsets = [0, 160], sizes = [2, 32], strides = [1, 1]} : vector<2x192xf32> to vector<2x32xf32>
    %197 = arith.addf %191, %194 : vector<2x32xf32>
    %198 = arith.negf %197 : vector<2x32xf32>
    %199 = math.exp %198 : vector<2x32xf32>
    %cst_61 = arith.constant 1.000000e+00 : f32
    %200 = vector.broadcast %cst_61 : f32 to vector<2x32xf32>
    %201 = arith.addf %200, %199 : vector<2x32xf32>
    %202 = arith.divf %200, %201 : vector<2x32xf32>
    %203 = arith.addf %192, %195 : vector<2x32xf32>
    %204 = arith.negf %203 : vector<2x32xf32>
    %205 = math.exp %204 : vector<2x32xf32>
    %cst_62 = arith.constant 1.000000e+00 : f32
    %206 = vector.broadcast %cst_62 : f32 to vector<2x32xf32>
    %207 = arith.addf %206, %205 : vector<2x32xf32>
    %208 = arith.divf %206, %207 : vector<2x32xf32>
    %209 = arith.mulf %202, %196 : vector<2x32xf32>
    %210 = arith.addf %193, %209 : vector<2x32xf32>
    %211 = math.tanh %210 : vector<2x32xf32>
    %cst_63 = arith.constant 1.000000e+00 : f32
    %212 = vector.broadcast %cst_63 : f32 to vector<2x32xf32>
    %213 = arith.subf %212, %208 : vector<2x32xf32>
    %214 = arith.mulf %213, %211 : vector<2x32xf32>
    %215 = arith.mulf %208, %147 : vector<2x32xf32>
    %216 = arith.addf %214, %215 : vector<2x32xf32>
    %217 = vector.extract_strided_slice %7 {offsets = [6, 0], sizes = [2, 32], strides = [1, 1]} : vector<16x32xf32> to vector<2x32xf32>
    %c0_64 = arith.constant 0 : index
    %c0_65 = arith.constant 0 : index
    %c0_66 = arith.constant 0 : index
    %218 = vector.load %arg2[%c0_64, %c0_65, %c0_66] : memref<2x64x192xf32, #tpu.memory_space<vmem>>, vector<1x64x192xf32>
    %219 = vector.shape_cast %218 : vector<1x64x192xf32> to vector<64x192xf32>
    %c0_67 = arith.constant 0 : index
    %c0_68 = arith.constant 0 : index
    %c0_69 = arith.constant 0 : index
    %220 = vector.load %arg3[%c0_67, %c0_68, %c0_69] : memref<2x1x192xf32, #tpu.memory_space<vmem>>, vector<1x1x192xf32>
    %221 = vector.shape_cast %220 : vector<1x1x192xf32> to vector<1x192xf32>
    %222 = tpu.concatenate %217, %182 in 1 : vector<2x32xf32>, vector<2x32xf32> -> vector<2x64xf32>
    %cst_70 = arith.constant dense<0.000000e+00> : vector<2x192xf32>
    %223 = tpu.matmul %222, %219, %cst_70 {dimension_numbers = #tpu.dot_dimension_numbers<[1], [0], [0], [1], [0, 0, 1, 1], [], []>} : vector<2x64xf32>, vector<64x192xf32>, vector<2x192xf32> -> vector<2x192xf32>
    %224 = vector.broadcast %221 : vector<1x192xf32> to vector<2x192xf32>
    %225 = arith.addf %223, %224 : vector<2x192xf32>
    %226 = vector.extract_strided_slice %225 {offsets = [0, 0], sizes = [2, 32], strides = [1, 1]} : vector<2x192xf32> to vector<2x32xf32>
    %227 = vector.extract_strided_slice %225 {offsets = [0, 32], sizes = [2, 32], strides = [1, 1]} : vector<2x192xf32> to vector<2x32xf32>
    %228 = vector.extract_strided_slice %225 {offsets = [0, 64], sizes = [2, 32], strides = [1, 1]} : vector<2x192xf32> to vector<2x32xf32>
    %229 = vector.extract_strided_slice %225 {offsets = [0, 96], sizes = [2, 32], strides = [1, 1]} : vector<2x192xf32> to vector<2x32xf32>
    %230 = vector.extract_strided_slice %225 {offsets = [0, 128], sizes = [2, 32], strides = [1, 1]} : vector<2x192xf32> to vector<2x32xf32>
    %231 = vector.extract_strided_slice %225 {offsets = [0, 160], sizes = [2, 32], strides = [1, 1]} : vector<2x192xf32> to vector<2x32xf32>
    %232 = arith.addf %226, %229 : vector<2x32xf32>
    %233 = arith.negf %232 : vector<2x32xf32>
    %234 = math.exp %233 : vector<2x32xf32>
    %cst_71 = arith.constant 1.000000e+00 : f32
    %235 = vector.broadcast %cst_71 : f32 to vector<2x32xf32>
    %236 = arith.addf %235, %234 : vector<2x32xf32>
    %237 = arith.divf %235, %236 : vector<2x32xf32>
    %238 = arith.addf %227, %230 : vector<2x32xf32>
    %239 = arith.negf %238 : vector<2x32xf32>
    %240 = math.exp %239 : vector<2x32xf32>
    %cst_72 = arith.constant 1.000000e+00 : f32
    %241 = vector.broadcast %cst_72 : f32 to vector<2x32xf32>
    %242 = arith.addf %241, %240 : vector<2x32xf32>
    %243 = arith.divf %241, %242 : vector<2x32xf32>
    %244 = arith.mulf %237, %231 : vector<2x32xf32>
    %245 = arith.addf %228, %244 : vector<2x32xf32>
    %246 = math.tanh %245 : vector<2x32xf32>
    %cst_73 = arith.constant 1.000000e+00 : f32
    %247 = vector.broadcast %cst_73 : f32 to vector<2x32xf32>
    %248 = arith.subf %247, %243 : vector<2x32xf32>
    %249 = arith.mulf %248, %246 : vector<2x32xf32>
    %250 = arith.mulf %243, %182 : vector<2x32xf32>
    %251 = arith.addf %249, %250 : vector<2x32xf32>
    %c1_74 = arith.constant 1 : index
    %c0_75 = arith.constant 0 : index
    %c0_76 = arith.constant 0 : index
    %252 = vector.load %arg2[%c1_74, %c0_75, %c0_76] : memref<2x64x192xf32, #tpu.memory_space<vmem>>, vector<1x64x192xf32>
    %253 = vector.shape_cast %252 : vector<1x64x192xf32> to vector<64x192xf32>
    %c1_77 = arith.constant 1 : index
    %c0_78 = arith.constant 0 : index
    %c0_79 = arith.constant 0 : index
    %254 = vector.load %arg3[%c1_77, %c0_78, %c0_79] : memref<2x1x192xf32, #tpu.memory_space<vmem>>, vector<1x1x192xf32>
    %255 = vector.shape_cast %254 : vector<1x1x192xf32> to vector<1x192xf32>
    %256 = tpu.concatenate %251, %216 in 1 : vector<2x32xf32>, vector<2x32xf32> -> vector<2x64xf32>
    %cst_80 = arith.constant dense<0.000000e+00> : vector<2x192xf32>
    %257 = tpu.matmul %256, %253, %cst_80 {dimension_numbers = #tpu.dot_dimension_numbers<[1], [0], [0], [1], [0, 0, 1, 1], [], []>} : vector<2x64xf32>, vector<64x192xf32>, vector<2x192xf32> -> vector<2x192xf32>
    %258 = vector.broadcast %255 : vector<1x192xf32> to vector<2x192xf32>
    %259 = arith.addf %257, %258 : vector<2x192xf32>
    %260 = vector.extract_strided_slice %259 {offsets = [0, 0], sizes = [2, 32], strides = [1, 1]} : vector<2x192xf32> to vector<2x32xf32>
    %261 = vector.extract_strided_slice %259 {offsets = [0, 32], sizes = [2, 32], strides = [1, 1]} : vector<2x192xf32> to vector<2x32xf32>
    %262 = vector.extract_strided_slice %259 {offsets = [0, 64], sizes = [2, 32], strides = [1, 1]} : vector<2x192xf32> to vector<2x32xf32>
    %263 = vector.extract_strided_slice %259 {offsets = [0, 96], sizes = [2, 32], strides = [1, 1]} : vector<2x192xf32> to vector<2x32xf32>
    %264 = vector.extract_strided_slice %259 {offsets = [0, 128], sizes = [2, 32], strides = [1, 1]} : vector<2x192xf32> to vector<2x32xf32>
    %265 = vector.extract_strided_slice %259 {offsets = [0, 160], sizes = [2, 32], strides = [1, 1]} : vector<2x192xf32> to vector<2x32xf32>
    %266 = arith.addf %260, %263 : vector<2x32xf32>
    %267 = arith.negf %266 : vector<2x32xf32>
    %268 = math.exp %267 : vector<2x32xf32>
    %cst_81 = arith.constant 1.000000e+00 : f32
    %269 = vector.broadcast %cst_81 : f32 to vector<2x32xf32>
    %270 = arith.addf %269, %268 : vector<2x32xf32>
    %271 = arith.divf %269, %270 : vector<2x32xf32>
    %272 = arith.addf %261, %264 : vector<2x32xf32>
    %273 = arith.negf %272 : vector<2x32xf32>
    %274 = math.exp %273 : vector<2x32xf32>
    %cst_82 = arith.constant 1.000000e+00 : f32
    %275 = vector.broadcast %cst_82 : f32 to vector<2x32xf32>
    %276 = arith.addf %275, %274 : vector<2x32xf32>
    %277 = arith.divf %275, %276 : vector<2x32xf32>
    %278 = arith.mulf %271, %265 : vector<2x32xf32>
    %279 = arith.addf %262, %278 : vector<2x32xf32>
    %280 = math.tanh %279 : vector<2x32xf32>
    %cst_83 = arith.constant 1.000000e+00 : f32
    %281 = vector.broadcast %cst_83 : f32 to vector<2x32xf32>
    %282 = arith.subf %281, %277 : vector<2x32xf32>
    %283 = arith.mulf %282, %280 : vector<2x32xf32>
    %284 = arith.mulf %277, %216 : vector<2x32xf32>
    %285 = arith.addf %283, %284 : vector<2x32xf32>
    %286 = vector.extract_strided_slice %7 {offsets = [8, 0], sizes = [2, 32], strides = [1, 1]} : vector<16x32xf32> to vector<2x32xf32>
    %c0_84 = arith.constant 0 : index
    %c0_85 = arith.constant 0 : index
    %c0_86 = arith.constant 0 : index
    %287 = vector.load %arg2[%c0_84, %c0_85, %c0_86] : memref<2x64x192xf32, #tpu.memory_space<vmem>>, vector<1x64x192xf32>
    %288 = vector.shape_cast %287 : vector<1x64x192xf32> to vector<64x192xf32>
    %c0_87 = arith.constant 0 : index
    %c0_88 = arith.constant 0 : index
    %c0_89 = arith.constant 0 : index
    %289 = vector.load %arg3[%c0_87, %c0_88, %c0_89] : memref<2x1x192xf32, #tpu.memory_space<vmem>>, vector<1x1x192xf32>
    %290 = vector.shape_cast %289 : vector<1x1x192xf32> to vector<1x192xf32>
    %291 = tpu.concatenate %286, %251 in 1 : vector<2x32xf32>, vector<2x32xf32> -> vector<2x64xf32>
    %cst_90 = arith.constant dense<0.000000e+00> : vector<2x192xf32>
    %292 = tpu.matmul %291, %288, %cst_90 {dimension_numbers = #tpu.dot_dimension_numbers<[1], [0], [0], [1], [0, 0, 1, 1], [], []>} : vector<2x64xf32>, vector<64x192xf32>, vector<2x192xf32> -> vector<2x192xf32>
    %293 = vector.broadcast %290 : vector<1x192xf32> to vector<2x192xf32>
    %294 = arith.addf %292, %293 : vector<2x192xf32>
    %295 = vector.extract_strided_slice %294 {offsets = [0, 0], sizes = [2, 32], strides = [1, 1]} : vector<2x192xf32> to vector<2x32xf32>
    %296 = vector.extract_strided_slice %294 {offsets = [0, 32], sizes = [2, 32], strides = [1, 1]} : vector<2x192xf32> to vector<2x32xf32>
    %297 = vector.extract_strided_slice %294 {offsets = [0, 64], sizes = [2, 32], strides = [1, 1]} : vector<2x192xf32> to vector<2x32xf32>
    %298 = vector.extract_strided_slice %294 {offsets = [0, 96], sizes = [2, 32], strides = [1, 1]} : vector<2x192xf32> to vector<2x32xf32>
    %299 = vector.extract_strided_slice %294 {offsets = [0, 128], sizes = [2, 32], strides = [1, 1]} : vector<2x192xf32> to vector<2x32xf32>
    %300 = vector.extract_strided_slice %294 {offsets = [0, 160], sizes = [2, 32], strides = [1, 1]} : vector<2x192xf32> to vector<2x32xf32>
    %301 = arith.addf %295, %298 : vector<2x32xf32>
    %302 = arith.negf %301 : vector<2x32xf32>
    %303 = math.exp %302 : vector<2x32xf32>
    %cst_91 = arith.constant 1.000000e+00 : f32
    %304 = vector.broadcast %cst_91 : f32 to vector<2x32xf32>
    %305 = arith.addf %304, %303 : vector<2x32xf32>
    %306 = arith.divf %304, %305 : vector<2x32xf32>
    %307 = arith.addf %296, %299 : vector<2x32xf32>
    %308 = arith.negf %307 : vector<2x32xf32>
    %309 = math.exp %308 : vector<2x32xf32>
    %cst_92 = arith.constant 1.000000e+00 : f32
    %310 = vector.broadcast %cst_92 : f32 to vector<2x32xf32>
    %311 = arith.addf %310, %309 : vector<2x32xf32>
    %312 = arith.divf %310, %311 : vector<2x32xf32>
    %313 = arith.mulf %306, %300 : vector<2x32xf32>
    %314 = arith.addf %297, %313 : vector<2x32xf32>
    %315 = math.tanh %314 : vector<2x32xf32>
    %cst_93 = arith.constant 1.000000e+00 : f32
    %316 = vector.broadcast %cst_93 : f32 to vector<2x32xf32>
    %317 = arith.subf %316, %312 : vector<2x32xf32>
    %318 = arith.mulf %317, %315 : vector<2x32xf32>
    %319 = arith.mulf %312, %251 : vector<2x32xf32>
    %320 = arith.addf %318, %319 : vector<2x32xf32>
    %c1_94 = arith.constant 1 : index
    %c0_95 = arith.constant 0 : index
    %c0_96 = arith.constant 0 : index
    %321 = vector.load %arg2[%c1_94, %c0_95, %c0_96] : memref<2x64x192xf32, #tpu.memory_space<vmem>>, vector<1x64x192xf32>
    %322 = vector.shape_cast %321 : vector<1x64x192xf32> to vector<64x192xf32>
    %c1_97 = arith.constant 1 : index
    %c0_98 = arith.constant 0 : index
    %c0_99 = arith.constant 0 : index
    %323 = vector.load %arg3[%c1_97, %c0_98, %c0_99] : memref<2x1x192xf32, #tpu.memory_space<vmem>>, vector<1x1x192xf32>
    %324 = vector.shape_cast %323 : vector<1x1x192xf32> to vector<1x192xf32>
    %325 = tpu.concatenate %320, %285 in 1 : vector<2x32xf32>, vector<2x32xf32> -> vector<2x64xf32>
    %cst_100 = arith.constant dense<0.000000e+00> : vector<2x192xf32>
    %326 = tpu.matmul %325, %322, %cst_100 {dimension_numbers = #tpu.dot_dimension_numbers<[1], [0], [0], [1], [0, 0, 1, 1], [], []>} : vector<2x64xf32>, vector<64x192xf32>, vector<2x192xf32> -> vector<2x192xf32>
    %327 = vector.broadcast %324 : vector<1x192xf32> to vector<2x192xf32>
    %328 = arith.addf %326, %327 : vector<2x192xf32>
    %329 = vector.extract_strided_slice %328 {offsets = [0, 0], sizes = [2, 32], strides = [1, 1]} : vector<2x192xf32> to vector<2x32xf32>
    %330 = vector.extract_strided_slice %328 {offsets = [0, 32], sizes = [2, 32], strides = [1, 1]} : vector<2x192xf32> to vector<2x32xf32>
    %331 = vector.extract_strided_slice %328 {offsets = [0, 64], sizes = [2, 32], strides = [1, 1]} : vector<2x192xf32> to vector<2x32xf32>
    %332 = vector.extract_strided_slice %328 {offsets = [0, 96], sizes = [2, 32], strides = [1, 1]} : vector<2x192xf32> to vector<2x32xf32>
    %333 = vector.extract_strided_slice %328 {offsets = [0, 128], sizes = [2, 32], strides = [1, 1]} : vector<2x192xf32> to vector<2x32xf32>
    %334 = vector.extract_strided_slice %328 {offsets = [0, 160], sizes = [2, 32], strides = [1, 1]} : vector<2x192xf32> to vector<2x32xf32>
    %335 = arith.addf %329, %332 : vector<2x32xf32>
    %336 = arith.negf %335 : vector<2x32xf32>
    %337 = math.exp %336 : vector<2x32xf32>
    %cst_101 = arith.constant 1.000000e+00 : f32
    %338 = vector.broadcast %cst_101 : f32 to vector<2x32xf32>
    %339 = arith.addf %338, %337 : vector<2x32xf32>
    %340 = arith.divf %338, %339 : vector<2x32xf32>
    %341 = arith.addf %330, %333 : vector<2x32xf32>
    %342 = arith.negf %341 : vector<2x32xf32>
    %343 = math.exp %342 : vector<2x32xf32>
    %cst_102 = arith.constant 1.000000e+00 : f32
    %344 = vector.broadcast %cst_102 : f32 to vector<2x32xf32>
    %345 = arith.addf %344, %343 : vector<2x32xf32>
    %346 = arith.divf %344, %345 : vector<2x32xf32>
    %347 = arith.mulf %340, %334 : vector<2x32xf32>
    %348 = arith.addf %331, %347 : vector<2x32xf32>
    %349 = math.tanh %348 : vector<2x32xf32>
    %cst_103 = arith.constant 1.000000e+00 : f32
    %350 = vector.broadcast %cst_103 : f32 to vector<2x32xf32>
    %351 = arith.subf %350, %346 : vector<2x32xf32>
    %352 = arith.mulf %351, %349 : vector<2x32xf32>
    %353 = arith.mulf %346, %285 : vector<2x32xf32>
    %354 = arith.addf %352, %353 : vector<2x32xf32>
    %355 = vector.extract_strided_slice %7 {offsets = [10, 0], sizes = [2, 32], strides = [1, 1]} : vector<16x32xf32> to vector<2x32xf32>
    %c0_104 = arith.constant 0 : index
    %c0_105 = arith.constant 0 : index
    %c0_106 = arith.constant 0 : index
    %356 = vector.load %arg2[%c0_104, %c0_105, %c0_106] : memref<2x64x192xf32, #tpu.memory_space<vmem>>, vector<1x64x192xf32>
    %357 = vector.shape_cast %356 : vector<1x64x192xf32> to vector<64x192xf32>
    %c0_107 = arith.constant 0 : index
    %c0_108 = arith.constant 0 : index
    %c0_109 = arith.constant 0 : index
    %358 = vector.load %arg3[%c0_107, %c0_108, %c0_109] : memref<2x1x192xf32, #tpu.memory_space<vmem>>, vector<1x1x192xf32>
    %359 = vector.shape_cast %358 : vector<1x1x192xf32> to vector<1x192xf32>
    %360 = tpu.concatenate %355, %320 in 1 : vector<2x32xf32>, vector<2x32xf32> -> vector<2x64xf32>
    %cst_110 = arith.constant dense<0.000000e+00> : vector<2x192xf32>
    %361 = tpu.matmul %360, %357, %cst_110 {dimension_numbers = #tpu.dot_dimension_numbers<[1], [0], [0], [1], [0, 0, 1, 1], [], []>} : vector<2x64xf32>, vector<64x192xf32>, vector<2x192xf32> -> vector<2x192xf32>
    %362 = vector.broadcast %359 : vector<1x192xf32> to vector<2x192xf32>
    %363 = arith.addf %361, %362 : vector<2x192xf32>
    %364 = vector.extract_strided_slice %363 {offsets = [0, 0], sizes = [2, 32], strides = [1, 1]} : vector<2x192xf32> to vector<2x32xf32>
    %365 = vector.extract_strided_slice %363 {offsets = [0, 32], sizes = [2, 32], strides = [1, 1]} : vector<2x192xf32> to vector<2x32xf32>
    %366 = vector.extract_strided_slice %363 {offsets = [0, 64], sizes = [2, 32], strides = [1, 1]} : vector<2x192xf32> to vector<2x32xf32>
    %367 = vector.extract_strided_slice %363 {offsets = [0, 96], sizes = [2, 32], strides = [1, 1]} : vector<2x192xf32> to vector<2x32xf32>
    %368 = vector.extract_strided_slice %363 {offsets = [0, 128], sizes = [2, 32], strides = [1, 1]} : vector<2x192xf32> to vector<2x32xf32>
    %369 = vector.extract_strided_slice %363 {offsets = [0, 160], sizes = [2, 32], strides = [1, 1]} : vector<2x192xf32> to vector<2x32xf32>
    %370 = arith.addf %364, %367 : vector<2x32xf32>
    %371 = arith.negf %370 : vector<2x32xf32>
    %372 = math.exp %371 : vector<2x32xf32>
    %cst_111 = arith.constant 1.000000e+00 : f32
    %373 = vector.broadcast %cst_111 : f32 to vector<2x32xf32>
    %374 = arith.addf %373, %372 : vector<2x32xf32>
    %375 = arith.divf %373, %374 : vector<2x32xf32>
    %376 = arith.addf %365, %368 : vector<2x32xf32>
    %377 = arith.negf %376 : vector<2x32xf32>
    %378 = math.exp %377 : vector<2x32xf32>
    %cst_112 = arith.constant 1.000000e+00 : f32
    %379 = vector.broadcast %cst_112 : f32 to vector<2x32xf32>
    %380 = arith.addf %379, %378 : vector<2x32xf32>
    %381 = arith.divf %379, %380 : vector<2x32xf32>
    %382 = arith.mulf %375, %369 : vector<2x32xf32>
    %383 = arith.addf %366, %382 : vector<2x32xf32>
    %384 = math.tanh %383 : vector<2x32xf32>
    %cst_113 = arith.constant 1.000000e+00 : f32
    %385 = vector.broadcast %cst_113 : f32 to vector<2x32xf32>
    %386 = arith.subf %385, %381 : vector<2x32xf32>
    %387 = arith.mulf %386, %384 : vector<2x32xf32>
    %388 = arith.mulf %381, %320 : vector<2x32xf32>
    %389 = arith.addf %387, %388 : vector<2x32xf32>
    %c1_114 = arith.constant 1 : index
    %c0_115 = arith.constant 0 : index
    %c0_116 = arith.constant 0 : index
    %390 = vector.load %arg2[%c1_114, %c0_115, %c0_116] : memref<2x64x192xf32, #tpu.memory_space<vmem>>, vector<1x64x192xf32>
    %391 = vector.shape_cast %390 : vector<1x64x192xf32> to vector<64x192xf32>
    %c1_117 = arith.constant 1 : index
    %c0_118 = arith.constant 0 : index
    %c0_119 = arith.constant 0 : index
    %392 = vector.load %arg3[%c1_117, %c0_118, %c0_119] : memref<2x1x192xf32, #tpu.memory_space<vmem>>, vector<1x1x192xf32>
    %393 = vector.shape_cast %392 : vector<1x1x192xf32> to vector<1x192xf32>
    %394 = tpu.concatenate %389, %354 in 1 : vector<2x32xf32>, vector<2x32xf32> -> vector<2x64xf32>
    %cst_120 = arith.constant dense<0.000000e+00> : vector<2x192xf32>
    %395 = tpu.matmul %394, %391, %cst_120 {dimension_numbers = #tpu.dot_dimension_numbers<[1], [0], [0], [1], [0, 0, 1, 1], [], []>} : vector<2x64xf32>, vector<64x192xf32>, vector<2x192xf32> -> vector<2x192xf32>
    %396 = vector.broadcast %393 : vector<1x192xf32> to vector<2x192xf32>
    %397 = arith.addf %395, %396 : vector<2x192xf32>
    %398 = vector.extract_strided_slice %397 {offsets = [0, 0], sizes = [2, 32], strides = [1, 1]} : vector<2x192xf32> to vector<2x32xf32>
    %399 = vector.extract_strided_slice %397 {offsets = [0, 32], sizes = [2, 32], strides = [1, 1]} : vector<2x192xf32> to vector<2x32xf32>
    %400 = vector.extract_strided_slice %397 {offsets = [0, 64], sizes = [2, 32], strides = [1, 1]} : vector<2x192xf32> to vector<2x32xf32>
    %401 = vector.extract_strided_slice %397 {offsets = [0, 96], sizes = [2, 32], strides = [1, 1]} : vector<2x192xf32> to vector<2x32xf32>
    %402 = vector.extract_strided_slice %397 {offsets = [0, 128], sizes = [2, 32], strides = [1, 1]} : vector<2x192xf32> to vector<2x32xf32>
    %403 = vector.extract_strided_slice %397 {offsets = [0, 160], sizes = [2, 32], strides = [1, 1]} : vector<2x192xf32> to vector<2x32xf32>
    %404 = arith.addf %398, %401 : vector<2x32xf32>
    %405 = arith.negf %404 : vector<2x32xf32>
    %406 = math.exp %405 : vector<2x32xf32>
    %cst_121 = arith.constant 1.000000e+00 : f32
    %407 = vector.broadcast %cst_121 : f32 to vector<2x32xf32>
    %408 = arith.addf %407, %406 : vector<2x32xf32>
    %409 = arith.divf %407, %408 : vector<2x32xf32>
    %410 = arith.addf %399, %402 : vector<2x32xf32>
    %411 = arith.negf %410 : vector<2x32xf32>
    %412 = math.exp %411 : vector<2x32xf32>
    %cst_122 = arith.constant 1.000000e+00 : f32
    %413 = vector.broadcast %cst_122 : f32 to vector<2x32xf32>
    %414 = arith.addf %413, %412 : vector<2x32xf32>
    %415 = arith.divf %413, %414 : vector<2x32xf32>
    %416 = arith.mulf %409, %403 : vector<2x32xf32>
    %417 = arith.addf %400, %416 : vector<2x32xf32>
    %418 = math.tanh %417 : vector<2x32xf32>
    %cst_123 = arith.constant 1.000000e+00 : f32
    %419 = vector.broadcast %cst_123 : f32 to vector<2x32xf32>
    %420 = arith.subf %419, %415 : vector<2x32xf32>
    %421 = arith.mulf %420, %418 : vector<2x32xf32>
    %422 = arith.mulf %415, %354 : vector<2x32xf32>
    %423 = arith.addf %421, %422 : vector<2x32xf32>
    %424 = vector.extract_strided_slice %7 {offsets = [12, 0], sizes = [2, 32], strides = [1, 1]} : vector<16x32xf32> to vector<2x32xf32>
    %c0_124 = arith.constant 0 : index
    %c0_125 = arith.constant 0 : index
    %c0_126 = arith.constant 0 : index
    %425 = vector.load %arg2[%c0_124, %c0_125, %c0_126] : memref<2x64x192xf32, #tpu.memory_space<vmem>>, vector<1x64x192xf32>
    %426 = vector.shape_cast %425 : vector<1x64x192xf32> to vector<64x192xf32>
    %c0_127 = arith.constant 0 : index
    %c0_128 = arith.constant 0 : index
    %c0_129 = arith.constant 0 : index
    %427 = vector.load %arg3[%c0_127, %c0_128, %c0_129] : memref<2x1x192xf32, #tpu.memory_space<vmem>>, vector<1x1x192xf32>
    %428 = vector.shape_cast %427 : vector<1x1x192xf32> to vector<1x192xf32>
    %429 = tpu.concatenate %424, %389 in 1 : vector<2x32xf32>, vector<2x32xf32> -> vector<2x64xf32>
    %cst_130 = arith.constant dense<0.000000e+00> : vector<2x192xf32>
    %430 = tpu.matmul %429, %426, %cst_130 {dimension_numbers = #tpu.dot_dimension_numbers<[1], [0], [0], [1], [0, 0, 1, 1], [], []>} : vector<2x64xf32>, vector<64x192xf32>, vector<2x192xf32> -> vector<2x192xf32>
    %431 = vector.broadcast %428 : vector<1x192xf32> to vector<2x192xf32>
    %432 = arith.addf %430, %431 : vector<2x192xf32>
    %433 = vector.extract_strided_slice %432 {offsets = [0, 0], sizes = [2, 32], strides = [1, 1]} : vector<2x192xf32> to vector<2x32xf32>
    %434 = vector.extract_strided_slice %432 {offsets = [0, 32], sizes = [2, 32], strides = [1, 1]} : vector<2x192xf32> to vector<2x32xf32>
    %435 = vector.extract_strided_slice %432 {offsets = [0, 64], sizes = [2, 32], strides = [1, 1]} : vector<2x192xf32> to vector<2x32xf32>
    %436 = vector.extract_strided_slice %432 {offsets = [0, 96], sizes = [2, 32], strides = [1, 1]} : vector<2x192xf32> to vector<2x32xf32>
    %437 = vector.extract_strided_slice %432 {offsets = [0, 128], sizes = [2, 32], strides = [1, 1]} : vector<2x192xf32> to vector<2x32xf32>
    %438 = vector.extract_strided_slice %432 {offsets = [0, 160], sizes = [2, 32], strides = [1, 1]} : vector<2x192xf32> to vector<2x32xf32>
    %439 = arith.addf %433, %436 : vector<2x32xf32>
    %440 = arith.negf %439 : vector<2x32xf32>
    %441 = math.exp %440 : vector<2x32xf32>
    %cst_131 = arith.constant 1.000000e+00 : f32
    %442 = vector.broadcast %cst_131 : f32 to vector<2x32xf32>
    %443 = arith.addf %442, %441 : vector<2x32xf32>
    %444 = arith.divf %442, %443 : vector<2x32xf32>
    %445 = arith.addf %434, %437 : vector<2x32xf32>
    %446 = arith.negf %445 : vector<2x32xf32>
    %447 = math.exp %446 : vector<2x32xf32>
    %cst_132 = arith.constant 1.000000e+00 : f32
    %448 = vector.broadcast %cst_132 : f32 to vector<2x32xf32>
    %449 = arith.addf %448, %447 : vector<2x32xf32>
    %450 = arith.divf %448, %449 : vector<2x32xf32>
    %451 = arith.mulf %444, %438 : vector<2x32xf32>
    %452 = arith.addf %435, %451 : vector<2x32xf32>
    %453 = math.tanh %452 : vector<2x32xf32>
    %cst_133 = arith.constant 1.000000e+00 : f32
    %454 = vector.broadcast %cst_133 : f32 to vector<2x32xf32>
    %455 = arith.subf %454, %450 : vector<2x32xf32>
    %456 = arith.mulf %455, %453 : vector<2x32xf32>
    %457 = arith.mulf %450, %389 : vector<2x32xf32>
    %458 = arith.addf %456, %457 : vector<2x32xf32>
    %c1_134 = arith.constant 1 : index
    %c0_135 = arith.constant 0 : index
    %c0_136 = arith.constant 0 : index
    %459 = vector.load %arg2[%c1_134, %c0_135, %c0_136] : memref<2x64x192xf32, #tpu.memory_space<vmem>>, vector<1x64x192xf32>
    %460 = vector.shape_cast %459 : vector<1x64x192xf32> to vector<64x192xf32>
    %c1_137 = arith.constant 1 : index
    %c0_138 = arith.constant 0 : index
    %c0_139 = arith.constant 0 : index
    %461 = vector.load %arg3[%c1_137, %c0_138, %c0_139] : memref<2x1x192xf32, #tpu.memory_space<vmem>>, vector<1x1x192xf32>
    %462 = vector.shape_cast %461 : vector<1x1x192xf32> to vector<1x192xf32>
    %463 = tpu.concatenate %458, %423 in 1 : vector<2x32xf32>, vector<2x32xf32> -> vector<2x64xf32>
    %cst_140 = arith.constant dense<0.000000e+00> : vector<2x192xf32>
    %464 = tpu.matmul %463, %460, %cst_140 {dimension_numbers = #tpu.dot_dimension_numbers<[1], [0], [0], [1], [0, 0, 1, 1], [], []>} : vector<2x64xf32>, vector<64x192xf32>, vector<2x192xf32> -> vector<2x192xf32>
    %465 = vector.broadcast %462 : vector<1x192xf32> to vector<2x192xf32>
    %466 = arith.addf %464, %465 : vector<2x192xf32>
    %467 = vector.extract_strided_slice %466 {offsets = [0, 0], sizes = [2, 32], strides = [1, 1]} : vector<2x192xf32> to vector<2x32xf32>
    %468 = vector.extract_strided_slice %466 {offsets = [0, 32], sizes = [2, 32], strides = [1, 1]} : vector<2x192xf32> to vector<2x32xf32>
    %469 = vector.extract_strided_slice %466 {offsets = [0, 64], sizes = [2, 32], strides = [1, 1]} : vector<2x192xf32> to vector<2x32xf32>
    %470 = vector.extract_strided_slice %466 {offsets = [0, 96], sizes = [2, 32], strides = [1, 1]} : vector<2x192xf32> to vector<2x32xf32>
    %471 = vector.extract_strided_slice %466 {offsets = [0, 128], sizes = [2, 32], strides = [1, 1]} : vector<2x192xf32> to vector<2x32xf32>
    %472 = vector.extract_strided_slice %466 {offsets = [0, 160], sizes = [2, 32], strides = [1, 1]} : vector<2x192xf32> to vector<2x32xf32>
    %473 = arith.addf %467, %470 : vector<2x32xf32>
    %474 = arith.negf %473 : vector<2x32xf32>
    %475 = math.exp %474 : vector<2x32xf32>
    %cst_141 = arith.constant 1.000000e+00 : f32
    %476 = vector.broadcast %cst_141 : f32 to vector<2x32xf32>
    %477 = arith.addf %476, %475 : vector<2x32xf32>
    %478 = arith.divf %476, %477 : vector<2x32xf32>
    %479 = arith.addf %468, %471 : vector<2x32xf32>
    %480 = arith.negf %479 : vector<2x32xf32>
    %481 = math.exp %480 : vector<2x32xf32>
    %cst_142 = arith.constant 1.000000e+00 : f32
    %482 = vector.broadcast %cst_142 : f32 to vector<2x32xf32>
    %483 = arith.addf %482, %481 : vector<2x32xf32>
    %484 = arith.divf %482, %483 : vector<2x32xf32>
    %485 = arith.mulf %478, %472 : vector<2x32xf32>
    %486 = arith.addf %469, %485 : vector<2x32xf32>
    %487 = math.tanh %486 : vector<2x32xf32>
    %cst_143 = arith.constant 1.000000e+00 : f32
    %488 = vector.broadcast %cst_143 : f32 to vector<2x32xf32>
    %489 = arith.subf %488, %484 : vector<2x32xf32>
    %490 = arith.mulf %489, %487 : vector<2x32xf32>
    %491 = arith.mulf %484, %423 : vector<2x32xf32>
    %492 = arith.addf %490, %491 : vector<2x32xf32>
    %493 = vector.extract_strided_slice %7 {offsets = [14, 0], sizes = [2, 32], strides = [1, 1]} : vector<16x32xf32> to vector<2x32xf32>
    %c0_144 = arith.constant 0 : index
    %c0_145 = arith.constant 0 : index
    %c0_146 = arith.constant 0 : index
    %494 = vector.load %arg2[%c0_144, %c0_145, %c0_146] : memref<2x64x192xf32, #tpu.memory_space<vmem>>, vector<1x64x192xf32>
    %495 = vector.shape_cast %494 : vector<1x64x192xf32> to vector<64x192xf32>
    %c0_147 = arith.constant 0 : index
    %c0_148 = arith.constant 0 : index
    %c0_149 = arith.constant 0 : index
    %496 = vector.load %arg3[%c0_147, %c0_148, %c0_149] : memref<2x1x192xf32, #tpu.memory_space<vmem>>, vector<1x1x192xf32>
    %497 = vector.shape_cast %496 : vector<1x1x192xf32> to vector<1x192xf32>
    %498 = tpu.concatenate %493, %458 in 1 : vector<2x32xf32>, vector<2x32xf32> -> vector<2x64xf32>
    %cst_150 = arith.constant dense<0.000000e+00> : vector<2x192xf32>
    %499 = tpu.matmul %498, %495, %cst_150 {dimension_numbers = #tpu.dot_dimension_numbers<[1], [0], [0], [1], [0, 0, 1, 1], [], []>} : vector<2x64xf32>, vector<64x192xf32>, vector<2x192xf32> -> vector<2x192xf32>
    %500 = vector.broadcast %497 : vector<1x192xf32> to vector<2x192xf32>
    %501 = arith.addf %499, %500 : vector<2x192xf32>
    %502 = vector.extract_strided_slice %501 {offsets = [0, 0], sizes = [2, 32], strides = [1, 1]} : vector<2x192xf32> to vector<2x32xf32>
    %503 = vector.extract_strided_slice %501 {offsets = [0, 32], sizes = [2, 32], strides = [1, 1]} : vector<2x192xf32> to vector<2x32xf32>
    %504 = vector.extract_strided_slice %501 {offsets = [0, 64], sizes = [2, 32], strides = [1, 1]} : vector<2x192xf32> to vector<2x32xf32>
    %505 = vector.extract_strided_slice %501 {offsets = [0, 96], sizes = [2, 32], strides = [1, 1]} : vector<2x192xf32> to vector<2x32xf32>
    %506 = vector.extract_strided_slice %501 {offsets = [0, 128], sizes = [2, 32], strides = [1, 1]} : vector<2x192xf32> to vector<2x32xf32>
    %507 = vector.extract_strided_slice %501 {offsets = [0, 160], sizes = [2, 32], strides = [1, 1]} : vector<2x192xf32> to vector<2x32xf32>
    %508 = arith.addf %502, %505 : vector<2x32xf32>
    %509 = arith.negf %508 : vector<2x32xf32>
    %510 = math.exp %509 : vector<2x32xf32>
    %cst_151 = arith.constant 1.000000e+00 : f32
    %511 = vector.broadcast %cst_151 : f32 to vector<2x32xf32>
    %512 = arith.addf %511, %510 : vector<2x32xf32>
    %513 = arith.divf %511, %512 : vector<2x32xf32>
    %514 = arith.addf %503, %506 : vector<2x32xf32>
    %515 = arith.negf %514 : vector<2x32xf32>
    %516 = math.exp %515 : vector<2x32xf32>
    %cst_152 = arith.constant 1.000000e+00 : f32
    %517 = vector.broadcast %cst_152 : f32 to vector<2x32xf32>
    %518 = arith.addf %517, %516 : vector<2x32xf32>
    %519 = arith.divf %517, %518 : vector<2x32xf32>
    %520 = arith.mulf %513, %507 : vector<2x32xf32>
    %521 = arith.addf %504, %520 : vector<2x32xf32>
    %522 = math.tanh %521 : vector<2x32xf32>
    %cst_153 = arith.constant 1.000000e+00 : f32
    %523 = vector.broadcast %cst_153 : f32 to vector<2x32xf32>
    %524 = arith.subf %523, %519 : vector<2x32xf32>
    %525 = arith.mulf %524, %522 : vector<2x32xf32>
    %526 = arith.mulf %519, %458 : vector<2x32xf32>
    %527 = arith.addf %525, %526 : vector<2x32xf32>
    %c1_154 = arith.constant 1 : index
    %c0_155 = arith.constant 0 : index
    %c0_156 = arith.constant 0 : index
    %528 = vector.load %arg2[%c1_154, %c0_155, %c0_156] : memref<2x64x192xf32, #tpu.memory_space<vmem>>, vector<1x64x192xf32>
    %529 = vector.shape_cast %528 : vector<1x64x192xf32> to vector<64x192xf32>
    %c1_157 = arith.constant 1 : index
    %c0_158 = arith.constant 0 : index
    %c0_159 = arith.constant 0 : index
    %530 = vector.load %arg3[%c1_157, %c0_158, %c0_159] : memref<2x1x192xf32, #tpu.memory_space<vmem>>, vector<1x1x192xf32>
    %531 = vector.shape_cast %530 : vector<1x1x192xf32> to vector<1x192xf32>
    %532 = tpu.concatenate %527, %492 in 1 : vector<2x32xf32>, vector<2x32xf32> -> vector<2x64xf32>
    %cst_160 = arith.constant dense<0.000000e+00> : vector<2x192xf32>
    %533 = tpu.matmul %532, %529, %cst_160 {dimension_numbers = #tpu.dot_dimension_numbers<[1], [0], [0], [1], [0, 0, 1, 1], [], []>} : vector<2x64xf32>, vector<64x192xf32>, vector<2x192xf32> -> vector<2x192xf32>
    %534 = vector.broadcast %531 : vector<1x192xf32> to vector<2x192xf32>
    %535 = arith.addf %533, %534 : vector<2x192xf32>
    %536 = vector.extract_strided_slice %535 {offsets = [0, 0], sizes = [2, 32], strides = [1, 1]} : vector<2x192xf32> to vector<2x32xf32>
    %537 = vector.extract_strided_slice %535 {offsets = [0, 32], sizes = [2, 32], strides = [1, 1]} : vector<2x192xf32> to vector<2x32xf32>
    %538 = vector.extract_strided_slice %535 {offsets = [0, 64], sizes = [2, 32], strides = [1, 1]} : vector<2x192xf32> to vector<2x32xf32>
    %539 = vector.extract_strided_slice %535 {offsets = [0, 96], sizes = [2, 32], strides = [1, 1]} : vector<2x192xf32> to vector<2x32xf32>
    %540 = vector.extract_strided_slice %535 {offsets = [0, 128], sizes = [2, 32], strides = [1, 1]} : vector<2x192xf32> to vector<2x32xf32>
    %541 = vector.extract_strided_slice %535 {offsets = [0, 160], sizes = [2, 32], strides = [1, 1]} : vector<2x192xf32> to vector<2x32xf32>
    %542 = arith.addf %536, %539 : vector<2x32xf32>
    %543 = arith.negf %542 : vector<2x32xf32>
    %544 = math.exp %543 : vector<2x32xf32>
    %cst_161 = arith.constant 1.000000e+00 : f32
    %545 = vector.broadcast %cst_161 : f32 to vector<2x32xf32>
    %546 = arith.addf %545, %544 : vector<2x32xf32>
    %547 = arith.divf %545, %546 : vector<2x32xf32>
    %548 = arith.addf %537, %540 : vector<2x32xf32>
    %549 = arith.negf %548 : vector<2x32xf32>
    %550 = math.exp %549 : vector<2x32xf32>
    %cst_162 = arith.constant 1.000000e+00 : f32
    %551 = vector.broadcast %cst_162 : f32 to vector<2x32xf32>
    %552 = arith.addf %551, %550 : vector<2x32xf32>
    %553 = arith.divf %551, %552 : vector<2x32xf32>
    %554 = arith.mulf %547, %541 : vector<2x32xf32>
    %555 = arith.addf %538, %554 : vector<2x32xf32>
    %556 = math.tanh %555 : vector<2x32xf32>
    %cst_163 = arith.constant 1.000000e+00 : f32
    %557 = vector.broadcast %cst_163 : f32 to vector<2x32xf32>
    %558 = arith.subf %557, %553 : vector<2x32xf32>
    %559 = arith.mulf %558, %556 : vector<2x32xf32>
    %560 = arith.mulf %553, %492 : vector<2x32xf32>
    %561 = arith.addf %559, %560 : vector<2x32xf32>
    %c0_164 = arith.constant 0 : index
    %c0_165 = arith.constant 0 : index
    %562 = vector.load %arg4[%c0_164, %c0_165] : memref<20x32xf32, #tpu.memory_space<vmem>>, vector<1x32xf32>
    %563 = vector.shape_cast %562 : vector<1x32xf32> to vector<1x32xf32>
    %564 = vector.broadcast %563 : vector<1x32xf32> to vector<2x32xf32>
    %565 = tpu.iota {dimensions = array<i32: 1>} : vector<2x20xi32>
    %c0_166 = arith.constant 0 : index
    %c0_167 = arith.constant 0 : index
    %c0_168 = arith.constant 0 : index
    %566 = vector.load %arg5[%c0_166, %c0_167, %c0_168] : memref<2x64x192xf32, #tpu.memory_space<vmem>>, vector<1x64x192xf32>
    %567 = vector.shape_cast %566 : vector<1x64x192xf32> to vector<64x192xf32>
    %c0_169 = arith.constant 0 : index
    %c0_170 = arith.constant 0 : index
    %c0_171 = arith.constant 0 : index
    %568 = vector.load %arg6[%c0_169, %c0_170, %c0_171] : memref<2x1x192xf32, #tpu.memory_space<vmem>>, vector<1x1x192xf32>
    %569 = vector.shape_cast %568 : vector<1x1x192xf32> to vector<1x192xf32>
    %570 = tpu.concatenate %564, %527 in 1 : vector<2x32xf32>, vector<2x32xf32> -> vector<2x64xf32>
    %cst_172 = arith.constant dense<0.000000e+00> : vector<2x192xf32>
    %571 = tpu.matmul %570, %567, %cst_172 {dimension_numbers = #tpu.dot_dimension_numbers<[1], [0], [0], [1], [0, 0, 1, 1], [], []>} : vector<2x64xf32>, vector<64x192xf32>, vector<2x192xf32> -> vector<2x192xf32>
    %572 = vector.broadcast %569 : vector<1x192xf32> to vector<2x192xf32>
    %573 = arith.addf %571, %572 : vector<2x192xf32>
    %574 = vector.extract_strided_slice %573 {offsets = [0, 0], sizes = [2, 32], strides = [1, 1]} : vector<2x192xf32> to vector<2x32xf32>
    %575 = vector.extract_strided_slice %573 {offsets = [0, 32], sizes = [2, 32], strides = [1, 1]} : vector<2x192xf32> to vector<2x32xf32>
    %576 = vector.extract_strided_slice %573 {offsets = [0, 64], sizes = [2, 32], strides = [1, 1]} : vector<2x192xf32> to vector<2x32xf32>
    %577 = vector.extract_strided_slice %573 {offsets = [0, 96], sizes = [2, 32], strides = [1, 1]} : vector<2x192xf32> to vector<2x32xf32>
    %578 = vector.extract_strided_slice %573 {offsets = [0, 128], sizes = [2, 32], strides = [1, 1]} : vector<2x192xf32> to vector<2x32xf32>
    %579 = vector.extract_strided_slice %573 {offsets = [0, 160], sizes = [2, 32], strides = [1, 1]} : vector<2x192xf32> to vector<2x32xf32>
    %580 = arith.addf %574, %577 : vector<2x32xf32>
    %581 = arith.negf %580 : vector<2x32xf32>
    %582 = math.exp %581 : vector<2x32xf32>
    %cst_173 = arith.constant 1.000000e+00 : f32
    %583 = vector.broadcast %cst_173 : f32 to vector<2x32xf32>
    %584 = arith.addf %583, %582 : vector<2x32xf32>
    %585 = arith.divf %583, %584 : vector<2x32xf32>
    %586 = arith.addf %575, %578 : vector<2x32xf32>
    %587 = arith.negf %586 : vector<2x32xf32>
    %588 = math.exp %587 : vector<2x32xf32>
    %cst_174 = arith.constant 1.000000e+00 : f32
    %589 = vector.broadcast %cst_174 : f32 to vector<2x32xf32>
    %590 = arith.addf %589, %588 : vector<2x32xf32>
    %591 = arith.divf %589, %590 : vector<2x32xf32>
    %592 = arith.mulf %585, %579 : vector<2x32xf32>
    %593 = arith.addf %576, %592 : vector<2x32xf32>
    %594 = math.tanh %593 : vector<2x32xf32>
    %cst_175 = arith.constant 1.000000e+00 : f32
    %595 = vector.broadcast %cst_175 : f32 to vector<2x32xf32>
    %596 = arith.subf %595, %591 : vector<2x32xf32>
    %597 = arith.mulf %596, %594 : vector<2x32xf32>
    %598 = arith.mulf %591, %527 : vector<2x32xf32>
    %599 = arith.addf %597, %598 : vector<2x32xf32>
    %c1_176 = arith.constant 1 : index
    %c0_177 = arith.constant 0 : index
    %c0_178 = arith.constant 0 : index
    %600 = vector.load %arg5[%c1_176, %c0_177, %c0_178] : memref<2x64x192xf32, #tpu.memory_space<vmem>>, vector<1x64x192xf32>
    %601 = vector.shape_cast %600 : vector<1x64x192xf32> to vector<64x192xf32>
    %c1_179 = arith.constant 1 : index
    %c0_180 = arith.constant 0 : index
    %c0_181 = arith.constant 0 : index
    %602 = vector.load %arg6[%c1_179, %c0_180, %c0_181] : memref<2x1x192xf32, #tpu.memory_space<vmem>>, vector<1x1x192xf32>
    %603 = vector.shape_cast %602 : vector<1x1x192xf32> to vector<1x192xf32>
    %604 = tpu.concatenate %599, %561 in 1 : vector<2x32xf32>, vector<2x32xf32> -> vector<2x64xf32>
    %cst_182 = arith.constant dense<0.000000e+00> : vector<2x192xf32>
    %605 = tpu.matmul %604, %601, %cst_182 {dimension_numbers = #tpu.dot_dimension_numbers<[1], [0], [0], [1], [0, 0, 1, 1], [], []>} : vector<2x64xf32>, vector<64x192xf32>, vector<2x192xf32> -> vector<2x192xf32>
    %606 = vector.broadcast %603 : vector<1x192xf32> to vector<2x192xf32>
    %607 = arith.addf %605, %606 : vector<2x192xf32>
    %608 = vector.extract_strided_slice %607 {offsets = [0, 0], sizes = [2, 32], strides = [1, 1]} : vector<2x192xf32> to vector<2x32xf32>
    %609 = vector.extract_strided_slice %607 {offsets = [0, 32], sizes = [2, 32], strides = [1, 1]} : vector<2x192xf32> to vector<2x32xf32>
    %610 = vector.extract_strided_slice %607 {offsets = [0, 64], sizes = [2, 32], strides = [1, 1]} : vector<2x192xf32> to vector<2x32xf32>
    %611 = vector.extract_strided_slice %607 {offsets = [0, 96], sizes = [2, 32], strides = [1, 1]} : vector<2x192xf32> to vector<2x32xf32>
    %612 = vector.extract_strided_slice %607 {offsets = [0, 128], sizes = [2, 32], strides = [1, 1]} : vector<2x192xf32> to vector<2x32xf32>
    %613 = vector.extract_strided_slice %607 {offsets = [0, 160], sizes = [2, 32], strides = [1, 1]} : vector<2x192xf32> to vector<2x32xf32>
    %614 = arith.addf %608, %611 : vector<2x32xf32>
    %615 = arith.negf %614 : vector<2x32xf32>
    %616 = math.exp %615 : vector<2x32xf32>
    %cst_183 = arith.constant 1.000000e+00 : f32
    %617 = vector.broadcast %cst_183 : f32 to vector<2x32xf32>
    %618 = arith.addf %617, %616 : vector<2x32xf32>
    %619 = arith.divf %617, %618 : vector<2x32xf32>
    %620 = arith.addf %609, %612 : vector<2x32xf32>
    %621 = arith.negf %620 : vector<2x32xf32>
    %622 = math.exp %621 : vector<2x32xf32>
    %cst_184 = arith.constant 1.000000e+00 : f32
    %623 = vector.broadcast %cst_184 : f32 to vector<2x32xf32>
    %624 = arith.addf %623, %622 : vector<2x32xf32>
    %625 = arith.divf %623, %624 : vector<2x32xf32>
    %626 = arith.mulf %619, %613 : vector<2x32xf32>
    %627 = arith.addf %610, %626 : vector<2x32xf32>
    %628 = math.tanh %627 : vector<2x32xf32>
    %cst_185 = arith.constant 1.000000e+00 : f32
    %629 = vector.broadcast %cst_185 : f32 to vector<2x32xf32>
    %630 = arith.subf %629, %625 : vector<2x32xf32>
    %631 = arith.mulf %630, %628 : vector<2x32xf32>
    %632 = arith.mulf %625, %561 : vector<2x32xf32>
    %633 = arith.addf %631, %632 : vector<2x32xf32>
    %c0_186 = arith.constant 0 : index
    %c0_187 = arith.constant 0 : index
    %634 = vector.load %arg7[%c0_186, %c0_187] : memref<32x128xf32, #tpu.memory_space<vmem>>, vector<32x128xf32>
    %cst_188 = arith.constant dense<0.000000e+00> : vector<2x128xf32>
    %635 = tpu.matmul %633, %634, %cst_188 {dimension_numbers = #tpu.dot_dimension_numbers<[1], [0], [0], [1], [0, 0, 1, 1], [], []>} : vector<2x32xf32>, vector<32x128xf32>, vector<2x128xf32> -> vector<2x128xf32>
    %c0_189 = arith.constant 0 : index
    %c0_190 = arith.constant 0 : index
    %636 = vector.load %arg8[%c0_189, %c0_190] : memref<1x128xf32, #tpu.memory_space<vmem>>, vector<1x128xf32>
    %637 = vector.broadcast %636 : vector<1x128xf32> to vector<2x128xf32>
    %638 = arith.addf %635, %637 : vector<2x128xf32>
    %639 = vector.extract_strided_slice %638 {offsets = [0, 0], sizes = [2, 20], strides = [1, 1]} : vector<2x128xf32> to vector<2x20xf32>
    %cst_191 = arith.constant dense<0xFF800000> : vector<2xf32>
    %640 = vector.multi_reduction <maximumf>, %639, %cst_191 [1] : vector<2x20xf32> to vector<2xf32>
    %641 = vector.shape_cast %640 : vector<2xf32> to vector<2x1xf32>
    %642 = vector.broadcast %641 : vector<2x1xf32> to vector<2x20xf32>
    %643 = arith.cmpf oge, %639, %642 : vector<2x20xf32>
    %c20_i32 = arith.constant 20 : i32
    %644 = vector.broadcast %c20_i32 : i32 to vector<2x20xi32>
    %645 = arith.select %643, %565, %644 : vector<2x20xi1>, vector<2x20xi32>
    %cst_192 = arith.constant dense<2147483647> : vector<2xi32>
    %646 = vector.multi_reduction <minsi>, %645, %cst_192 [1] : vector<2x20xi32> to vector<2xi32>
    %647 = vector.shape_cast %646 : vector<2xi32> to vector<2x1xi32>
    %648 = vector.broadcast %647 : vector<2x1xi32> to vector<2x20xi32>
    %649 = arith.cmpi eq, %565, %648 : vector<2x20xi32>
    %650 = arith.extui %649 : vector<2x20xi1> to vector<2x20xi32>
    %651 = arith.sitofp %650 : vector<2x20xi32> to vector<2x20xf32>
    %c0_193 = arith.constant 0 : index
    %c0_194 = arith.constant 0 : index
    %652 = vector.load %arg4[%c0_193, %c0_194] : memref<20x32xf32, #tpu.memory_space<vmem>>, vector<20x32xf32>
    %cst_195 = arith.constant dense<0.000000e+00> : vector<2x32xf32>
    %653 = tpu.matmul %651, %652, %cst_195 {dimension_numbers = #tpu.dot_dimension_numbers<[1], [0], [0], [1], [0, 0, 1, 1], [], []>} : vector<2x20xf32>, vector<20x32xf32>, vector<2x32xf32> -> vector<2x32xf32>
    %c0_196 = arith.constant 0 : index
    %c0_197 = arith.constant 0 : index
    %c0_198 = arith.constant 0 : index
    %654 = vector.load %arg5[%c0_196, %c0_197, %c0_198] : memref<2x64x192xf32, #tpu.memory_space<vmem>>, vector<1x64x192xf32>
    %655 = vector.shape_cast %654 : vector<1x64x192xf32> to vector<64x192xf32>
    %c0_199 = arith.constant 0 : index
    %c0_200 = arith.constant 0 : index
    %c0_201 = arith.constant 0 : index
    %656 = vector.load %arg6[%c0_199, %c0_200, %c0_201] : memref<2x1x192xf32, #tpu.memory_space<vmem>>, vector<1x1x192xf32>
    %657 = vector.shape_cast %656 : vector<1x1x192xf32> to vector<1x192xf32>
    %658 = tpu.concatenate %653, %599 in 1 : vector<2x32xf32>, vector<2x32xf32> -> vector<2x64xf32>
    %cst_202 = arith.constant dense<0.000000e+00> : vector<2x192xf32>
    %659 = tpu.matmul %658, %655, %cst_202 {dimension_numbers = #tpu.dot_dimension_numbers<[1], [0], [0], [1], [0, 0, 1, 1], [], []>} : vector<2x64xf32>, vector<64x192xf32>, vector<2x192xf32> -> vector<2x192xf32>
    %660 = vector.broadcast %657 : vector<1x192xf32> to vector<2x192xf32>
    %661 = arith.addf %659, %660 : vector<2x192xf32>
    %662 = vector.extract_strided_slice %661 {offsets = [0, 0], sizes = [2, 32], strides = [1, 1]} : vector<2x192xf32> to vector<2x32xf32>
    %663 = vector.extract_strided_slice %661 {offsets = [0, 32], sizes = [2, 32], strides = [1, 1]} : vector<2x192xf32> to vector<2x32xf32>
    %664 = vector.extract_strided_slice %661 {offsets = [0, 64], sizes = [2, 32], strides = [1, 1]} : vector<2x192xf32> to vector<2x32xf32>
    %665 = vector.extract_strided_slice %661 {offsets = [0, 96], sizes = [2, 32], strides = [1, 1]} : vector<2x192xf32> to vector<2x32xf32>
    %666 = vector.extract_strided_slice %661 {offsets = [0, 128], sizes = [2, 32], strides = [1, 1]} : vector<2x192xf32> to vector<2x32xf32>
    %667 = vector.extract_strided_slice %661 {offsets = [0, 160], sizes = [2, 32], strides = [1, 1]} : vector<2x192xf32> to vector<2x32xf32>
    %668 = arith.addf %662, %665 : vector<2x32xf32>
    %669 = arith.negf %668 : vector<2x32xf32>
    %670 = math.exp %669 : vector<2x32xf32>
    %cst_203 = arith.constant 1.000000e+00 : f32
    %671 = vector.broadcast %cst_203 : f32 to vector<2x32xf32>
    %672 = arith.addf %671, %670 : vector<2x32xf32>
    %673 = arith.divf %671, %672 : vector<2x32xf32>
    %674 = arith.addf %663, %666 : vector<2x32xf32>
    %675 = arith.negf %674 : vector<2x32xf32>
    %676 = math.exp %675 : vector<2x32xf32>
    %cst_204 = arith.constant 1.000000e+00 : f32
    %677 = vector.broadcast %cst_204 : f32 to vector<2x32xf32>
    %678 = arith.addf %677, %676 : vector<2x32xf32>
    %679 = arith.divf %677, %678 : vector<2x32xf32>
    %680 = arith.mulf %673, %667 : vector<2x32xf32>
    %681 = arith.addf %664, %680 : vector<2x32xf32>
    %682 = math.tanh %681 : vector<2x32xf32>
    %cst_205 = arith.constant 1.000000e+00 : f32
    %683 = vector.broadcast %cst_205 : f32 to vector<2x32xf32>
    %684 = arith.subf %683, %679 : vector<2x32xf32>
    %685 = arith.mulf %684, %682 : vector<2x32xf32>
    %686 = arith.mulf %679, %599 : vector<2x32xf32>
    %687 = arith.addf %685, %686 : vector<2x32xf32>
    %c1_206 = arith.constant 1 : index
    %c0_207 = arith.constant 0 : index
    %c0_208 = arith.constant 0 : index
    %688 = vector.load %arg5[%c1_206, %c0_207, %c0_208] : memref<2x64x192xf32, #tpu.memory_space<vmem>>, vector<1x64x192xf32>
    %689 = vector.shape_cast %688 : vector<1x64x192xf32> to vector<64x192xf32>
    %c1_209 = arith.constant 1 : index
    %c0_210 = arith.constant 0 : index
    %c0_211 = arith.constant 0 : index
    %690 = vector.load %arg6[%c1_209, %c0_210, %c0_211] : memref<2x1x192xf32, #tpu.memory_space<vmem>>, vector<1x1x192xf32>
    %691 = vector.shape_cast %690 : vector<1x1x192xf32> to vector<1x192xf32>
    %692 = tpu.concatenate %687, %633 in 1 : vector<2x32xf32>, vector<2x32xf32> -> vector<2x64xf32>
    %cst_212 = arith.constant dense<0.000000e+00> : vector<2x192xf32>
    %693 = tpu.matmul %692, %689, %cst_212 {dimension_numbers = #tpu.dot_dimension_numbers<[1], [0], [0], [1], [0, 0, 1, 1], [], []>} : vector<2x64xf32>, vector<64x192xf32>, vector<2x192xf32> -> vector<2x192xf32>
    %694 = vector.broadcast %691 : vector<1x192xf32> to vector<2x192xf32>
    %695 = arith.addf %693, %694 : vector<2x192xf32>
    %696 = vector.extract_strided_slice %695 {offsets = [0, 0], sizes = [2, 32], strides = [1, 1]} : vector<2x192xf32> to vector<2x32xf32>
    %697 = vector.extract_strided_slice %695 {offsets = [0, 32], sizes = [2, 32], strides = [1, 1]} : vector<2x192xf32> to vector<2x32xf32>
    %698 = vector.extract_strided_slice %695 {offsets = [0, 64], sizes = [2, 32], strides = [1, 1]} : vector<2x192xf32> to vector<2x32xf32>
    %699 = vector.extract_strided_slice %695 {offsets = [0, 96], sizes = [2, 32], strides = [1, 1]} : vector<2x192xf32> to vector<2x32xf32>
    %700 = vector.extract_strided_slice %695 {offsets = [0, 128], sizes = [2, 32], strides = [1, 1]} : vector<2x192xf32> to vector<2x32xf32>
    %701 = vector.extract_strided_slice %695 {offsets = [0, 160], sizes = [2, 32], strides = [1, 1]} : vector<2x192xf32> to vector<2x32xf32>
    %702 = arith.addf %696, %699 : vector<2x32xf32>
    %703 = arith.negf %702 : vector<2x32xf32>
    %704 = math.exp %703 : vector<2x32xf32>
    %cst_213 = arith.constant 1.000000e+00 : f32
    %705 = vector.broadcast %cst_213 : f32 to vector<2x32xf32>
    %706 = arith.addf %705, %704 : vector<2x32xf32>
    %707 = arith.divf %705, %706 : vector<2x32xf32>
    %708 = arith.addf %697, %700 : vector<2x32xf32>
    %709 = arith.negf %708 : vector<2x32xf32>
    %710 = math.exp %709 : vector<2x32xf32>
    %cst_214 = arith.constant 1.000000e+00 : f32
    %711 = vector.broadcast %cst_214 : f32 to vector<2x32xf32>
    %712 = arith.addf %711, %710 : vector<2x32xf32>
    %713 = arith.divf %711, %712 : vector<2x32xf32>
    %714 = arith.mulf %707, %701 : vector<2x32xf32>
    %715 = arith.addf %698, %714 : vector<2x32xf32>
    %716 = math.tanh %715 : vector<2x32xf32>
    %cst_215 = arith.constant 1.000000e+00 : f32
    %717 = vector.broadcast %cst_215 : f32 to vector<2x32xf32>
    %718 = arith.subf %717, %713 : vector<2x32xf32>
    %719 = arith.mulf %718, %716 : vector<2x32xf32>
    %720 = arith.mulf %713, %633 : vector<2x32xf32>
    %721 = arith.addf %719, %720 : vector<2x32xf32>
    %c0_216 = arith.constant 0 : index
    %c0_217 = arith.constant 0 : index
    %722 = vector.load %arg7[%c0_216, %c0_217] : memref<32x128xf32, #tpu.memory_space<vmem>>, vector<32x128xf32>
    %cst_218 = arith.constant dense<0.000000e+00> : vector<2x128xf32>
    %723 = tpu.matmul %721, %722, %cst_218 {dimension_numbers = #tpu.dot_dimension_numbers<[1], [0], [0], [1], [0, 0, 1, 1], [], []>} : vector<2x32xf32>, vector<32x128xf32>, vector<2x128xf32> -> vector<2x128xf32>
    %c0_219 = arith.constant 0 : index
    %c0_220 = arith.constant 0 : index
    %724 = vector.load %arg8[%c0_219, %c0_220] : memref<1x128xf32, #tpu.memory_space<vmem>>, vector<1x128xf32>
    %725 = vector.broadcast %724 : vector<1x128xf32> to vector<2x128xf32>
    %726 = arith.addf %723, %725 : vector<2x128xf32>
    %727 = vector.extract_strided_slice %726 {offsets = [0, 0], sizes = [2, 20], strides = [1, 1]} : vector<2x128xf32> to vector<2x20xf32>
    %cst_221 = arith.constant dense<0xFF800000> : vector<2xf32>
    %728 = vector.multi_reduction <maximumf>, %727, %cst_221 [1] : vector<2x20xf32> to vector<2xf32>
    %729 = vector.shape_cast %728 : vector<2xf32> to vector<2x1xf32>
    %730 = vector.broadcast %729 : vector<2x1xf32> to vector<2x20xf32>
    %731 = arith.cmpf oge, %727, %730 : vector<2x20xf32>
    %c20_i32_222 = arith.constant 20 : i32
    %732 = vector.broadcast %c20_i32_222 : i32 to vector<2x20xi32>
    %733 = arith.select %731, %565, %732 : vector<2x20xi1>, vector<2x20xi32>
    %cst_223 = arith.constant dense<2147483647> : vector<2xi32>
    %734 = vector.multi_reduction <minsi>, %733, %cst_223 [1] : vector<2x20xi32> to vector<2xi32>
    %735 = vector.shape_cast %734 : vector<2xi32> to vector<2x1xi32>
    %736 = vector.broadcast %735 : vector<2x1xi32> to vector<2x20xi32>
    %737 = arith.cmpi eq, %565, %736 : vector<2x20xi32>
    %738 = arith.extui %737 : vector<2x20xi1> to vector<2x20xi32>
    %739 = arith.sitofp %738 : vector<2x20xi32> to vector<2x20xf32>
    %c0_224 = arith.constant 0 : index
    %c0_225 = arith.constant 0 : index
    %740 = vector.load %arg4[%c0_224, %c0_225] : memref<20x32xf32, #tpu.memory_space<vmem>>, vector<20x32xf32>
    %cst_226 = arith.constant dense<0.000000e+00> : vector<2x32xf32>
    %741 = tpu.matmul %739, %740, %cst_226 {dimension_numbers = #tpu.dot_dimension_numbers<[1], [0], [0], [1], [0, 0, 1, 1], [], []>} : vector<2x20xf32>, vector<20x32xf32>, vector<2x32xf32> -> vector<2x32xf32>
    %c0_227 = arith.constant 0 : index
    %c0_228 = arith.constant 0 : index
    %c0_229 = arith.constant 0 : index
    %742 = vector.load %arg5[%c0_227, %c0_228, %c0_229] : memref<2x64x192xf32, #tpu.memory_space<vmem>>, vector<1x64x192xf32>
    %743 = vector.shape_cast %742 : vector<1x64x192xf32> to vector<64x192xf32>
    %c0_230 = arith.constant 0 : index
    %c0_231 = arith.constant 0 : index
    %c0_232 = arith.constant 0 : index
    %744 = vector.load %arg6[%c0_230, %c0_231, %c0_232] : memref<2x1x192xf32, #tpu.memory_space<vmem>>, vector<1x1x192xf32>
    %745 = vector.shape_cast %744 : vector<1x1x192xf32> to vector<1x192xf32>
    %746 = tpu.concatenate %741, %687 in 1 : vector<2x32xf32>, vector<2x32xf32> -> vector<2x64xf32>
    %cst_233 = arith.constant dense<0.000000e+00> : vector<2x192xf32>
    %747 = tpu.matmul %746, %743, %cst_233 {dimension_numbers = #tpu.dot_dimension_numbers<[1], [0], [0], [1], [0, 0, 1, 1], [], []>} : vector<2x64xf32>, vector<64x192xf32>, vector<2x192xf32> -> vector<2x192xf32>
    %748 = vector.broadcast %745 : vector<1x192xf32> to vector<2x192xf32>
    %749 = arith.addf %747, %748 : vector<2x192xf32>
    %750 = vector.extract_strided_slice %749 {offsets = [0, 0], sizes = [2, 32], strides = [1, 1]} : vector<2x192xf32> to vector<2x32xf32>
    %751 = vector.extract_strided_slice %749 {offsets = [0, 32], sizes = [2, 32], strides = [1, 1]} : vector<2x192xf32> to vector<2x32xf32>
    %752 = vector.extract_strided_slice %749 {offsets = [0, 64], sizes = [2, 32], strides = [1, 1]} : vector<2x192xf32> to vector<2x32xf32>
    %753 = vector.extract_strided_slice %749 {offsets = [0, 96], sizes = [2, 32], strides = [1, 1]} : vector<2x192xf32> to vector<2x32xf32>
    %754 = vector.extract_strided_slice %749 {offsets = [0, 128], sizes = [2, 32], strides = [1, 1]} : vector<2x192xf32> to vector<2x32xf32>
    %755 = vector.extract_strided_slice %749 {offsets = [0, 160], sizes = [2, 32], strides = [1, 1]} : vector<2x192xf32> to vector<2x32xf32>
    %756 = arith.addf %750, %753 : vector<2x32xf32>
    %757 = arith.negf %756 : vector<2x32xf32>
    %758 = math.exp %757 : vector<2x32xf32>
    %cst_234 = arith.constant 1.000000e+00 : f32
    %759 = vector.broadcast %cst_234 : f32 to vector<2x32xf32>
    %760 = arith.addf %759, %758 : vector<2x32xf32>
    %761 = arith.divf %759, %760 : vector<2x32xf32>
    %762 = arith.addf %751, %754 : vector<2x32xf32>
    %763 = arith.negf %762 : vector<2x32xf32>
    %764 = math.exp %763 : vector<2x32xf32>
    %cst_235 = arith.constant 1.000000e+00 : f32
    %765 = vector.broadcast %cst_235 : f32 to vector<2x32xf32>
    %766 = arith.addf %765, %764 : vector<2x32xf32>
    %767 = arith.divf %765, %766 : vector<2x32xf32>
    %768 = arith.mulf %761, %755 : vector<2x32xf32>
    %769 = arith.addf %752, %768 : vector<2x32xf32>
    %770 = math.tanh %769 : vector<2x32xf32>
    %cst_236 = arith.constant 1.000000e+00 : f32
    %771 = vector.broadcast %cst_236 : f32 to vector<2x32xf32>
    %772 = arith.subf %771, %767 : vector<2x32xf32>
    %773 = arith.mulf %772, %770 : vector<2x32xf32>
    %774 = arith.mulf %767, %687 : vector<2x32xf32>
    %775 = arith.addf %773, %774 : vector<2x32xf32>
    %c1_237 = arith.constant 1 : index
    %c0_238 = arith.constant 0 : index
    %c0_239 = arith.constant 0 : index
    %776 = vector.load %arg5[%c1_237, %c0_238, %c0_239] : memref<2x64x192xf32, #tpu.memory_space<vmem>>, vector<1x64x192xf32>
    %777 = vector.shape_cast %776 : vector<1x64x192xf32> to vector<64x192xf32>
    %c1_240 = arith.constant 1 : index
    %c0_241 = arith.constant 0 : index
    %c0_242 = arith.constant 0 : index
    %778 = vector.load %arg6[%c1_240, %c0_241, %c0_242] : memref<2x1x192xf32, #tpu.memory_space<vmem>>, vector<1x1x192xf32>
    %779 = vector.shape_cast %778 : vector<1x1x192xf32> to vector<1x192xf32>
    %780 = tpu.concatenate %775, %721 in 1 : vector<2x32xf32>, vector<2x32xf32> -> vector<2x64xf32>
    %cst_243 = arith.constant dense<0.000000e+00> : vector<2x192xf32>
    %781 = tpu.matmul %780, %777, %cst_243 {dimension_numbers = #tpu.dot_dimension_numbers<[1], [0], [0], [1], [0, 0, 1, 1], [], []>} : vector<2x64xf32>, vector<64x192xf32>, vector<2x192xf32> -> vector<2x192xf32>
    %782 = vector.broadcast %779 : vector<1x192xf32> to vector<2x192xf32>
    %783 = arith.addf %781, %782 : vector<2x192xf32>
    %784 = vector.extract_strided_slice %783 {offsets = [0, 0], sizes = [2, 32], strides = [1, 1]} : vector<2x192xf32> to vector<2x32xf32>
    %785 = vector.extract_strided_slice %783 {offsets = [0, 32], sizes = [2, 32], strides = [1, 1]} : vector<2x192xf32> to vector<2x32xf32>
    %786 = vector.extract_strided_slice %783 {offsets = [0, 64], sizes = [2, 32], strides = [1, 1]} : vector<2x192xf32> to vector<2x32xf32>
    %787 = vector.extract_strided_slice %783 {offsets = [0, 96], sizes = [2, 32], strides = [1, 1]} : vector<2x192xf32> to vector<2x32xf32>
    %788 = vector.extract_strided_slice %783 {offsets = [0, 128], sizes = [2, 32], strides = [1, 1]} : vector<2x192xf32> to vector<2x32xf32>
    %789 = vector.extract_strided_slice %783 {offsets = [0, 160], sizes = [2, 32], strides = [1, 1]} : vector<2x192xf32> to vector<2x32xf32>
    %790 = arith.addf %784, %787 : vector<2x32xf32>
    %791 = arith.negf %790 : vector<2x32xf32>
    %792 = math.exp %791 : vector<2x32xf32>
    %cst_244 = arith.constant 1.000000e+00 : f32
    %793 = vector.broadcast %cst_244 : f32 to vector<2x32xf32>
    %794 = arith.addf %793, %792 : vector<2x32xf32>
    %795 = arith.divf %793, %794 : vector<2x32xf32>
    %796 = arith.addf %785, %788 : vector<2x32xf32>
    %797 = arith.negf %796 : vector<2x32xf32>
    %798 = math.exp %797 : vector<2x32xf32>
    %cst_245 = arith.constant 1.000000e+00 : f32
    %799 = vector.broadcast %cst_245 : f32 to vector<2x32xf32>
    %800 = arith.addf %799, %798 : vector<2x32xf32>
    %801 = arith.divf %799, %800 : vector<2x32xf32>
    %802 = arith.mulf %795, %789 : vector<2x32xf32>
    %803 = arith.addf %786, %802 : vector<2x32xf32>
    %804 = math.tanh %803 : vector<2x32xf32>
    %cst_246 = arith.constant 1.000000e+00 : f32
    %805 = vector.broadcast %cst_246 : f32 to vector<2x32xf32>
    %806 = arith.subf %805, %801 : vector<2x32xf32>
    %807 = arith.mulf %806, %804 : vector<2x32xf32>
    %808 = arith.mulf %801, %721 : vector<2x32xf32>
    %809 = arith.addf %807, %808 : vector<2x32xf32>
    %c0_247 = arith.constant 0 : index
    %c0_248 = arith.constant 0 : index
    %810 = vector.load %arg7[%c0_247, %c0_248] : memref<32x128xf32, #tpu.memory_space<vmem>>, vector<32x128xf32>
    %cst_249 = arith.constant dense<0.000000e+00> : vector<2x128xf32>
    %811 = tpu.matmul %809, %810, %cst_249 {dimension_numbers = #tpu.dot_dimension_numbers<[1], [0], [0], [1], [0, 0, 1, 1], [], []>} : vector<2x32xf32>, vector<32x128xf32>, vector<2x128xf32> -> vector<2x128xf32>
    %c0_250 = arith.constant 0 : index
    %c0_251 = arith.constant 0 : index
    %812 = vector.load %arg8[%c0_250, %c0_251] : memref<1x128xf32, #tpu.memory_space<vmem>>, vector<1x128xf32>
    %813 = vector.broadcast %812 : vector<1x128xf32> to vector<2x128xf32>
    %814 = arith.addf %811, %813 : vector<2x128xf32>
    %815 = vector.extract_strided_slice %814 {offsets = [0, 0], sizes = [2, 20], strides = [1, 1]} : vector<2x128xf32> to vector<2x20xf32>
    %cst_252 = arith.constant dense<0xFF800000> : vector<2xf32>
    %816 = vector.multi_reduction <maximumf>, %815, %cst_252 [1] : vector<2x20xf32> to vector<2xf32>
    %817 = vector.shape_cast %816 : vector<2xf32> to vector<2x1xf32>
    %818 = vector.broadcast %817 : vector<2x1xf32> to vector<2x20xf32>
    %819 = arith.cmpf oge, %815, %818 : vector<2x20xf32>
    %c20_i32_253 = arith.constant 20 : i32
    %820 = vector.broadcast %c20_i32_253 : i32 to vector<2x20xi32>
    %821 = arith.select %819, %565, %820 : vector<2x20xi1>, vector<2x20xi32>
    %cst_254 = arith.constant dense<2147483647> : vector<2xi32>
    %822 = vector.multi_reduction <minsi>, %821, %cst_254 [1] : vector<2x20xi32> to vector<2xi32>
    %823 = vector.shape_cast %822 : vector<2xi32> to vector<2x1xi32>
    %824 = vector.broadcast %823 : vector<2x1xi32> to vector<2x20xi32>
    %825 = arith.cmpi eq, %565, %824 : vector<2x20xi32>
    %826 = arith.extui %825 : vector<2x20xi1> to vector<2x20xi32>
    %827 = arith.sitofp %826 : vector<2x20xi32> to vector<2x20xf32>
    %c0_255 = arith.constant 0 : index
    %c0_256 = arith.constant 0 : index
    %828 = vector.load %arg4[%c0_255, %c0_256] : memref<20x32xf32, #tpu.memory_space<vmem>>, vector<20x32xf32>
    %cst_257 = arith.constant dense<0.000000e+00> : vector<2x32xf32>
    %829 = tpu.matmul %827, %828, %cst_257 {dimension_numbers = #tpu.dot_dimension_numbers<[1], [0], [0], [1], [0, 0, 1, 1], [], []>} : vector<2x20xf32>, vector<20x32xf32>, vector<2x32xf32> -> vector<2x32xf32>
    %c0_258 = arith.constant 0 : index
    %c0_259 = arith.constant 0 : index
    %c0_260 = arith.constant 0 : index
    %830 = vector.load %arg5[%c0_258, %c0_259, %c0_260] : memref<2x64x192xf32, #tpu.memory_space<vmem>>, vector<1x64x192xf32>
    %831 = vector.shape_cast %830 : vector<1x64x192xf32> to vector<64x192xf32>
    %c0_261 = arith.constant 0 : index
    %c0_262 = arith.constant 0 : index
    %c0_263 = arith.constant 0 : index
    %832 = vector.load %arg6[%c0_261, %c0_262, %c0_263] : memref<2x1x192xf32, #tpu.memory_space<vmem>>, vector<1x1x192xf32>
    %833 = vector.shape_cast %832 : vector<1x1x192xf32> to vector<1x192xf32>
    %834 = tpu.concatenate %829, %775 in 1 : vector<2x32xf32>, vector<2x32xf32> -> vector<2x64xf32>
    %cst_264 = arith.constant dense<0.000000e+00> : vector<2x192xf32>
    %835 = tpu.matmul %834, %831, %cst_264 {dimension_numbers = #tpu.dot_dimension_numbers<[1], [0], [0], [1], [0, 0, 1, 1], [], []>} : vector<2x64xf32>, vector<64x192xf32>, vector<2x192xf32> -> vector<2x192xf32>
    %836 = vector.broadcast %833 : vector<1x192xf32> to vector<2x192xf32>
    %837 = arith.addf %835, %836 : vector<2x192xf32>
    %838 = vector.extract_strided_slice %837 {offsets = [0, 0], sizes = [2, 32], strides = [1, 1]} : vector<2x192xf32> to vector<2x32xf32>
    %839 = vector.extract_strided_slice %837 {offsets = [0, 32], sizes = [2, 32], strides = [1, 1]} : vector<2x192xf32> to vector<2x32xf32>
    %840 = vector.extract_strided_slice %837 {offsets = [0, 64], sizes = [2, 32], strides = [1, 1]} : vector<2x192xf32> to vector<2x32xf32>
    %841 = vector.extract_strided_slice %837 {offsets = [0, 96], sizes = [2, 32], strides = [1, 1]} : vector<2x192xf32> to vector<2x32xf32>
    %842 = vector.extract_strided_slice %837 {offsets = [0, 128], sizes = [2, 32], strides = [1, 1]} : vector<2x192xf32> to vector<2x32xf32>
    %843 = vector.extract_strided_slice %837 {offsets = [0, 160], sizes = [2, 32], strides = [1, 1]} : vector<2x192xf32> to vector<2x32xf32>
    %844 = arith.addf %838, %841 : vector<2x32xf32>
    %845 = arith.negf %844 : vector<2x32xf32>
    %846 = math.exp %845 : vector<2x32xf32>
    %cst_265 = arith.constant 1.000000e+00 : f32
    %847 = vector.broadcast %cst_265 : f32 to vector<2x32xf32>
    %848 = arith.addf %847, %846 : vector<2x32xf32>
    %849 = arith.divf %847, %848 : vector<2x32xf32>
    %850 = arith.addf %839, %842 : vector<2x32xf32>
    %851 = arith.negf %850 : vector<2x32xf32>
    %852 = math.exp %851 : vector<2x32xf32>
    %cst_266 = arith.constant 1.000000e+00 : f32
    %853 = vector.broadcast %cst_266 : f32 to vector<2x32xf32>
    %854 = arith.addf %853, %852 : vector<2x32xf32>
    %855 = arith.divf %853, %854 : vector<2x32xf32>
    %856 = arith.mulf %849, %843 : vector<2x32xf32>
    %857 = arith.addf %840, %856 : vector<2x32xf32>
    %858 = math.tanh %857 : vector<2x32xf32>
    %cst_267 = arith.constant 1.000000e+00 : f32
    %859 = vector.broadcast %cst_267 : f32 to vector<2x32xf32>
    %860 = arith.subf %859, %855 : vector<2x32xf32>
    %861 = arith.mulf %860, %858 : vector<2x32xf32>
    %862 = arith.mulf %855, %775 : vector<2x32xf32>
    %863 = arith.addf %861, %862 : vector<2x32xf32>
    %c1_268 = arith.constant 1 : index
    %c0_269 = arith.constant 0 : index
    %c0_270 = arith.constant 0 : index
    %864 = vector.load %arg5[%c1_268, %c0_269, %c0_270] : memref<2x64x192xf32, #tpu.memory_space<vmem>>, vector<1x64x192xf32>
    %865 = vector.shape_cast %864 : vector<1x64x192xf32> to vector<64x192xf32>
    %c1_271 = arith.constant 1 : index
    %c0_272 = arith.constant 0 : index
    %c0_273 = arith.constant 0 : index
    %866 = vector.load %arg6[%c1_271, %c0_272, %c0_273] : memref<2x1x192xf32, #tpu.memory_space<vmem>>, vector<1x1x192xf32>
    %867 = vector.shape_cast %866 : vector<1x1x192xf32> to vector<1x192xf32>
    %868 = tpu.concatenate %863, %809 in 1 : vector<2x32xf32>, vector<2x32xf32> -> vector<2x64xf32>
    %cst_274 = arith.constant dense<0.000000e+00> : vector<2x192xf32>
    %869 = tpu.matmul %868, %865, %cst_274 {dimension_numbers = #tpu.dot_dimension_numbers<[1], [0], [0], [1], [0, 0, 1, 1], [], []>} : vector<2x64xf32>, vector<64x192xf32>, vector<2x192xf32> -> vector<2x192xf32>
    %870 = vector.broadcast %867 : vector<1x192xf32> to vector<2x192xf32>
    %871 = arith.addf %869, %870 : vector<2x192xf32>
    %872 = vector.extract_strided_slice %871 {offsets = [0, 0], sizes = [2, 32], strides = [1, 1]} : vector<2x192xf32> to vector<2x32xf32>
    %873 = vector.extract_strided_slice %871 {offsets = [0, 32], sizes = [2, 32], strides = [1, 1]} : vector<2x192xf32> to vector<2x32xf32>
    %874 = vector.extract_strided_slice %871 {offsets = [0, 64], sizes = [2, 32], strides = [1, 1]} : vector<2x192xf32> to vector<2x32xf32>
    %875 = vector.extract_strided_slice %871 {offsets = [0, 96], sizes = [2, 32], strides = [1, 1]} : vector<2x192xf32> to vector<2x32xf32>
    %876 = vector.extract_strided_slice %871 {offsets = [0, 128], sizes = [2, 32], strides = [1, 1]} : vector<2x192xf32> to vector<2x32xf32>
    %877 = vector.extract_strided_slice %871 {offsets = [0, 160], sizes = [2, 32], strides = [1, 1]} : vector<2x192xf32> to vector<2x32xf32>
    %878 = arith.addf %872, %875 : vector<2x32xf32>
    %879 = arith.negf %878 : vector<2x32xf32>
    %880 = math.exp %879 : vector<2x32xf32>
    %cst_275 = arith.constant 1.000000e+00 : f32
    %881 = vector.broadcast %cst_275 : f32 to vector<2x32xf32>
    %882 = arith.addf %881, %880 : vector<2x32xf32>
    %883 = arith.divf %881, %882 : vector<2x32xf32>
    %884 = arith.addf %873, %876 : vector<2x32xf32>
    %885 = arith.negf %884 : vector<2x32xf32>
    %886 = math.exp %885 : vector<2x32xf32>
    %cst_276 = arith.constant 1.000000e+00 : f32
    %887 = vector.broadcast %cst_276 : f32 to vector<2x32xf32>
    %888 = arith.addf %887, %886 : vector<2x32xf32>
    %889 = arith.divf %887, %888 : vector<2x32xf32>
    %890 = arith.mulf %883, %877 : vector<2x32xf32>
    %891 = arith.addf %874, %890 : vector<2x32xf32>
    %892 = math.tanh %891 : vector<2x32xf32>
    %cst_277 = arith.constant 1.000000e+00 : f32
    %893 = vector.broadcast %cst_277 : f32 to vector<2x32xf32>
    %894 = arith.subf %893, %889 : vector<2x32xf32>
    %895 = arith.mulf %894, %892 : vector<2x32xf32>
    %896 = arith.mulf %889, %809 : vector<2x32xf32>
    %897 = arith.addf %895, %896 : vector<2x32xf32>
    %c0_278 = arith.constant 0 : index
    %c0_279 = arith.constant 0 : index
    %898 = vector.load %arg7[%c0_278, %c0_279] : memref<32x128xf32, #tpu.memory_space<vmem>>, vector<32x128xf32>
    %cst_280 = arith.constant dense<0.000000e+00> : vector<2x128xf32>
    %899 = tpu.matmul %897, %898, %cst_280 {dimension_numbers = #tpu.dot_dimension_numbers<[1], [0], [0], [1], [0, 0, 1, 1], [], []>} : vector<2x32xf32>, vector<32x128xf32>, vector<2x128xf32> -> vector<2x128xf32>
    %c0_281 = arith.constant 0 : index
    %c0_282 = arith.constant 0 : index
    %900 = vector.load %arg8[%c0_281, %c0_282] : memref<1x128xf32, #tpu.memory_space<vmem>>, vector<1x128xf32>
    %901 = vector.broadcast %900 : vector<1x128xf32> to vector<2x128xf32>
    %902 = arith.addf %899, %901 : vector<2x128xf32>
    %903 = vector.extract_strided_slice %902 {offsets = [0, 0], sizes = [2, 20], strides = [1, 1]} : vector<2x128xf32> to vector<2x20xf32>
    %cst_283 = arith.constant dense<0xFF800000> : vector<2xf32>
    %904 = vector.multi_reduction <maximumf>, %903, %cst_283 [1] : vector<2x20xf32> to vector<2xf32>
    %905 = vector.shape_cast %904 : vector<2xf32> to vector<2x1xf32>
    %906 = vector.broadcast %905 : vector<2x1xf32> to vector<2x20xf32>
    %907 = arith.cmpf oge, %903, %906 : vector<2x20xf32>
    %c20_i32_284 = arith.constant 20 : i32
    %908 = vector.broadcast %c20_i32_284 : i32 to vector<2x20xi32>
    %909 = arith.select %907, %565, %908 : vector<2x20xi1>, vector<2x20xi32>
    %cst_285 = arith.constant dense<2147483647> : vector<2xi32>
    %910 = vector.multi_reduction <minsi>, %909, %cst_285 [1] : vector<2x20xi32> to vector<2xi32>
    %911 = vector.shape_cast %910 : vector<2xi32> to vector<2x1xi32>
    %912 = vector.broadcast %911 : vector<2x1xi32> to vector<2x20xi32>
    %913 = arith.cmpi eq, %565, %912 : vector<2x20xi32>
    %914 = arith.extui %913 : vector<2x20xi1> to vector<2x20xi32>
    %915 = arith.sitofp %914 : vector<2x20xi32> to vector<2x20xf32>
    %c0_286 = arith.constant 0 : index
    %c0_287 = arith.constant 0 : index
    %916 = vector.load %arg4[%c0_286, %c0_287] : memref<20x32xf32, #tpu.memory_space<vmem>>, vector<20x32xf32>
    %cst_288 = arith.constant dense<0.000000e+00> : vector<2x32xf32>
    %917 = tpu.matmul %915, %916, %cst_288 {dimension_numbers = #tpu.dot_dimension_numbers<[1], [0], [0], [1], [0, 0, 1, 1], [], []>} : vector<2x20xf32>, vector<20x32xf32>, vector<2x32xf32> -> vector<2x32xf32>
    %c0_289 = arith.constant 0 : index
    %c0_290 = arith.constant 0 : index
    %c0_291 = arith.constant 0 : index
    %918 = vector.load %arg5[%c0_289, %c0_290, %c0_291] : memref<2x64x192xf32, #tpu.memory_space<vmem>>, vector<1x64x192xf32>
    %919 = vector.shape_cast %918 : vector<1x64x192xf32> to vector<64x192xf32>
    %c0_292 = arith.constant 0 : index
    %c0_293 = arith.constant 0 : index
    %c0_294 = arith.constant 0 : index
    %920 = vector.load %arg6[%c0_292, %c0_293, %c0_294] : memref<2x1x192xf32, #tpu.memory_space<vmem>>, vector<1x1x192xf32>
    %921 = vector.shape_cast %920 : vector<1x1x192xf32> to vector<1x192xf32>
    %922 = tpu.concatenate %917, %863 in 1 : vector<2x32xf32>, vector<2x32xf32> -> vector<2x64xf32>
    %cst_295 = arith.constant dense<0.000000e+00> : vector<2x192xf32>
    %923 = tpu.matmul %922, %919, %cst_295 {dimension_numbers = #tpu.dot_dimension_numbers<[1], [0], [0], [1], [0, 0, 1, 1], [], []>} : vector<2x64xf32>, vector<64x192xf32>, vector<2x192xf32> -> vector<2x192xf32>
    %924 = vector.broadcast %921 : vector<1x192xf32> to vector<2x192xf32>
    %925 = arith.addf %923, %924 : vector<2x192xf32>
    %926 = vector.extract_strided_slice %925 {offsets = [0, 0], sizes = [2, 32], strides = [1, 1]} : vector<2x192xf32> to vector<2x32xf32>
    %927 = vector.extract_strided_slice %925 {offsets = [0, 32], sizes = [2, 32], strides = [1, 1]} : vector<2x192xf32> to vector<2x32xf32>
    %928 = vector.extract_strided_slice %925 {offsets = [0, 64], sizes = [2, 32], strides = [1, 1]} : vector<2x192xf32> to vector<2x32xf32>
    %929 = vector.extract_strided_slice %925 {offsets = [0, 96], sizes = [2, 32], strides = [1, 1]} : vector<2x192xf32> to vector<2x32xf32>
    %930 = vector.extract_strided_slice %925 {offsets = [0, 128], sizes = [2, 32], strides = [1, 1]} : vector<2x192xf32> to vector<2x32xf32>
    %931 = vector.extract_strided_slice %925 {offsets = [0, 160], sizes = [2, 32], strides = [1, 1]} : vector<2x192xf32> to vector<2x32xf32>
    %932 = arith.addf %926, %929 : vector<2x32xf32>
    %933 = arith.negf %932 : vector<2x32xf32>
    %934 = math.exp %933 : vector<2x32xf32>
    %cst_296 = arith.constant 1.000000e+00 : f32
    %935 = vector.broadcast %cst_296 : f32 to vector<2x32xf32>
    %936 = arith.addf %935, %934 : vector<2x32xf32>
    %937 = arith.divf %935, %936 : vector<2x32xf32>
    %938 = arith.addf %927, %930 : vector<2x32xf32>
    %939 = arith.negf %938 : vector<2x32xf32>
    %940 = math.exp %939 : vector<2x32xf32>
    %cst_297 = arith.constant 1.000000e+00 : f32
    %941 = vector.broadcast %cst_297 : f32 to vector<2x32xf32>
    %942 = arith.addf %941, %940 : vector<2x32xf32>
    %943 = arith.divf %941, %942 : vector<2x32xf32>
    %944 = arith.mulf %937, %931 : vector<2x32xf32>
    %945 = arith.addf %928, %944 : vector<2x32xf32>
    %946 = math.tanh %945 : vector<2x32xf32>
    %cst_298 = arith.constant 1.000000e+00 : f32
    %947 = vector.broadcast %cst_298 : f32 to vector<2x32xf32>
    %948 = arith.subf %947, %943 : vector<2x32xf32>
    %949 = arith.mulf %948, %946 : vector<2x32xf32>
    %950 = arith.mulf %943, %863 : vector<2x32xf32>
    %951 = arith.addf %949, %950 : vector<2x32xf32>
    %c1_299 = arith.constant 1 : index
    %c0_300 = arith.constant 0 : index
    %c0_301 = arith.constant 0 : index
    %952 = vector.load %arg5[%c1_299, %c0_300, %c0_301] : memref<2x64x192xf32, #tpu.memory_space<vmem>>, vector<1x64x192xf32>
    %953 = vector.shape_cast %952 : vector<1x64x192xf32> to vector<64x192xf32>
    %c1_302 = arith.constant 1 : index
    %c0_303 = arith.constant 0 : index
    %c0_304 = arith.constant 0 : index
    %954 = vector.load %arg6[%c1_302, %c0_303, %c0_304] : memref<2x1x192xf32, #tpu.memory_space<vmem>>, vector<1x1x192xf32>
    %955 = vector.shape_cast %954 : vector<1x1x192xf32> to vector<1x192xf32>
    %956 = tpu.concatenate %951, %897 in 1 : vector<2x32xf32>, vector<2x32xf32> -> vector<2x64xf32>
    %cst_305 = arith.constant dense<0.000000e+00> : vector<2x192xf32>
    %957 = tpu.matmul %956, %953, %cst_305 {dimension_numbers = #tpu.dot_dimension_numbers<[1], [0], [0], [1], [0, 0, 1, 1], [], []>} : vector<2x64xf32>, vector<64x192xf32>, vector<2x192xf32> -> vector<2x192xf32>
    %958 = vector.broadcast %955 : vector<1x192xf32> to vector<2x192xf32>
    %959 = arith.addf %957, %958 : vector<2x192xf32>
    %960 = vector.extract_strided_slice %959 {offsets = [0, 0], sizes = [2, 32], strides = [1, 1]} : vector<2x192xf32> to vector<2x32xf32>
    %961 = vector.extract_strided_slice %959 {offsets = [0, 32], sizes = [2, 32], strides = [1, 1]} : vector<2x192xf32> to vector<2x32xf32>
    %962 = vector.extract_strided_slice %959 {offsets = [0, 64], sizes = [2, 32], strides = [1, 1]} : vector<2x192xf32> to vector<2x32xf32>
    %963 = vector.extract_strided_slice %959 {offsets = [0, 96], sizes = [2, 32], strides = [1, 1]} : vector<2x192xf32> to vector<2x32xf32>
    %964 = vector.extract_strided_slice %959 {offsets = [0, 128], sizes = [2, 32], strides = [1, 1]} : vector<2x192xf32> to vector<2x32xf32>
    %965 = vector.extract_strided_slice %959 {offsets = [0, 160], sizes = [2, 32], strides = [1, 1]} : vector<2x192xf32> to vector<2x32xf32>
    %966 = arith.addf %960, %963 : vector<2x32xf32>
    %967 = arith.negf %966 : vector<2x32xf32>
    %968 = math.exp %967 : vector<2x32xf32>
    %cst_306 = arith.constant 1.000000e+00 : f32
    %969 = vector.broadcast %cst_306 : f32 to vector<2x32xf32>
    %970 = arith.addf %969, %968 : vector<2x32xf32>
    %971 = arith.divf %969, %970 : vector<2x32xf32>
    %972 = arith.addf %961, %964 : vector<2x32xf32>
    %973 = arith.negf %972 : vector<2x32xf32>
    %974 = math.exp %973 : vector<2x32xf32>
    %cst_307 = arith.constant 1.000000e+00 : f32
    %975 = vector.broadcast %cst_307 : f32 to vector<2x32xf32>
    %976 = arith.addf %975, %974 : vector<2x32xf32>
    %977 = arith.divf %975, %976 : vector<2x32xf32>
    %978 = arith.mulf %971, %965 : vector<2x32xf32>
    %979 = arith.addf %962, %978 : vector<2x32xf32>
    %980 = math.tanh %979 : vector<2x32xf32>
    %cst_308 = arith.constant 1.000000e+00 : f32
    %981 = vector.broadcast %cst_308 : f32 to vector<2x32xf32>
    %982 = arith.subf %981, %977 : vector<2x32xf32>
    %983 = arith.mulf %982, %980 : vector<2x32xf32>
    %984 = arith.mulf %977, %897 : vector<2x32xf32>
    %985 = arith.addf %983, %984 : vector<2x32xf32>
    %c0_309 = arith.constant 0 : index
    %c0_310 = arith.constant 0 : index
    %986 = vector.load %arg7[%c0_309, %c0_310] : memref<32x128xf32, #tpu.memory_space<vmem>>, vector<32x128xf32>
    %cst_311 = arith.constant dense<0.000000e+00> : vector<2x128xf32>
    %987 = tpu.matmul %985, %986, %cst_311 {dimension_numbers = #tpu.dot_dimension_numbers<[1], [0], [0], [1], [0, 0, 1, 1], [], []>} : vector<2x32xf32>, vector<32x128xf32>, vector<2x128xf32> -> vector<2x128xf32>
    %c0_312 = arith.constant 0 : index
    %c0_313 = arith.constant 0 : index
    %988 = vector.load %arg8[%c0_312, %c0_313] : memref<1x128xf32, #tpu.memory_space<vmem>>, vector<1x128xf32>
    %989 = vector.broadcast %988 : vector<1x128xf32> to vector<2x128xf32>
    %990 = arith.addf %987, %989 : vector<2x128xf32>
    %991 = vector.extract_strided_slice %990 {offsets = [0, 0], sizes = [2, 20], strides = [1, 1]} : vector<2x128xf32> to vector<2x20xf32>
    %cst_314 = arith.constant dense<0xFF800000> : vector<2xf32>
    %992 = vector.multi_reduction <maximumf>, %991, %cst_314 [1] : vector<2x20xf32> to vector<2xf32>
    %993 = vector.shape_cast %992 : vector<2xf32> to vector<2x1xf32>
    %994 = vector.broadcast %993 : vector<2x1xf32> to vector<2x20xf32>
    %995 = arith.cmpf oge, %991, %994 : vector<2x20xf32>
    %c20_i32_315 = arith.constant 20 : i32
    %996 = vector.broadcast %c20_i32_315 : i32 to vector<2x20xi32>
    %997 = arith.select %995, %565, %996 : vector<2x20xi1>, vector<2x20xi32>
    %cst_316 = arith.constant dense<2147483647> : vector<2xi32>
    %998 = vector.multi_reduction <minsi>, %997, %cst_316 [1] : vector<2x20xi32> to vector<2xi32>
    %999 = vector.shape_cast %998 : vector<2xi32> to vector<2x1xi32>
    %1000 = vector.broadcast %999 : vector<2x1xi32> to vector<2x20xi32>
    %1001 = arith.cmpi eq, %565, %1000 : vector<2x20xi32>
    %1002 = arith.extui %1001 : vector<2x20xi1> to vector<2x20xi32>
    %1003 = arith.sitofp %1002 : vector<2x20xi32> to vector<2x20xf32>
    %c0_317 = arith.constant 0 : index
    %c0_318 = arith.constant 0 : index
    %1004 = vector.load %arg4[%c0_317, %c0_318] : memref<20x32xf32, #tpu.memory_space<vmem>>, vector<20x32xf32>
    %cst_319 = arith.constant dense<0.000000e+00> : vector<2x32xf32>
    %1005 = tpu.matmul %1003, %1004, %cst_319 {dimension_numbers = #tpu.dot_dimension_numbers<[1], [0], [0], [1], [0, 0, 1, 1], [], []>} : vector<2x20xf32>, vector<20x32xf32>, vector<2x32xf32> -> vector<2x32xf32>
    %c0_320 = arith.constant 0 : index
    %c0_321 = arith.constant 0 : index
    %c0_322 = arith.constant 0 : index
    %1006 = vector.load %arg5[%c0_320, %c0_321, %c0_322] : memref<2x64x192xf32, #tpu.memory_space<vmem>>, vector<1x64x192xf32>
    %1007 = vector.shape_cast %1006 : vector<1x64x192xf32> to vector<64x192xf32>
    %c0_323 = arith.constant 0 : index
    %c0_324 = arith.constant 0 : index
    %c0_325 = arith.constant 0 : index
    %1008 = vector.load %arg6[%c0_323, %c0_324, %c0_325] : memref<2x1x192xf32, #tpu.memory_space<vmem>>, vector<1x1x192xf32>
    %1009 = vector.shape_cast %1008 : vector<1x1x192xf32> to vector<1x192xf32>
    %1010 = tpu.concatenate %1005, %951 in 1 : vector<2x32xf32>, vector<2x32xf32> -> vector<2x64xf32>
    %cst_326 = arith.constant dense<0.000000e+00> : vector<2x192xf32>
    %1011 = tpu.matmul %1010, %1007, %cst_326 {dimension_numbers = #tpu.dot_dimension_numbers<[1], [0], [0], [1], [0, 0, 1, 1], [], []>} : vector<2x64xf32>, vector<64x192xf32>, vector<2x192xf32> -> vector<2x192xf32>
    %1012 = vector.broadcast %1009 : vector<1x192xf32> to vector<2x192xf32>
    %1013 = arith.addf %1011, %1012 : vector<2x192xf32>
    %1014 = vector.extract_strided_slice %1013 {offsets = [0, 0], sizes = [2, 32], strides = [1, 1]} : vector<2x192xf32> to vector<2x32xf32>
    %1015 = vector.extract_strided_slice %1013 {offsets = [0, 32], sizes = [2, 32], strides = [1, 1]} : vector<2x192xf32> to vector<2x32xf32>
    %1016 = vector.extract_strided_slice %1013 {offsets = [0, 64], sizes = [2, 32], strides = [1, 1]} : vector<2x192xf32> to vector<2x32xf32>
    %1017 = vector.extract_strided_slice %1013 {offsets = [0, 96], sizes = [2, 32], strides = [1, 1]} : vector<2x192xf32> to vector<2x32xf32>
    %1018 = vector.extract_strided_slice %1013 {offsets = [0, 128], sizes = [2, 32], strides = [1, 1]} : vector<2x192xf32> to vector<2x32xf32>
    %1019 = vector.extract_strided_slice %1013 {offsets = [0, 160], sizes = [2, 32], strides = [1, 1]} : vector<2x192xf32> to vector<2x32xf32>
    %1020 = arith.addf %1014, %1017 : vector<2x32xf32>
    %1021 = arith.negf %1020 : vector<2x32xf32>
    %1022 = math.exp %1021 : vector<2x32xf32>
    %cst_327 = arith.constant 1.000000e+00 : f32
    %1023 = vector.broadcast %cst_327 : f32 to vector<2x32xf32>
    %1024 = arith.addf %1023, %1022 : vector<2x32xf32>
    %1025 = arith.divf %1023, %1024 : vector<2x32xf32>
    %1026 = arith.addf %1015, %1018 : vector<2x32xf32>
    %1027 = arith.negf %1026 : vector<2x32xf32>
    %1028 = math.exp %1027 : vector<2x32xf32>
    %cst_328 = arith.constant 1.000000e+00 : f32
    %1029 = vector.broadcast %cst_328 : f32 to vector<2x32xf32>
    %1030 = arith.addf %1029, %1028 : vector<2x32xf32>
    %1031 = arith.divf %1029, %1030 : vector<2x32xf32>
    %1032 = arith.mulf %1025, %1019 : vector<2x32xf32>
    %1033 = arith.addf %1016, %1032 : vector<2x32xf32>
    %1034 = math.tanh %1033 : vector<2x32xf32>
    %cst_329 = arith.constant 1.000000e+00 : f32
    %1035 = vector.broadcast %cst_329 : f32 to vector<2x32xf32>
    %1036 = arith.subf %1035, %1031 : vector<2x32xf32>
    %1037 = arith.mulf %1036, %1034 : vector<2x32xf32>
    %1038 = arith.mulf %1031, %951 : vector<2x32xf32>
    %1039 = arith.addf %1037, %1038 : vector<2x32xf32>
    %c1_330 = arith.constant 1 : index
    %c0_331 = arith.constant 0 : index
    %c0_332 = arith.constant 0 : index
    %1040 = vector.load %arg5[%c1_330, %c0_331, %c0_332] : memref<2x64x192xf32, #tpu.memory_space<vmem>>, vector<1x64x192xf32>
    %1041 = vector.shape_cast %1040 : vector<1x64x192xf32> to vector<64x192xf32>
    %c1_333 = arith.constant 1 : index
    %c0_334 = arith.constant 0 : index
    %c0_335 = arith.constant 0 : index
    %1042 = vector.load %arg6[%c1_333, %c0_334, %c0_335] : memref<2x1x192xf32, #tpu.memory_space<vmem>>, vector<1x1x192xf32>
    %1043 = vector.shape_cast %1042 : vector<1x1x192xf32> to vector<1x192xf32>
    %1044 = tpu.concatenate %1039, %985 in 1 : vector<2x32xf32>, vector<2x32xf32> -> vector<2x64xf32>
    %cst_336 = arith.constant dense<0.000000e+00> : vector<2x192xf32>
    %1045 = tpu.matmul %1044, %1041, %cst_336 {dimension_numbers = #tpu.dot_dimension_numbers<[1], [0], [0], [1], [0, 0, 1, 1], [], []>} : vector<2x64xf32>, vector<64x192xf32>, vector<2x192xf32> -> vector<2x192xf32>
    %1046 = vector.broadcast %1043 : vector<1x192xf32> to vector<2x192xf32>
    %1047 = arith.addf %1045, %1046 : vector<2x192xf32>
    %1048 = vector.extract_strided_slice %1047 {offsets = [0, 0], sizes = [2, 32], strides = [1, 1]} : vector<2x192xf32> to vector<2x32xf32>
    %1049 = vector.extract_strided_slice %1047 {offsets = [0, 32], sizes = [2, 32], strides = [1, 1]} : vector<2x192xf32> to vector<2x32xf32>
    %1050 = vector.extract_strided_slice %1047 {offsets = [0, 64], sizes = [2, 32], strides = [1, 1]} : vector<2x192xf32> to vector<2x32xf32>
    %1051 = vector.extract_strided_slice %1047 {offsets = [0, 96], sizes = [2, 32], strides = [1, 1]} : vector<2x192xf32> to vector<2x32xf32>
    %1052 = vector.extract_strided_slice %1047 {offsets = [0, 128], sizes = [2, 32], strides = [1, 1]} : vector<2x192xf32> to vector<2x32xf32>
    %1053 = vector.extract_strided_slice %1047 {offsets = [0, 160], sizes = [2, 32], strides = [1, 1]} : vector<2x192xf32> to vector<2x32xf32>
    %1054 = arith.addf %1048, %1051 : vector<2x32xf32>
    %1055 = arith.negf %1054 : vector<2x32xf32>
    %1056 = math.exp %1055 : vector<2x32xf32>
    %cst_337 = arith.constant 1.000000e+00 : f32
    %1057 = vector.broadcast %cst_337 : f32 to vector<2x32xf32>
    %1058 = arith.addf %1057, %1056 : vector<2x32xf32>
    %1059 = arith.divf %1057, %1058 : vector<2x32xf32>
    %1060 = arith.addf %1049, %1052 : vector<2x32xf32>
    %1061 = arith.negf %1060 : vector<2x32xf32>
    %1062 = math.exp %1061 : vector<2x32xf32>
    %cst_338 = arith.constant 1.000000e+00 : f32
    %1063 = vector.broadcast %cst_338 : f32 to vector<2x32xf32>
    %1064 = arith.addf %1063, %1062 : vector<2x32xf32>
    %1065 = arith.divf %1063, %1064 : vector<2x32xf32>
    %1066 = arith.mulf %1059, %1053 : vector<2x32xf32>
    %1067 = arith.addf %1050, %1066 : vector<2x32xf32>
    %1068 = math.tanh %1067 : vector<2x32xf32>
    %cst_339 = arith.constant 1.000000e+00 : f32
    %1069 = vector.broadcast %cst_339 : f32 to vector<2x32xf32>
    %1070 = arith.subf %1069, %1065 : vector<2x32xf32>
    %1071 = arith.mulf %1070, %1068 : vector<2x32xf32>
    %1072 = arith.mulf %1065, %985 : vector<2x32xf32>
    %1073 = arith.addf %1071, %1072 : vector<2x32xf32>
    %c0_340 = arith.constant 0 : index
    %c0_341 = arith.constant 0 : index
    %1074 = vector.load %arg7[%c0_340, %c0_341] : memref<32x128xf32, #tpu.memory_space<vmem>>, vector<32x128xf32>
    %cst_342 = arith.constant dense<0.000000e+00> : vector<2x128xf32>
    %1075 = tpu.matmul %1073, %1074, %cst_342 {dimension_numbers = #tpu.dot_dimension_numbers<[1], [0], [0], [1], [0, 0, 1, 1], [], []>} : vector<2x32xf32>, vector<32x128xf32>, vector<2x128xf32> -> vector<2x128xf32>
    %c0_343 = arith.constant 0 : index
    %c0_344 = arith.constant 0 : index
    %1076 = vector.load %arg8[%c0_343, %c0_344] : memref<1x128xf32, #tpu.memory_space<vmem>>, vector<1x128xf32>
    %1077 = vector.broadcast %1076 : vector<1x128xf32> to vector<2x128xf32>
    %1078 = arith.addf %1075, %1077 : vector<2x128xf32>
    %1079 = tpu.concatenate %638, %726, %814, %902, %990, %1078 in 0 : vector<2x128xf32>, vector<2x128xf32>, vector<2x128xf32>, vector<2x128xf32>, vector<2x128xf32>, vector<2x128xf32> -> vector<12x128xf32>
    %c0_345 = arith.constant 0 : index
    %c0_346 = arith.constant 0 : index
    %1080 = vector.load %arg9[%c0_345, %c0_346] : memref<12x128xf32, #tpu.memory_space<vmem>>, vector<12x128xf32>
    tpu.vector_store %arg9[%c0_345, %c0_346], %1079 {strides = array<i32>} : memref<12x128xf32, #tpu.memory_space<vmem>>, vector<12x128xf32>,
    %c0_347 = arith.constant 0 : index
    %c0_348 = arith.constant 0 : index
    %c0_349 = arith.constant 0 : index
    %1081 = vector.load %arg10[%c0_347, %c0_348, %c0_349] : memref<2x2x32xf32, #tpu.memory_space<vmem>>, vector<1x2x32xf32>
    %1082 = vector.shape_cast %1081 : vector<1x2x32xf32> to vector<2x32xf32>
    %1083 = vector.shape_cast %1039 : vector<2x32xf32> to vector<1x2x32xf32>
    tpu.vector_store %arg10[%c0_347, %c0_348, %c0_349], %1083 {strides = array<i32>} : memref<2x2x32xf32, #tpu.memory_space<vmem>>, vector<1x2x32xf32>,
    %c1_350 = arith.constant 1 : index
    %c0_351 = arith.constant 0 : index
    %c0_352 = arith.constant 0 : index
    %1084 = vector.load %arg10[%c1_350, %c0_351, %c0_352] : memref<2x2x32xf32, #tpu.memory_space<vmem>>, vector<1x2x32xf32>
    %1085 = vector.shape_cast %1084 : vector<1x2x32xf32> to vector<2x32xf32>
    %1086 = vector.shape_cast %1073 : vector<2x32xf32> to vector<1x2x32xf32>
    tpu.vector_store %arg10[%c1_350, %c0_351, %c0_352], %1086 {strides = array<i32>} : memref<2x2x32xf32, #tpu.memory_space<vmem>>, vector<1x2x32xf32>,
    return
  }
}

</mosaic_0001>

<llo_original>
// kernel: seq2seq_forward.1
$region0: #{seq2seq_forward.1}
  #allocation0 [shape = 'u32[]', space=smem, size = 0x4, offset = 0x4, fixed_abs, tag = 'smem constant byte address 0x4 - core index']
  #allocation1 [shape = 'u32[144,128]{1,0:T(1,128)}', space=vmem, size = 0x12000, scoped, tag = 'internal scratch']
  %s0 = inlined_call_operand.vmem [shape: s32[16,1], index: 0, kind: input, shape index: {}]
  %s1 = inlined_call_operand.vmem [shape: f32[24,32], index: 1, kind: input, shape index: {}]
  %s2 = inlined_call_operand.hbm [shape: f32[2,64,192], index: 2, kind: input, shape index: {}]
  %s3 = inlined_call_operand.vmem [shape: f32[2,1,192], index: 3, kind: input, shape index: {}]
  %s4 = inlined_call_operand.hbm [shape: f32[20,32], index: 4, kind: input, shape index: {}]
  %s5 = inlined_call_operand.hbm [shape: f32[2,64,192], index: 5, kind: input, shape index: {}]
  %s6 = inlined_call_operand.hbm [shape: f32[2,1,192], index: 6, kind: input, shape index: {}]
  %s7 = inlined_call_operand.vmem [shape: f32[32,128], index: 7, kind: input, shape index: {}]
  %s8 = inlined_call_operand.hbm [shape: f32[1,128], index: 8, kind: input, shape index: {}]
  %s9 = inlined_call_operand.vmem [shape: f32[12,128], index: 9, kind: output, shape index: {0}]
  %s10 = inlined_call_operand.hbm [shape: f32[2,2,32], index: 10, kind: output, shape index: {1}]
  %11 = xla_tuple %s9, %s10
  %s12 = sld [smem:[#allocation0]]
  $region74: #{seq2seq_forward.1} parent=0
    _
  %s14 = ssub.s32 1, %s12
  %s15 = scalar_select 0, %s14, %s12
  $region1: #{seq2seq_forward.1} parent=0
    #allocation2 [shape = 'u8[131072]{0}', space=vmem, size = 0x20000, scoped, tag = 'input window, operand 2, single buffered']
    #allocation3 [shape = 's32[1]{0}', space=sflag, size = 0x4, scoped, tag = 'scoped memory for seq2seq_forward.1']
    #allocation4 [shape = 's32[1]{0}', space=sflag, size = 0x4, scoped, tag = 'scoped memory for seq2seq_forward.1']
    #allocation5 [shape = 'u8[12288]{0}', space=vmem, size = 0x3000, scoped, tag = 'input window, operand 4, single buffered']
    #allocation6 [shape = 's32[1]{0}', space=sflag, size = 0x4, scoped, tag = 'scoped memory for seq2seq_forward.1']
    #allocation7 [shape = 'u8[131072]{0}', space=vmem, size = 0x20000, scoped, tag = 'input window, operand 5, single buffered']
    #allocation8 [shape = 'u8[2048]{0}', space=vmem, size = 0x800, scoped, tag = 'input window, operand 6, single buffered']
    #allocation9 [shape = 's32[1]{0}', space=sflag, size = 0x4, scoped, tag = 'scoped memory for seq2seq_forward.1']
    #allocation10 [shape = 'u8[512]{0}', space=vmem, size = 0x400, scoped, tag = 'input window, operand 8, single buffered']
    #allocation11 [shape = 'u8[2048]{0}', space=vmem, size = 0x800, scoped, tag = 'output window, operand 1, single buffered']
    %16 = vsyncpa [#allocation3], 0
    %17 = vsyncpa [#allocation6], 0
    %18 = vsyncpa [#allocation9], 0
    %19 = vsyncpa [#allocation4], 0
    // Predicated region
    $region2: #{seq2seq_forward.1} parent=1 // pred_check
      _
    $region3: #{seq2seq_forward.1} parent=1 // pred_check_branch
      %21 = sbr.rel (0) target = $region5
    $region4: #{seq2seq_forward.1} parent=1 // pred_region
      _
    $region5: #{seq2seq_forward.1} parent=1 // pred_fallthru
      _
    // Predicated region
    $region6: #{seq2seq_forward.1} parent=1 // pred_check
      _
    $region7: #{seq2seq_forward.1} parent=1 // pred_check_branch
      %23 = sbr.rel (0) target = $region9
    $region8: #{seq2seq_forward.1} parent=1 // pred_region
      _
    $region9: #{seq2seq_forward.1} parent=1 // pred_fallthru
      _
    // Predicated region
    $region10: #{seq2seq_forward.1} parent=1 // pred_check
      _
    $region11: #{seq2seq_forward.1} parent=1 // pred_check_branch
      %25 = sbr.rel (0) target = $region13
    $region12: #{seq2seq_forward.1} parent=1 // pred_region
      %s27 = ssub.s32 4096, 4096
      %28 = vsyncadd [#allocation3], %s27
      %s29 = sshll.u32 [#allocation2], 4
      %s30 = int_to_ptr.vmem [resolvable:$true] %s29
      %35 = dma.hbm_to_vmem [thread:$0]  %s2, 4096, %s30, [#allocation3], 256, 256, 16
    $region13: #{seq2seq_forward.1} parent=1 // pred_fallthru
      _
    // Predicated region
    $region14: #{seq2seq_forward.1} parent=1 // pred_check
      _
    $region15: #{seq2seq_forward.1} parent=1 // pred_check_branch
      %37 = sbr.rel (0) target = $region17
    $region16: #{seq2seq_forward.1} parent=1 // pred_region
      _
    $region17: #{seq2seq_forward.1} parent=1 // pred_fallthru
      _
    // Predicated region
    $region18: #{seq2seq_forward.1} parent=1 // pred_check
      _
    $region19: #{seq2seq_forward.1} parent=1 // pred_check_branch
      %39 = sbr.rel (0) target = $region21
    $region20: #{seq2seq_forward.1} parent=1 // pred_region
      %s41 = ssub.s32 384, 384
      %42 = vsyncadd [#allocation6], %s41
      %s43 = sshll.u32 [#allocation5], 4
      %s44 = int_to_ptr.vmem [resolvable:$true] %s43
      %49 = dma.hbm_to_vmem [thread:$0]  %s4, 384, %s44, [#allocation6], 128, 128, 8
    $region21: #{seq2seq_forward.1} parent=1 // pred_fallthru
      _
    // Predicated region
    $region22: #{seq2seq_forward.1} parent=1 // pred_check
      _
    $region23: #{seq2seq_forward.1} parent=1 // pred_check_branch
      %51 = sbr.rel (0) target = $region25
    $region24: #{seq2seq_forward.1} parent=1 // pred_region
      %s53 = ssub.s32 4096, 4096
      %54 = vsyncadd [#allocation6], %s53
      %s55 = sshll.u32 [#allocation7], 4
      %s56 = int_to_ptr.vmem [resolvable:$true] %s55
      %61 = dma.hbm_to_vmem [thread:$0]  %s5, 4096, %s56, [#allocation6], 256, 256, 16
    $region25: #{seq2seq_forward.1} parent=1 // pred_fallthru
      _
    // Predicated region
    $region26: #{seq2seq_forward.1} parent=1 // pred_check
      _
    $region27: #{seq2seq_forward.1} parent=1 // pred_check_branch
      %63 = sbr.rel (0) target = $region29
    $region28: #{seq2seq_forward.1} parent=1 // pred_region
      %s65 = ssub.s32 64, 64
      %66 = vsyncadd [#allocation9], %s65
      %s67 = sshll.u32 [#allocation8], 4
      %s68 = int_to_ptr.vmem [resolvable:$true] %s67
      %73 = dma.hbm_to_vmem [thread:$0]  %s6, 64, %s68, [#allocation9], 32, 32, 2
    $region29: #{seq2seq_forward.1} parent=1 // pred_fallthru
      _
    // Predicated region
    $region30: #{seq2seq_forward.1} parent=1 // pred_check
      _
    $region31: #{seq2seq_forward.1} parent=1 // pred_check_branch
      %75 = sbr.rel (0) target = $region33
    $region32: #{seq2seq_forward.1} parent=1 // pred_region
      _
    $region33: #{seq2seq_forward.1} parent=1 // pred_fallthru
      _
    // Predicated region
    $region34: #{seq2seq_forward.1} parent=1 // pred_check
      _
    $region35: #{seq2seq_forward.1} parent=1 // pred_check_branch
      %77 = sbr.rel (0) target = $region37
    $region36: #{seq2seq_forward.1} parent=1 // pred_region
      %s79 = ssub.s32 16, 16
      %80 = vsyncadd [#allocation9], %s79
      %s82 = sshll.u32 [#allocation10], 4
      %s83 = int_to_ptr.vmem [resolvable:$true] %s82
      %85 = dma.hbm_to_vmem [thread:$0]  %s8, 16, %s83, [#allocation9]
    $region37: #{seq2seq_forward.1} parent=1 // pred_fallthru
      _
    // Predicated region
    $region38: #{seq2seq_forward.1} parent=1 // pred_check
      _
    $region39: #{seq2seq_forward.1} parent=1 // pred_check_branch
      %87 = sbr.rel (0) target = $region41
    $region40: #{seq2seq_forward.1} parent=1 // pred_region
      %88 = dma.done [#allocation3], 4096
    $region41: #{seq2seq_forward.1} parent=1 // pred_fallthru
      _
    // Predicated region
    $region42: #{seq2seq_forward.1} parent=1 // pred_check
      _
    $region43: #{seq2seq_forward.1} parent=1 // pred_check_branch
      %90 = sbr.rel (0) target = $region45
    $region44: #{seq2seq_forward.1} parent=1 // pred_region
      %91 = dma.done [#allocation6], 384
    $region45: #{seq2seq_forward.1} parent=1 // pred_fallthru
      _
    // Predicated region
    $region46: #{seq2seq_forward.1} parent=1 // pred_check
      _
    $region47: #{seq2seq_forward.1} parent=1 // pred_check_branch
      %93 = sbr.rel (0) target = $region49
    $region48: #{seq2seq_forward.1} parent=1 // pred_region
      %94 = dma.done [#allocation6], 4096
    $region49: #{seq2seq_forward.1} parent=1 // pred_fallthru
      _
    // Predicated region
    $region50: #{seq2seq_forward.1} parent=1 // pred_check
      _
    $region51: #{seq2seq_forward.1} parent=1 // pred_check_branch
      %96 = sbr.rel (0) target = $region53
    $region52: #{seq2seq_forward.1} parent=1 // pred_region
      %97 = dma.done [#allocation9], 64
    $region53: #{seq2seq_forward.1} parent=1 // pred_fallthru
      _
    // Predicated region
    $region54: #{seq2seq_forward.1} parent=1 // pred_check
      _
    $region55: #{seq2seq_forward.1} parent=1 // pred_check_branch
      %99 = sbr.rel (0) target = $region57
    $region56: #{seq2seq_forward.1} parent=1 // pred_region
      %100 = dma.done [#allocation9], 16
    $region57: #{seq2seq_forward.1} parent=1 // pred_fallthru
      _
    %v101 = vlaneseq
    %v102 = vand.u32 %v101, 127
    %v103 = vld [vmem:[%s0] sm:$0xff]
    %v104 = vld [vmem:[%s0 + $0x8] sm:$0xff]
    %105 = vset.pattern.permute.xlu0 0
    %106 = vperm.xlu0 %105, %v103
    %v107 = vpop.permute.xlu0 %106
    %108 = vset.pattern.permute.xlu0 0
    %109 = vperm.xlu0 %108, %v104
    %v110 = vpop.permute.xlu0 %109
    %vm111 = vcmp.eq.s32.totalorder %v102, %v107
    %vm112 = vcmp.eq.s32.totalorder %v102, %v110
    %v113 = vsel %vm111, 1, 0
    %v114 = vsel %vm112, 1, 0
    %v115 = vcvt.s32.f32 %v113
    %v116 = vcvt.s32.f32 %v114
    %v117 = vld [vmem:[%s1] sm:$0xff]
    %v118 = vld [vmem:[%s1 + $0x8] sm:$0xff]
    %v119 = vld [vmem:[%s1 + $0x10] sm:$0xff]
    %vm120 = vcmask 195584
    %v122 = vsel %vm120, %v115, 0
    %v125 = vsel %vm120, %v116, 0
    %127 = vmatprep.subr.mxu0 0.0
    %128 = vmatpush1.msra.mxu0 %v117
    %129 = vmatprep.subr.mxu0 0.0
    %130 = vmatpush1.msra.mxu0 %v118
    %131 = vmatprep.subr.mxu0 0.0
    %132 = vmatpush1.msra.mxu0 %v119
    %133 = vmatprep.subr.mxu0 0.0
    %134 = vmatpush1.msra.mxu0 0.0
    %135 = vmatprep.subr.mxu0 0.0
    %136 = vmatpush1.msra.mxu0 0.0
    %137 = vmatprep.subr.mxu0 0.0
    %138 = vmatpush1.msra.mxu0 0.0
    %139 = vmatprep.subr.mxu0 0.0
    %140 = vmatpush1.msra.mxu0 0.0
    %141 = vmatprep.subr.mxu0 0.0
    %142 = vmatpush1.msra.mxu0 0.0
    %143 = vmatprep.subr.mxu0 0.0
    %144 = vmatpush1.msra.mxu0 0.0
    %145 = vmatprep.subr.mxu0 0.0
    %146 = vmatpush1.msra.mxu0 0.0
    %147 = vmatprep.subr.mxu0 0.0
    %148 = vmatpush1.msra.mxu0 0.0
    %149 = vmatprep.subr.mxu0 0.0
    %150 = vmatpush1.msra.mxu0 0.0
    %151 = vmatprep.subr.mxu0 0.0
    %152 = vmatpush1.msra.mxu0 0.0
    %153 = vmatprep.subr.mxu0 0.0
    %154 = vmatpush1.msra.mxu0 0.0
    %155 = vmatprep.subr.mxu0 0.0
    %156 = vmatpush1.msra.mxu0 0.0
    %157 = vmatprep.subr.mxu0 0.0
    %158 = vmatpush1.msra.mxu0 0.0
    %159 = vmatprep.subr.mxu0 0.0
    %160 = vmatpush1.msra.mxu0 0.0
    %161 = vmatprep.subr.mxu0 0.0
    %162 = vmatpush1.msra.mxu0 0.0
    %163 = vmatprep.subr.mxu0 0.0
    %164 = vmatpush1.msra.mxu0 0.0
    %165 = vmatprep.subr.mxu0 0.0
    %166 = vmatpush1.msra.mxu0 0.0
    %167 = vmatprep.subr.mxu0 0.0
    %168 = vmatpush1.msra.mxu0 0.0
    %169 = vmatprep.subr.mxu0 0.0
    %170 = vmatpush1.msra.mxu0 0.0
    %171 = vmatprep.subr.mxu0 0.0
    %172 = vmatpush1.msra.mxu0 0.0
    %173 = vmatprep.subr.mxu0 0.0
    %174 = vmatpush1.msra.mxu0 0.0
    %175 = vmatprep.subr.mxu0 0.0
    %176 = vmatpush1.msra.mxu0 0.0
    %177 = vmatprep.subr.mxu0 0.0
    %178 = vmatpush1.msra.mxu0 0.0
    %179 = vmatprep.subr.mxu0 0.0
    %180 = vmatpush1.msra.mxu0 0.0
    %181 = vmatprep.subr.mxu0 0.0
    %182 = vmatpush1.msra.mxu0 0.0
    %183 = vmatprep.subr.mxu0 0.0
    %184 = vmatpush1.msra.mxu0 0.0
    %185 = vmatprep.subr.mxu0 0.0
    %186 = vmatpush1.msra.mxu0 0.0
    %187 = vmatprep.subr.mxu0 0.0
    %188 = vmatpush1.msra.mxu0 0.0
    %189 = vmatprep.subr.mxu0 0.0
    %190 = vmatpush1.msra.mxu0 0.0
    %191 = vmatprep.mubr.f32.mxu0 0.0
    %192 = vmatmul.mubr.f32.gmra.mrb[0].mxu0 %v122
    %v193 = vpop.f32.mrb[0].mxu0
    %v194 = vadd.f32 0.0, %v193
    %v195 = vpop.f32.mrb[0].mxu0
    %196 = vmatprep.mubr.f32.mxu0 0.0
    %197 = vmatmul.mubr.f32.gmra.mrb[0].mxu0 %v125
    %v198 = vpop.f32.mrb[0].mxu0
    %v199 = vadd.f32 0.0, %v198
    %v200 = vpop.f32.mrb[0].mxu0
    %201 = vdwg.mxu0
    %v202 = vld [vmem:[#allocation2] sm:$0xff]
    %v203 = vld [vmem:[#allocation2 + $0x8] sm:$0xff]
    %v204 = vld [vmem:[#allocation2 + $0x10] sm:$0xff]
    %v205 = vld [vmem:[#allocation2 + $0x18] sm:$0xff]
    %v206 = vld [vmem:[#allocation2 + $0x20] sm:$0xff]
    %v207 = vld [vmem:[#allocation2 + $0x28] sm:$0xff]
    %v208 = vld [vmem:[#allocation2 + $0x30] sm:$0xff]
    %v209 = vld [vmem:[#allocation2 + $0x38] sm:$0xff]
    %v210 = vld [vmem:[#allocation2 + $0x40] sm:$0xff]
    %v211 = vld [vmem:[#allocation2 + $0x48] sm:$0xff]
    %v212 = vld [vmem:[#allocation2 + $0x50] sm:$0xff]
    %v213 = vld [vmem:[#allocation2 + $0x58] sm:$0xff]
    %v214 = vld [vmem:[#allocation2 + $0x60] sm:$0xff]
    %v215 = vld [vmem:[#allocation2 + $0x68] sm:$0xff]
    %v216 = vld [vmem:[#allocation2 + $0x70] sm:$0xff]
    %v217 = vld [vmem:[#allocation2 + $0x78] sm:$0xff]
    %v218 = vld [vmem:[%s3] sm:$0x3]
    %vm219 = vcmask 261120
    %v220 = vsel %vm219, %v194, 0.0
    %v222 = vlaneseq
    %v223 = vshrl.u32 %v222, 7
    %v224 = vsub.s32 0, %v223
    %v225 = vrot.slane %v218, %v224
    %v226 = vlaneseq
    %v227 = vshrl.u32 %v226, 7
    %v228 = vsub.s32 1, %v227
    %v229 = vrot.slane %v218, %v228
    %vm232 = vcmask 523264
    %v234 = vsel %vm232, %v220, 0
    %236 = vmatprep.subr.mxu0 %v203
    %237 = vmatpush1.msra.mxu0 %v202
    %238 = vmatprep.subr.mxu0 %v205
    %239 = vmatpush1.msra.mxu0 %v204
    %240 = vmatprep.subr.mxu0 %v207
    %241 = vmatpush1.msra.mxu0 %v206
    %242 = vmatprep.subr.mxu0 %v209
    %243 = vmatpush1.msra.mxu0 %v208
    %244 = vmatprep.subr.mxu0 %v211
    %245 = vmatpush1.msra.mxu0 %v210
    %246 = vmatprep.subr.mxu0 %v213
    %247 = vmatpush1.msra.mxu0 %v212
    %248 = vmatprep.subr.mxu0 %v215
    %249 = vmatpush1.msra.mxu0 %v214
    %250 = vmatprep.subr.mxu0 %v217
    %251 = vmatpush1.msra.mxu0 %v216
    %252 = vmatprep.subr.mxu0 0.0
    %253 = vmatpush1.msra.mxu0 0.0
    %254 = vmatprep.subr.mxu0 0.0
    %255 = vmatpush1.msra.mxu0 0.0
    %256 = vmatprep.subr.mxu0 0.0
    %257 = vmatpush1.msra.mxu0 0.0
    %258 = vmatprep.subr.mxu0 0.0
    %259 = vmatpush1.msra.mxu0 0.0
    %260 = vmatprep.subr.mxu0 0.0
    %261 = vmatpush1.msra.mxu0 0.0
    %262 = vmatprep.subr.mxu0 0.0
    %263 = vmatpush1.msra.mxu0 0.0
    %264 = vmatprep.subr.mxu0 0.0
    %265 = vmatpush1.msra.mxu0 0.0
    %266 = vmatprep.subr.mxu0 0.0
    %267 = vmatpush1.msra.mxu0 0.0
    %268 = vmatprep.subr.mxu0 0.0
    %269 = vmatpush1.msra.mxu0 0.0
    %270 = vmatprep.subr.mxu0 0.0
    %271 = vmatpush1.msra.mxu0 0.0
    %272 = vmatprep.subr.mxu0 0.0
    %273 = vmatpush1.msra.mxu0 0.0
    %274 = vmatprep.subr.mxu0 0.0
    %275 = vmatpush1.msra.mxu0 0.0
    %276 = vmatprep.subr.mxu0 0.0
    %277 = vmatpush1.msra.mxu0 0.0
    %278 = vmatprep.subr.mxu0 0.0
    %279 = vmatpush1.msra.mxu0 0.0
    %280 = vmatprep.subr.mxu0 0.0
    %281 = vmatpush1.msra.mxu0 0.0
    %282 = vmatprep.subr.mxu0 0.0
    %283 = vmatpush1.msra.mxu0 0.0
    %284 = vmatprep.subr.mxu0 0.0
    %285 = vmatpush1.msra.mxu0 0.0
    %286 = vmatprep.subr.mxu0 0.0
    %287 = vmatpush1.msra.mxu0 0.0
    %288 = vmatprep.subr.mxu0 0.0
    %289 = vmatpush1.msra.mxu0 0.0
    %290 = vmatprep.subr.mxu0 0.0
    %291 = vmatpush1.msra.mxu0 0.0
    %292 = vmatprep.subr.mxu0 0.0
    %293 = vmatpush1.msra.mxu0 0.0
    %294 = vmatprep.subr.mxu0 0.0
    %295 = vmatpush1.msra.mxu0 0.0
    %296 = vmatprep.subr.mxu0 0.0
    %297 = vmatpush1.msra.mxu0 0.0
    %298 = vmatprep.subr.mxu0 0.0
    %299 = vmatpush1.msra.mxu0 0.0
    %300 = vmatprep.mubr.f32.mxu0 0.0
    %301 = vmatmul.mubr.f32.gmra.mrb[0].mxu0 %v234
    %v302 = vpop.f32.mrb[0].mxu0
    %v303 = vadd.f32 %v225, %v302
    %v304 = vpop.f32.mrb[0].mxu0
    %v305 = vadd.f32 %v229, %v304
    %306 = vdwg.mxu0
    %308 = vrot.lane.b32.xlu0 %v303, 32
    %v309 = vpop.permute.xlu0 %308
    %v311 = vadd.f32 %v303, %v309
    %v312 = vxor.u32 %v311, 2147483648
    %v313 = vmul.f32 %v312, 1.442695
    %v314 = vpow.pop %v313
    %v315 = vadd.f32 %v314, 1.0
    %v316 = vrcp.pop %v315
    %v317 = vmul.f32 1.0, %v316
    %319 = vrot.lane.b32.xlu0 %v305, 32
    %v320 = vpop.permute.xlu0 %319
    %v322 = vadd.f32 %v303, %v320
    %v323 = vxor.u32 %v322, 2147483648
    %v324 = vmul.f32 %v323, 1.442695
    %v325 = vpow.pop %v324
    %v326 = vadd.f32 %v325, 1.0
    %v327 = vrcp.pop %v326
    %v328 = vmul.f32 1.0, %v327
    %329 = vrot.lane.b32.xlu0 %v305, 96
    %v330 = vpop.permute.xlu0 %329
    %v332 = vmul.f32 %v317, %v330
    %334 = vrot.lane.b32.xlu0 %v332, 64
    %v335 = vpop.permute.xlu0 %334
    %v337 = vadd.f32 %v303, %v335
    %v338 = vtanh.pop %v337
    %v339 = vsub.f32 1.0, %v328
    %341 = vrot.lane.b32.xlu0 %v338, 96
    %v342 = vpop.permute.xlu0 %341
    %v344 = vmul.f32 %v339, %v342
    %v345 = vmul.f32 %v328, 0.0
    %v346 = vadd.f32 %v344, %v345
    %s347 = scalar_lea.vmem [#allocation2], 128
    %v348 = vld [vmem:[%s347] sm:$0xff]
    %v349 = vld [vmem:[%s347 + $0x8] sm:$0xff]
    %v350 = vld [vmem:[%s347 + $0x10] sm:$0xff]
    %v351 = vld [vmem:[%s347 + $0x18] sm:$0xff]
    %v352 = vld [vmem:[%s347 + $0x20] sm:$0xff]
    %v353 = vld [vmem:[%s347 + $0x28] sm:$0xff]
    %v354 = vld [vmem:[%s347 + $0x30] sm:$0xff]
    %v355 = vld [vmem:[%s347 + $0x38] sm:$0xff]
    %v356 = vld [vmem:[%s347 + $0x40] sm:$0xff]
    %v357 = vld [vmem:[%s347 + $0x48] sm:$0xff]
    %v358 = vld [vmem:[%s347 + $0x50] sm:$0xff]
    %v359 = vld [vmem:[%s347 + $0x58] sm:$0xff]
    %v360 = vld [vmem:[%s347 + $0x60] sm:$0xff]
    %v361 = vld [vmem:[%s347 + $0x68] sm:$0xff]
    %v362 = vld [vmem:[%s347 + $0x70] sm:$0xff]
    %v363 = vld [vmem:[%s347 + $0x78] sm:$0xff]
    %s364 = scalar_lea.vmem %s3, 2
    %v365 = vld [vmem:[%s364] sm:$0x3]
    %367 = vrot.lane.b32.xlu0 %v346, 96
    %v368 = vpop.permute.xlu0 %367
    %v370 = vsel %vm219, %v368, 0.0
    %v372 = vlaneseq
    %v373 = vshrl.u32 %v372, 7
    %v374 = vsub.s32 0, %v373
    %v375 = vrot.slane %v365, %v374
    %v376 = vlaneseq
    %v377 = vshrl.u32 %v376, 7
    %v378 = vsub.s32 1, %v377
    %v379 = vrot.slane %v365, %v378
    %v383 = vsel %vm232, %v370, 0
    %385 = vmatprep.subr.mxu0 %v349
    %386 = vmatpush1.msra.mxu0 %v348
    %387 = vmatprep.subr.mxu0 %v351
    %388 = vmatpush1.msra.mxu0 %v350
    %389 = vmatprep.subr.mxu0 %v353
    %390 = vmatpush1.msra.mxu0 %v352
    %391 = vmatprep.subr.mxu0 %v355
    %392 = vmatpush1.msra.mxu0 %v354
    %393 = vmatprep.subr.mxu0 %v357
    %394 = vmatpush1.msra.mxu0 %v356
    %395 = vmatprep.subr.mxu0 %v359
    %396 = vmatpush1.msra.mxu0 %v358
    %397 = vmatprep.subr.mxu0 %v361
    %398 = vmatpush1.msra.mxu0 %v360
    %399 = vmatprep.subr.mxu0 %v363
    %400 = vmatpush1.msra.mxu0 %v362
    %401 = vmatprep.subr.mxu0 0.0
    %402 = vmatpush1.msra.mxu0 0.0
    %403 = vmatprep.subr.mxu0 0.0
    %404 = vmatpush1.msra.mxu0 0.0
    %405 = vmatprep.subr.mxu0 0.0
    %406 = vmatpush1.msra.mxu0 0.0
    %407 = vmatprep.subr.mxu0 0.0
    %408 = vmatpush1.msra.mxu0 0.0
    %409 = vmatprep.subr.mxu0 0.0
    %410 = vmatpush1.msra.mxu0 0.0
    %411 = vmatprep.subr.mxu0 0.0
    %412 = vmatpush1.msra.mxu0 0.0
    %413 = vmatprep.subr.mxu0 0.0
    %414 = vmatpush1.msra.mxu0 0.0
    %415 = vmatprep.subr.mxu0 0.0
    %416 = vmatpush1.msra.mxu0 0.0
    %417 = vmatprep.subr.mxu0 0.0
    %418 = vmatpush1.msra.mxu0 0.0
    %419 = vmatprep.subr.mxu0 0.0
    %420 = vmatpush1.msra.mxu0 0.0
    %421 = vmatprep.subr.mxu0 0.0
    %422 = vmatpush1.msra.mxu0 0.0
    %423 = vmatprep.subr.mxu0 0.0
    %424 = vmatpush1.msra.mxu0 0.0
    %425 = vmatprep.subr.mxu0 0.0
    %426 = vmatpush1.msra.mxu0 0.0
    %427 = vmatprep.subr.mxu0 0.0
    %428 = vmatpush1.msra.mxu0 0.0
    %429 = vmatprep.subr.mxu0 0.0
    %430 = vmatpush1.msra.mxu0 0.0
    %431 = vmatprep.subr.mxu0 0.0
    %432 = vmatpush1.msra.mxu0 0.0
    %433 = vmatprep.subr.mxu0 0.0
    %434 = vmatpush1.msra.mxu0 0.0
    %435 = vmatprep.subr.mxu0 0.0
    %436 = vmatpush1.msra.mxu0 0.0
    %437 = vmatprep.subr.mxu0 0.0
    %438 = vmatpush1.msra.mxu0 0.0
    %439 = vmatprep.subr.mxu0 0.0
    %440 = vmatpush1.msra.mxu0 0.0
    %441 = vmatprep.subr.mxu0 0.0
    %442 = vmatpush1.msra.mxu0 0.0
    %443 = vmatprep.subr.mxu0 0.0
    %444 = vmatpush1.msra.mxu0 0.0
    %445 = vmatprep.subr.mxu0 0.0
    %446 = vmatpush1.msra.mxu0 0.0
    %447 = vmatprep.subr.mxu0 0.0
    %448 = vmatpush1.msra.mxu0 0.0
    %449 = vmatprep.mubr.f32.mxu0 0.0
    %450 = vmatmul.mubr.f32.gmra.mrb[0].mxu0 %v383
    %v451 = vpop.f32.mrb[0].mxu0
    %v452 = vadd.f32 %v375, %v451
    %v453 = vpop.f32.mrb[0].mxu0
    %v454 = vadd.f32 %v379, %v453
    %455 = vdwg.mxu0
    %457 = vrot.lane.b32.xlu0 %v452, 32
    %v458 = vpop.permute.xlu0 %457
    %v460 = vadd.f32 %v452, %v458
    %v461 = vxor.u32 %v460, 2147483648
    %v462 = vmul.f32 %v461, 1.442695
    %v463 = vpow.pop %v462
    %v464 = vadd.f32 %v463, 1.0
    %v465 = vrcp.pop %v464
    %v466 = vmul.f32 1.0, %v465
    %468 = vrot.lane.b32.xlu0 %v454, 32
    %v469 = vpop.permute.xlu0 %468
    %v471 = vadd.f32 %v452, %v469
    %v472 = vxor.u32 %v471, 2147483648
    %v473 = vmul.f32 %v472, 1.442695
    %v474 = vpow.pop %v473
    %v475 = vadd.f32 %v474, 1.0
    %v476 = vrcp.pop %v475
    %v477 = vmul.f32 1.0, %v476
    %478 = vrot.lane.b32.xlu0 %v454, 96
    %v479 = vpop.permute.xlu0 %478
    %v481 = vmul.f32 %v466, %v479
    %483 = vrot.lane.b32.xlu0 %v481, 64
    %v484 = vpop.permute.xlu0 %483
    %v486 = vadd.f32 %v452, %v484
    %v487 = vtanh.pop %v486
    %v488 = vsub.f32 1.0, %v477
    %490 = vrot.lane.b32.xlu0 %v487, 96
    %v491 = vpop.permute.xlu0 %490
    %v493 = vmul.f32 %v488, %v491
    %v494 = vmul.f32 %v477, 0.0
    %v495 = vadd.f32 %v493, %v494
    %v496 = vrot.slane %v346, 6
    %v498 = vsel %vm219, %v194, %v496
    %v500 = vrot.slane %v498, 2
    %v501 = vsel %vm232, %v500, 0
    %503 = vmatprep.subr.mxu0 %v203
    %504 = vmatpush1.msra.mxu0 %v202
    %505 = vmatprep.subr.mxu0 %v205
    %506 = vmatpush1.msra.mxu0 %v204
    %507 = vmatprep.subr.mxu0 %v207
    %508 = vmatpush1.msra.mxu0 %v206
    %509 = vmatprep.subr.mxu0 %v209
    %510 = vmatpush1.msra.mxu0 %v208
    %511 = vmatprep.subr.mxu0 %v211
    %512 = vmatpush1.msra.mxu0 %v210
    %513 = vmatprep.subr.mxu0 %v213
    %514 = vmatpush1.msra.mxu0 %v212
    %515 = vmatprep.subr.mxu0 %v215
    %516 = vmatpush1.msra.mxu0 %v214
    %517 = vmatprep.subr.mxu0 %v217
    %518 = vmatpush1.msra.mxu0 %v216
    %519 = vmatprep.subr.mxu0 0.0
    %520 = vmatpush1.msra.mxu0 0.0
    %521 = vmatprep.subr.mxu0 0.0
    %522 = vmatpush1.msra.mxu0 0.0
    %523 = vmatprep.subr.mxu0 0.0
    %524 = vmatpush1.msra.mxu0 0.0
    %525 = vmatprep.subr.mxu0 0.0
    %526 = vmatpush1.msra.mxu0 0.0
    %527 = vmatprep.subr.mxu0 0.0
    %528 = vmatpush1.msra.mxu0 0.0
    %529 = vmatprep.subr.mxu0 0.0
    %530 = vmatpush1.msra.mxu0 0.0
    %531 = vmatprep.subr.mxu0 0.0
    %532 = vmatpush1.msra.mxu0 0.0
    %533 = vmatprep.subr.mxu0 0.0
    %534 = vmatpush1.msra.mxu0 0.0
    %535 = vmatprep.subr.mxu0 0.0
    %536 = vmatpush1.msra.mxu0 0.0
    %537 = vmatprep.subr.mxu0 0.0
    %538 = vmatpush1.msra.mxu0 0.0
    %539 = vmatprep.subr.mxu0 0.0
    %540 = vmatpush1.msra.mxu0 0.0
    %541 = vmatprep.subr.mxu0 0.0
    %542 = vmatpush1.msra.mxu0 0.0
    %543 = vmatprep.subr.mxu0 0.0
    %544 = vmatpush1.msra.mxu0 0.0
    %545 = vmatprep.subr.mxu0 0.0
    %546 = vmatpush1.msra.mxu0 0.0
    %547 = vmatprep.subr.mxu0 0.0
    %548 = vmatpush1.msra.mxu0 0.0
    %549 = vmatprep.subr.mxu0 0.0
    %550 = vmatpush1.msra.mxu0 0.0
    %551 = vmatprep.subr.mxu0 0.0
    %552 = vmatpush1.msra.mxu0 0.0
    %553 = vmatprep.subr.mxu0 0.0
    %554 = vmatpush1.msra.mxu0 0.0
    %555 = vmatprep.subr.mxu0 0.0
    %556 = vmatpush1.msra.mxu0 0.0
    %557 = vmatprep.subr.mxu0 0.0
    %558 = vmatpush1.msra.mxu0 0.0
    %559 = vmatprep.subr.mxu0 0.0
    %560 = vmatpush1.msra.mxu0 0.0
    %561 = vmatprep.subr.mxu0 0.0
    %562 = vmatpush1.msra.mxu0 0.0
    %563 = vmatprep.subr.mxu0 0.0
    %564 = vmatpush1.msra.mxu0 0.0
    %565 = vmatprep.subr.mxu0 0.0
    %566 = vmatpush1.msra.mxu0 0.0
    %567 = vmatprep.mubr.f32.mxu0 0.0
    %568 = vmatmul.mubr.f32.gmra.mrb[0].mxu0 %v501
    %v569 = vpop.f32.mrb[0].mxu0
    %v570 = vadd.f32 %v225, %v569
    %v571 = vpop.f32.mrb[0].mxu0
    %v572 = vadd.f32 %v229, %v571
    %573 = vdwg.mxu0
    %575 = vrot.lane.b32.xlu0 %v570, 32
    %v576 = vpop.permute.xlu0 %575
    %v578 = vadd.f32 %v570, %v576
    %v579 = vxor.u32 %v578, 2147483648
    %v580 = vmul.f32 %v579, 1.442695
    %v581 = vpow.pop %v580
    %v582 = vadd.f32 %v581, 1.0
    %v583 = vrcp.pop %v582
    %v584 = vmul.f32 1.0, %v583
    %586 = vrot.lane.b32.xlu0 %v572, 32
    %v587 = vpop.permute.xlu0 %586
    %v589 = vadd.f32 %v570, %v587
    %v590 = vxor.u32 %v589, 2147483648
    %v591 = vmul.f32 %v590, 1.442695
    %v592 = vpow.pop %v591
    %v593 = vadd.f32 %v592, 1.0
    %v594 = vrcp.pop %v593
    %v595 = vmul.f32 1.0, %v594
    %596 = vrot.lane.b32.xlu0 %v572, 96
    %v597 = vpop.permute.xlu0 %596
    %v599 = vmul.f32 %v584, %v597
    %601 = vrot.lane.b32.xlu0 %v599, 64
    %v602 = vpop.permute.xlu0 %601
    %v604 = vadd.f32 %v570, %v602
    %v605 = vtanh.pop %v604
    %v606 = vsub.f32 1.0, %v595
    %608 = vrot.lane.b32.xlu0 %v605, 96
    %v609 = vpop.permute.xlu0 %608
    %v611 = vmul.f32 %v606, %v609
    %v612 = vmul.f32 %v595, %v346
    %v613 = vadd.f32 %v611, %v612
    %615 = vrot.lane.b32.xlu0 %v613, 96
    %v616 = vpop.permute.xlu0 %615
    %v618 = vsel %vm219, %v616, %v495
    %v620 = vsel %vm232, %v618, 0
    %622 = vmatprep.subr.mxu0 %v349
    %623 = vmatpush1.msra.mxu0 %v348
    %624 = vmatprep.subr.mxu0 %v351
    %625 = vmatpush1.msra.mxu0 %v350
    %626 = vmatprep.subr.mxu0 %v353
    %627 = vmatpush1.msra.mxu0 %v352
    %628 = vmatprep.subr.mxu0 %v355
    %629 = vmatpush1.msra.mxu0 %v354
    %630 = vmatprep.subr.mxu0 %v357
    %631 = vmatpush1.msra.mxu0 %v356
    %632 = vmatprep.subr.mxu0 %v359
    %633 = vmatpush1.msra.mxu0 %v358
    %634 = vmatprep.subr.mxu0 %v361
    %635 = vmatpush1.msra.mxu0 %v360
    %636 = vmatprep.subr.mxu0 %v363
    %637 = vmatpush1.msra.mxu0 %v362
    %638 = vmatprep.subr.mxu0 0.0
    %639 = vmatpush1.msra.mxu0 0.0
    %640 = vmatprep.subr.mxu0 0.0
    %641 = vmatpush1.msra.mxu0 0.0
    %642 = vmatprep.subr.mxu0 0.0
    %643 = vmatpush1.msra.mxu0 0.0
    %644 = vmatprep.subr.mxu0 0.0
    %645 = vmatpush1.msra.mxu0 0.0
    %646 = vmatprep.subr.mxu0 0.0
    %647 = vmatpush1.msra.mxu0 0.0
    %648 = vmatprep.subr.mxu0 0.0
    %649 = vmatpush1.msra.mxu0 0.0
    %650 = vmatprep.subr.mxu0 0.0
    %651 = vmatpush1.msra.mxu0 0.0
    %652 = vmatprep.subr.mxu0 0.0
    %653 = vmatpush1.msra.mxu0 0.0
    %654 = vmatprep.subr.mxu0 0.0
    %655 = vmatpush1.msra.mxu0 0.0
    %656 = vmatprep.subr.mxu0 0.0
    %657 = vmatpush1.msra.mxu0 0.0
    %658 = vmatprep.subr.mxu0 0.0
    %659 = vmatpush1.msra.mxu0 0.0
    %660 = vmatprep.subr.mxu0 0.0
    %661 = vmatpush1.msra.mxu0 0.0
    %662 = vmatprep.subr.mxu0 0.0
    %663 = vmatpush1.msra.mxu0 0.0
    %664 = vmatprep.subr.mxu0 0.0
    %665 = vmatpush1.msra.mxu0 0.0
    %666 = vmatprep.subr.mxu0 0.0
    %667 = vmatpush1.msra.mxu0 0.0
    %668 = vmatprep.subr.mxu0 0.0
    %669 = vmatpush1.msra.mxu0 0.0
    %670 = vmatprep.subr.mxu0 0.0
    %671 = vmatpush1.msra.mxu0 0.0
    %672 = vmatprep.subr.mxu0 0.0
    %673 = vmatpush1.msra.mxu0 0.0
    %674 = vmatprep.subr.mxu0 0.0
    %675 = vmatpush1.msra.mxu0 0.0
    %676 = vmatprep.subr.mxu0 0.0
    %677 = vmatpush1.msra.mxu0 0.0
    %678 = vmatprep.subr.mxu0 0.0
    %679 = vmatpush1.msra.mxu0 0.0
    %680 = vmatprep.subr.mxu0 0.0
    %681 = vmatpush1.msra.mxu0 0.0
    %682 = vmatprep.subr.mxu0 0.0
    %683 = vmatpush1.msra.mxu0 0.0
    %684 = vmatprep.subr.mxu0 0.0
    %685 = vmatpush1.msra.mxu0 0.0
    %686 = vmatprep.mubr.f32.mxu0 0.0
    %687 = vmatmul.mubr.f32.gmra.mrb[0].mxu0 %v620
    %v688 = vpop.f32.mrb[0].mxu0
    %v689 = vadd.f32 %v375, %v688
    %v690 = vpop.f32.mrb[0].mxu0
    %v691 = vadd.f32 %v379, %v690
    %692 = vdwg.mxu0
    %694 = vrot.lane.b32.xlu0 %v689, 32
    %v695 = vpop.permute.xlu0 %694
    %v697 = vadd.f32 %v689, %v695
    %v698 = vxor.u32 %v697, 2147483648
    %v699 = vmul.f32 %v698, 1.442695
    %v700 = vpow.pop %v699
    %v701 = vadd.f32 %v700, 1.0
    %v702 = vrcp.pop %v701
    %v703 = vmul.f32 1.0, %v702
    %705 = vrot.lane.b32.xlu0 %v691, 32
    %v706 = vpop.permute.xlu0 %705
    %v708 = vadd.f32 %v689, %v706
    %v709 = vxor.u32 %v708, 2147483648
    %v710 = vmul.f32 %v709, 1.442695
    %v711 = vpow.pop %v710
    %v712 = vadd.f32 %v711, 1.0
    %v713 = vrcp.pop %v712
    %v714 = vmul.f32 1.0, %v713
    %715 = vrot.lane.b32.xlu0 %v691, 96
    %v716 = vpop.permute.xlu0 %715
    %v718 = vmul.f32 %v703, %v716
    %720 = vrot.lane.b32.xlu0 %v718, 64
    %v721 = vpop.permute.xlu0 %720
    %v723 = vadd.f32 %v689, %v721
    %v724 = vtanh.pop %v723
    %v725 = vsub.f32 1.0, %v714
    %727 = vrot.lane.b32.xlu0 %v724, 96
    %v728 = vpop.permute.xlu0 %727
    %v730 = vmul.f32 %v725, %v728
    %v731 = vmul.f32 %v714, %v495
    %v732 = vadd.f32 %v730, %v731
    %v733 = vrot.slane %v613, 4
    %v735 = vsel %vm219, %v194, %v733
    %v737 = vrot.slane %v735, 4
    %v738 = vsel %vm232, %v737, 0
    %740 = vmatprep.subr.mxu0 %v203
    %741 = vmatpush1.msra.mxu0 %v202
    %742 = vmatprep.subr.mxu0 %v205
    %743 = vmatpush1.msra.mxu0 %v204
    %744 = vmatprep.subr.mxu0 %v207
    %745 = vmatpush1.msra.mxu0 %v206
    %746 = vmatprep.subr.mxu0 %v209
    %747 = vmatpush1.msra.mxu0 %v208
    %748 = vmatprep.subr.mxu0 %v211
    %749 = vmatpush1.msra.mxu0 %v210
    %750 = vmatprep.subr.mxu0 %v213
    %751 = vmatpush1.msra.mxu0 %v212
    %752 = vmatprep.subr.mxu0 %v215
    %753 = vmatpush1.msra.mxu0 %v214
    %754 = vmatprep.subr.mxu0 %v217
    %755 = vmatpush1.msra.mxu0 %v216
    %756 = vmatprep.subr.mxu0 0.0
    %757 = vmatpush1.msra.mxu0 0.0
    %758 = vmatprep.subr.mxu0 0.0
    %759 = vmatpush1.msra.mxu0 0.0
    %760 = vmatprep.subr.mxu0 0.0
    %761 = vmatpush1.msra.mxu0 0.0
    %762 = vmatprep.subr.mxu0 0.0
    %763 = vmatpush1.msra.mxu0 0.0
    %764 = vmatprep.subr.mxu0 0.0
    %765 = vmatpush1.msra.mxu0 0.0
    %766 = vmatprep.subr.mxu0 0.0
    %767 = vmatpush1.msra.mxu0 0.0
    %768 = vmatprep.subr.mxu0 0.0
    %769 = vmatpush1.msra.mxu0 0.0
    %770 = vmatprep.subr.mxu0 0.0
    %771 = vmatpush1.msra.mxu0 0.0
    %772 = vmatprep.subr.mxu0 0.0
    %773 = vmatpush1.msra.mxu0 0.0
    %774 = vmatprep.subr.mxu0 0.0
    %775 = vmatpush1.msra.mxu0 0.0
    %776 = vmatprep.subr.mxu0 0.0
    %777 = vmatpush1.msra.mxu0 0.0
    %778 = vmatprep.subr.mxu0 0.0
    %779 = vmatpush1.msra.mxu0 0.0
    %780 = vmatprep.subr.mxu0 0.0
    %781 = vmatpush1.msra.mxu0 0.0
    %782 = vmatprep.subr.mxu0 0.0
    %783 = vmatpush1.msra.mxu0 0.0
    %784 = vmatprep.subr.mxu0 0.0
    %785 = vmatpush1.msra.mxu0 0.0
    %786 = vmatprep.subr.mxu0 0.0
    %787 = vmatpush1.msra.mxu0 0.0
    %788 = vmatprep.subr.mxu0 0.0
    %789 = vmatpush1.msra.mxu0 0.0
    %790 = vmatprep.subr.mxu0 0.0
    %791 = vmatpush1.msra.mxu0 0.0
    %792 = vmatprep.subr.mxu0 0.0
    %793 = vmatpush1.msra.mxu0 0.0
    %794 = vmatprep.subr.mxu0 0.0
    %795 = vmatpush1.msra.mxu0 0.0
    %796 = vmatprep.subr.mxu0 0.0
    %797 = vmatpush1.msra.mxu0 0.0
    %798 = vmatprep.subr.mxu0 0.0
    %799 = vmatpush1.msra.mxu0 0.0
    %800 = vmatprep.subr.mxu0 0.0
    %801 = vmatpush1.msra.mxu0 0.0
    %802 = vmatprep.subr.mxu0 0.0
    %803 = vmatpush1.msra.mxu0 0.0
    %804 = vmatprep.mubr.f32.mxu0 0.0
    %805 = vmatmul.mubr.f32.gmra.mrb[0].mxu0 %v738
    %v806 = vpop.f32.mrb[0].mxu0
    %v807 = vadd.f32 %v225, %v806
    %v808 = vpop.f32.mrb[0].mxu0
    %v809 = vadd.f32 %v229, %v808
    %810 = vdwg.mxu0
    %812 = vrot.lane.b32.xlu0 %v807, 32
    %v813 = vpop.permute.xlu0 %812
    %v815 = vadd.f32 %v807, %v813
    %v816 = vxor.u32 %v815, 2147483648
    %v817 = vmul.f32 %v816, 1.442695
    %v818 = vpow.pop %v817
    %v819 = vadd.f32 %v818, 1.0
    %v820 = vrcp.pop %v819
    %v821 = vmul.f32 1.0, %v820
    %823 = vrot.lane.b32.xlu0 %v809, 32
    %v824 = vpop.permute.xlu0 %823
    %v826 = vadd.f32 %v807, %v824
    %v827 = vxor.u32 %v826, 2147483648
    %v828 = vmul.f32 %v827, 1.442695
    %v829 = vpow.pop %v828
    %v830 = vadd.f32 %v829, 1.0
    %v831 = vrcp.pop %v830
    %v832 = vmul.f32 1.0, %v831
    %833 = vrot.lane.b32.xlu0 %v809, 96
    %v834 = vpop.permute.xlu0 %833
    %v836 = vmul.f32 %v821, %v834
    %838 = vrot.lane.b32.xlu0 %v836, 64
    %v839 = vpop.permute.xlu0 %838
    %v841 = vadd.f32 %v807, %v839
    %v842 = vtanh.pop %v841
    %v843 = vsub.f32 1.0, %v832
    %845 = vrot.lane.b32.xlu0 %v842, 96
    %v846 = vpop.permute.xlu0 %845
    %v848 = vmul.f32 %v843, %v846
    %v849 = vmul.f32 %v832, %v613
    %v850 = vadd.f32 %v848, %v849
    %852 = vrot.lane.b32.xlu0 %v850, 96
    %v853 = vpop.permute.xlu0 %852
    %v855 = vsel %vm219, %v853, %v732
    %v857 = vsel %vm232, %v855, 0
    %859 = vmatprep.subr.mxu0 %v349
    %860 = vmatpush1.msra.mxu0 %v348
    %861 = vmatprep.subr.mxu0 %v351
    %862 = vmatpush1.msra.mxu0 %v350
    %863 = vmatprep.subr.mxu0 %v353
    %864 = vmatpush1.msra.mxu0 %v352
    %865 = vmatprep.subr.mxu0 %v355
    %866 = vmatpush1.msra.mxu0 %v354
    %867 = vmatprep.subr.mxu0 %v357
    %868 = vmatpush1.msra.mxu0 %v356
    %869 = vmatprep.subr.mxu0 %v359
    %870 = vmatpush1.msra.mxu0 %v358
    %871 = vmatprep.subr.mxu0 %v361
    %872 = vmatpush1.msra.mxu0 %v360
    %873 = vmatprep.subr.mxu0 %v363
    %874 = vmatpush1.msra.mxu0 %v362
    %875 = vmatprep.subr.mxu0 0.0
    %876 = vmatpush1.msra.mxu0 0.0
    %877 = vmatprep.subr.mxu0 0.0
    %878 = vmatpush1.msra.mxu0 0.0
    %879 = vmatprep.subr.mxu0 0.0
    %880 = vmatpush1.msra.mxu0 0.0
    %881 = vmatprep.subr.mxu0 0.0
    %882 = vmatpush1.msra.mxu0 0.0
    %883 = vmatprep.subr.mxu0 0.0
    %884 = vmatpush1.msra.mxu0 0.0
    %885 = vmatprep.subr.mxu0 0.0
    %886 = vmatpush1.msra.mxu0 0.0
    %887 = vmatprep.subr.mxu0 0.0
    %888 = vmatpush1.msra.mxu0 0.0
    %889 = vmatprep.subr.mxu0 0.0
    %890 = vmatpush1.msra.mxu0 0.0
    %891 = vmatprep.subr.mxu0 0.0
    %892 = vmatpush1.msra.mxu0 0.0
    %893 = vmatprep.subr.mxu0 0.0
    %894 = vmatpush1.msra.mxu0 0.0
    %895 = vmatprep.subr.mxu0 0.0
    %896 = vmatpush1.msra.mxu0 0.0
    %897 = vmatprep.subr.mxu0 0.0
    %898 = vmatpush1.msra.mxu0 0.0
    %899 = vmatprep.subr.mxu0 0.0
    %900 = vmatpush1.msra.mxu0 0.0
    %901 = vmatprep.subr.mxu0 0.0
    %902 = vmatpush1.msra.mxu0 0.0
    %903 = vmatprep.subr.mxu0 0.0
    %904 = vmatpush1.msra.mxu0 0.0
    %905 = vmatprep.subr.mxu0 0.0
    %906 = vmatpush1.msra.mxu0 0.0
    %907 = vmatprep.subr.mxu0 0.0
    %908 = vmatpush1.msra.mxu0 0.0
    %909 = vmatprep.subr.mxu0 0.0
    %910 = vmatpush1.msra.mxu0 0.0
    %911 = vmatprep.subr.mxu0 0.0
    %912 = vmatpush1.msra.mxu0 0.0
    %913 = vmatprep.subr.mxu0 0.0
    %914 = vmatpush1.msra.mxu0 0.0
    %915 = vmatprep.subr.mxu0 0.0
    %916 = vmatpush1.msra.mxu0 0.0
    %917 = vmatprep.subr.mxu0 0.0
    %918 = vmatpush1.msra.mxu0 0.0
    %919 = vmatprep.subr.mxu0 0.0
    %920 = vmatpush1.msra.mxu0 0.0
    %921 = vmatprep.subr.mxu0 0.0
    %922 = vmatpush1.msra.mxu0 0.0
    %923 = vmatprep.mubr.f32.mxu0 0.0
    %924 = vmatmul.mubr.f32.gmra.mrb[0].mxu0 %v857
    %v925 = vpop.f32.mrb[0].mxu0
    %v926 = vadd.f32 %v375, %v925
    %v927 = vpop.f32.mrb[0].mxu0
    %v928 = vadd.f32 %v379, %v927
    %929 = vdwg.mxu0
    %931 = vrot.lane.b32.xlu0 %v926, 32
    %v932 = vpop.permute.xlu0 %931
    %v934 = vadd.f32 %v926, %v932
    %v935 = vxor.u32 %v934, 2147483648
    %v936 = vmul.f32 %v935, 1.442695
    %v937 = vpow.pop %v936
    %v938 = vadd.f32 %v937, 1.0
    %v939 = vrcp.pop %v938
    %v940 = vmul.f32 1.0, %v939
    %942 = vrot.lane.b32.xlu0 %v928, 32
    %v943 = vpop.permute.xlu0 %942
    %v945 = vadd.f32 %v926, %v943
    %v946 = vxor.u32 %v945, 2147483648
    %v947 = vmul.f32 %v946, 1.442695
    %v948 = vpow.pop %v947
    %v949 = vadd.f32 %v948, 1.0
    %v950 = vrcp.pop %v949
    %v951 = vmul.f32 1.0, %v950
    %952 = vrot.lane.b32.xlu0 %v928, 96
    %v953 = vpop.permute.xlu0 %952
    %v955 = vmul.f32 %v940, %v953
    %957 = vrot.lane.b32.xlu0 %v955, 64
    %v958 = vpop.permute.xlu0 %957
    %v960 = vadd.f32 %v926, %v958
    %v961 = vtanh.pop %v960
    %v962 = vsub.f32 1.0, %v951
    %964 = vrot.lane.b32.xlu0 %v961, 96
    %v965 = vpop.permute.xlu0 %964
    %v967 = vmul.f32 %v962, %v965
    %v968 = vmul.f32 %v951, %v732
    %v969 = vadd.f32 %v967, %v968
    %v970 = vrot.slane %v850, 2
    %v972 = vsel %vm219, %v194, %v970
    %v974 = vrot.slane %v972, 6
    %v975 = vsel %vm232, %v974, 0
    %977 = vmatprep.subr.mxu0 %v203
    %978 = vmatpush1.msra.mxu0 %v202
    %979 = vmatprep.subr.mxu0 %v205
    %980 = vmatpush1.msra.mxu0 %v204
    %981 = vmatprep.subr.mxu0 %v207
    %982 = vmatpush1.msra.mxu0 %v206
    %983 = vmatprep.subr.mxu0 %v209
    %984 = vmatpush1.msra.mxu0 %v208
    %985 = vmatprep.subr.mxu0 %v211
    %986 = vmatpush1.msra.mxu0 %v210
    %987 = vmatprep.subr.mxu0 %v213
    %988 = vmatpush1.msra.mxu0 %v212
    %989 = vmatprep.subr.mxu0 %v215
    %990 = vmatpush1.msra.mxu0 %v214
    %991 = vmatprep.subr.mxu0 %v217
    %992 = vmatpush1.msra.mxu0 %v216
    %993 = vmatprep.subr.mxu0 0.0
    %994 = vmatpush1.msra.mxu0 0.0
    %995 = vmatprep.subr.mxu0 0.0
    %996 = vmatpush1.msra.mxu0 0.0
    %997 = vmatprep.subr.mxu0 0.0
    %998 = vmatpush1.msra.mxu0 0.0
    %999 = vmatprep.subr.mxu0 0.0
    %1000 = vmatpush1.msra.mxu0 0.0
    %1001 = vmatprep.subr.mxu0 0.0
    %1002 = vmatpush1.msra.mxu0 0.0
    %1003 = vmatprep.subr.mxu0 0.0
    %1004 = vmatpush1.msra.mxu0 0.0
    %1005 = vmatprep.subr.mxu0 0.0
    %1006 = vmatpush1.msra.mxu0 0.0
    %1007 = vmatprep.subr.mxu0 0.0
    %1008 = vmatpush1.msra.mxu0 0.0
    %1009 = vmatprep.subr.mxu0 0.0
    %1010 = vmatpush1.msra.mxu0 0.0
    %1011 = vmatprep.subr.mxu0 0.0
    %1012 = vmatpush1.msra.mxu0 0.0
    %1013 = vmatprep.subr.mxu0 0.0
    %1014 = vmatpush1.msra.mxu0 0.0
    %1015 = vmatprep.subr.mxu0 0.0
    %1016 = vmatpush1.msra.mxu0 0.0
    %1017 = vmatprep.subr.mxu0 0.0
    %1018 = vmatpush1.msra.mxu0 0.0
    %1019 = vmatprep.subr.mxu0 0.0
    %1020 = vmatpush1.msra.mxu0 0.0
    %1021 = vmatprep.subr.mxu0 0.0
    %1022 = vmatpush1.msra.mxu0 0.0
    %1023 = vmatprep.subr.mxu0 0.0
    %1024 = vmatpush1.msra.mxu0 0.0
    %1025 = vmatprep.subr.mxu0 0.0
    %1026 = vmatpush1.msra.mxu0 0.0
    %1027 = vmatprep.subr.mxu0 0.0
    %1028 = vmatpush1.msra.mxu0 0.0
    %1029 = vmatprep.subr.mxu0 0.0
    %1030 = vmatpush1.msra.mxu0 0.0
    %1031 = vmatprep.subr.mxu0 0.0
    %1032 = vmatpush1.msra.mxu0 0.0
    %1033 = vmatprep.subr.mxu0 0.0
    %1034 = vmatpush1.msra.mxu0 0.0
    %1035 = vmatprep.subr.mxu0 0.0
    %1036 = vmatpush1.msra.mxu0 0.0
    %1037 = vmatprep.subr.mxu0 0.0
    %1038 = vmatpush1.msra.mxu0 0.0
    %1039 = vmatprep.subr.mxu0 0.0
    %1040 = vmatpush1.msra.mxu0 0.0
    %1041 = vmatprep.mubr.f32.mxu0 0.0
    %1042 = vmatmul.mubr.f32.gmra.mrb[0].mxu0 %v975
    %v1043 = vpop.f32.mrb[0].mxu0
    %v1044 = vadd.f32 %v225, %v1043
    %v1045 = vpop.f32.mrb[0].mxu0
    %v1046 = vadd.f32 %v229, %v1045
    %1047 = vdwg.mxu0
    %1049 = vrot.lane.b32.xlu0 %v1044, 32
    %v1050 = vpop.permute.xlu0 %1049
    %v1052 = vadd.f32 %v1044, %v1050
    %v1053 = vxor.u32 %v1052, 2147483648
    %v1054 = vmul.f32 %v1053, 1.442695
    %v1055 = vpow.pop %v1054
    %v1056 = vadd.f32 %v1055, 1.0
    %v1057 = vrcp.pop %v1056
    %v1058 = vmul.f32 1.0, %v1057
    %1060 = vrot.lane.b32.xlu0 %v1046, 32
    %v1061 = vpop.permute.xlu0 %1060
    %v1063 = vadd.f32 %v1044, %v1061
    %v1064 = vxor.u32 %v1063, 2147483648
    %v1065 = vmul.f32 %v1064, 1.442695
    %v1066 = vpow.pop %v1065
    %v1067 = vadd.f32 %v1066, 1.0
    %v1068 = vrcp.pop %v1067
    %v1069 = vmul.f32 1.0, %v1068
    %1070 = vrot.lane.b32.xlu0 %v1046, 96
    %v1071 = vpop.permute.xlu0 %1070
    %v1073 = vmul.f32 %v1058, %v1071
    %1075 = vrot.lane.b32.xlu0 %v1073, 64
    %v1076 = vpop.permute.xlu0 %1075
    %v1078 = vadd.f32 %v1044, %v1076
    %v1079 = vtanh.pop %v1078
    %v1080 = vsub.f32 1.0, %v1069
    %1082 = vrot.lane.b32.xlu0 %v1079, 96
    %v1083 = vpop.permute.xlu0 %1082
    %v1085 = vmul.f32 %v1080, %v1083
    %v1086 = vmul.f32 %v1069, %v850
    %v1087 = vadd.f32 %v1085, %v1086
    %1089 = vrot.lane.b32.xlu0 %v1087, 96
    %v1090 = vpop.permute.xlu0 %1089
    %v1092 = vsel %vm219, %v1090, %v969
    %v1094 = vsel %vm232, %v1092, 0
    %1096 = vmatprep.subr.mxu0 %v349
    %1097 = vmatpush1.msra.mxu0 %v348
    %1098 = vmatprep.subr.mxu0 %v351
    %1099 = vmatpush1.msra.mxu0 %v350
    %1100 = vmatprep.subr.mxu0 %v353
    %1101 = vmatpush1.msra.mxu0 %v352
    %1102 = vmatprep.subr.mxu0 %v355
    %1103 = vmatpush1.msra.mxu0 %v354
    %1104 = vmatprep.subr.mxu0 %v357
    %1105 = vmatpush1.msra.mxu0 %v356
    %1106 = vmatprep.subr.mxu0 %v359
    %1107 = vmatpush1.msra.mxu0 %v358
    %1108 = vmatprep.subr.mxu0 %v361
    %1109 = vmatpush1.msra.mxu0 %v360
    %1110 = vmatprep.subr.mxu0 %v363
    %1111 = vmatpush1.msra.mxu0 %v362
    %1112 = vmatprep.subr.mxu0 0.0
    %1113 = vmatpush1.msra.mxu0 0.0
    %1114 = vmatprep.subr.mxu0 0.0
    %1115 = vmatpush1.msra.mxu0 0.0
    %1116 = vmatprep.subr.mxu0 0.0
    %1117 = vmatpush1.msra.mxu0 0.0
    %1118 = vmatprep.subr.mxu0 0.0
    %1119 = vmatpush1.msra.mxu0 0.0
    %1120 = vmatprep.subr.mxu0 0.0
    %1121 = vmatpush1.msra.mxu0 0.0
    %1122 = vmatprep.subr.mxu0 0.0
    %1123 = vmatpush1.msra.mxu0 0.0
    %1124 = vmatprep.subr.mxu0 0.0
    %1125 = vmatpush1.msra.mxu0 0.0
    %1126 = vmatprep.subr.mxu0 0.0
    %1127 = vmatpush1.msra.mxu0 0.0
    %1128 = vmatprep.subr.mxu0 0.0
    %1129 = vmatpush1.msra.mxu0 0.0
    %1130 = vmatprep.subr.mxu0 0.0
    %1131 = vmatpush1.msra.mxu0 0.0
    %1132 = vmatprep.subr.mxu0 0.0
    %1133 = vmatpush1.msra.mxu0 0.0
    %1134 = vmatprep.subr.mxu0 0.0
    %1135 = vmatpush1.msra.mxu0 0.0
    %1136 = vmatprep.subr.mxu0 0.0
    %1137 = vmatpush1.msra.mxu0 0.0
    %1138 = vmatprep.subr.mxu0 0.0
    %1139 = vmatpush1.msra.mxu0 0.0
    %1140 = vmatprep.subr.mxu0 0.0
    %1141 = vmatpush1.msra.mxu0 0.0
    %1142 = vmatprep.subr.mxu0 0.0
    %1143 = vmatpush1.msra.mxu0 0.0
    %1144 = vmatprep.subr.mxu0 0.0
    %1145 = vmatpush1.msra.mxu0 0.0
    %1146 = vmatprep.subr.mxu0 0.0
    %1147 = vmatpush1.msra.mxu0 0.0
    %1148 = vmatprep.subr.mxu0 0.0
    %1149 = vmatpush1.msra.mxu0 0.0
    %1150 = vmatprep.subr.mxu0 0.0
    %1151 = vmatpush1.msra.mxu0 0.0
    %1152 = vmatprep.subr.mxu0 0.0
    %1153 = vmatpush1.msra.mxu0 0.0
    %1154 = vmatprep.subr.mxu0 0.0
    %1155 = vmatpush1.msra.mxu0 0.0
    %1156 = vmatprep.subr.mxu0 0.0
    %1157 = vmatpush1.msra.mxu0 0.0
    %1158 = vmatprep.subr.mxu0 0.0
    %1159 = vmatpush1.msra.mxu0 0.0
    %1160 = vmatprep.mubr.f32.mxu0 0.0
    %1161 = vmatmul.mubr.f32.gmra.mrb[0].mxu0 %v1094
    %v1162 = vpop.f32.mrb[0].mxu0
    %v1163 = vadd.f32 %v375, %v1162
    %v1164 = vpop.f32.mrb[0].mxu0
    %v1165 = vadd.f32 %v379, %v1164
    %1166 = vdwg.mxu0
    %1168 = vrot.lane.b32.xlu0 %v1163, 32
    %v1169 = vpop.permute.xlu0 %1168
    %v1171 = vadd.f32 %v1163, %v1169
    %v1172 = vxor.u32 %v1171, 2147483648
    %v1173 = vmul.f32 %v1172, 1.442695
    %v1174 = vpow.pop %v1173
    %v1175 = vadd.f32 %v1174, 1.0
    %v1176 = vrcp.pop %v1175
    %v1177 = vmul.f32 1.0, %v1176
    %1179 = vrot.lane.b32.xlu0 %v1165, 32
    %v1180 = vpop.permute.xlu0 %1179
    %v1182 = vadd.f32 %v1163, %v1180
    %v1183 = vxor.u32 %v1182, 2147483648
    %v1184 = vmul.f32 %v1183, 1.442695
    %v1185 = vpow.pop %v1184
    %v1186 = vadd.f32 %v1185, 1.0
    %v1187 = vrcp.pop %v1186
    %v1188 = vmul.f32 1.0, %v1187
    %1189 = vrot.lane.b32.xlu0 %v1165, 96
    %v1190 = vpop.permute.xlu0 %1189
    %v1192 = vmul.f32 %v1177, %v1190
    %1194 = vrot.lane.b32.xlu0 %v1192, 64
    %v1195 = vpop.permute.xlu0 %1194
    %v1197 = vadd.f32 %v1163, %v1195
    %v1198 = vtanh.pop %v1197
    %v1199 = vsub.f32 1.0, %v1188
    %1201 = vrot.lane.b32.xlu0 %v1198, 96
    %v1202 = vpop.permute.xlu0 %1201
    %v1204 = vmul.f32 %v1199, %v1202
    %v1205 = vmul.f32 %v1188, %v969
    %v1206 = vadd.f32 %v1204, %v1205
    %v1207 = vsel %vm219, %v199, %v1087
    %v1209 = vsel %vm232, %v1207, 0
    %1211 = vmatprep.subr.mxu0 %v203
    %1212 = vmatpush1.msra.mxu0 %v202
    %1213 = vmatprep.subr.mxu0 %v205
    %1214 = vmatpush1.msra.mxu0 %v204
    %1215 = vmatprep.subr.mxu0 %v207
    %1216 = vmatpush1.msra.mxu0 %v206
    %1217 = vmatprep.subr.mxu0 %v209
    %1218 = vmatpush1.msra.mxu0 %v208
    %1219 = vmatprep.subr.mxu0 %v211
    %1220 = vmatpush1.msra.mxu0 %v210
    %1221 = vmatprep.subr.mxu0 %v213
    %1222 = vmatpush1.msra.mxu0 %v212
    %1223 = vmatprep.subr.mxu0 %v215
    %1224 = vmatpush1.msra.mxu0 %v214
    %1225 = vmatprep.subr.mxu0 %v217
    %1226 = vmatpush1.msra.mxu0 %v216
    %1227 = vmatprep.subr.mxu0 0.0
    %1228 = vmatpush1.msra.mxu0 0.0
    %1229 = vmatprep.subr.mxu0 0.0
    %1230 = vmatpush1.msra.mxu0 0.0
    %1231 = vmatprep.subr.mxu0 0.0
    %1232 = vmatpush1.msra.mxu0 0.0
    %1233 = vmatprep.subr.mxu0 0.0
    %1234 = vmatpush1.msra.mxu0 0.0
    %1235 = vmatprep.subr.mxu0 0.0
    %1236 = vmatpush1.msra.mxu0 0.0
    %1237 = vmatprep.subr.mxu0 0.0
    %1238 = vmatpush1.msra.mxu0 0.0
    %1239 = vmatprep.subr.mxu0 0.0
    %1240 = vmatpush1.msra.mxu0 0.0
    %1241 = vmatprep.subr.mxu0 0.0
    %1242 = vmatpush1.msra.mxu0 0.0
    %1243 = vmatprep.subr.mxu0 0.0
    %1244 = vmatpush1.msra.mxu0 0.0
    %1245 = vmatprep.subr.mxu0 0.0
    %1246 = vmatpush1.msra.mxu0 0.0
    %1247 = vmatprep.subr.mxu0 0.0
    %1248 = vmatpush1.msra.mxu0 0.0
    %1249 = vmatprep.subr.mxu0 0.0
    %1250 = vmatpush1.msra.mxu0 0.0
    %1251 = vmatprep.subr.mxu0 0.0
    %1252 = vmatpush1.msra.mxu0 0.0
    %1253 = vmatprep.subr.mxu0 0.0
    %1254 = vmatpush1.msra.mxu0 0.0
    %1255 = vmatprep.subr.mxu0 0.0
    %1256 = vmatpush1.msra.mxu0 0.0
    %1257 = vmatprep.subr.mxu0 0.0
    %1258 = vmatpush1.msra.mxu0 0.0
    %1259 = vmatprep.subr.mxu0 0.0
    %1260 = vmatpush1.msra.mxu0 0.0
    %1261 = vmatprep.subr.mxu0 0.0
    %1262 = vmatpush1.msra.mxu0 0.0
    %1263 = vmatprep.subr.mxu0 0.0
    %1264 = vmatpush1.msra.mxu0 0.0
    %1265 = vmatprep.subr.mxu0 0.0
    %1266 = vmatpush1.msra.mxu0 0.0
    %1267 = vmatprep.subr.mxu0 0.0
    %1268 = vmatpush1.msra.mxu0 0.0
    %1269 = vmatprep.subr.mxu0 0.0
    %1270 = vmatpush1.msra.mxu0 0.0
    %1271 = vmatprep.subr.mxu0 0.0
    %1272 = vmatpush1.msra.mxu0 0.0
    %1273 = vmatprep.subr.mxu0 0.0
    %1274 = vmatpush1.msra.mxu0 0.0
    %1275 = vmatprep.mubr.f32.mxu0 0.0
    %1276 = vmatmul.mubr.f32.gmra.mrb[0].mxu0 %v1209
    %v1277 = vpop.f32.mrb[0].mxu0
    %v1278 = vadd.f32 %v225, %v1277
    %v1279 = vpop.f32.mrb[0].mxu0
    %v1280 = vadd.f32 %v229, %v1279
    %1281 = vdwg.mxu0
    %1283 = vrot.lane.b32.xlu0 %v1278, 32
    %v1284 = vpop.permute.xlu0 %1283
    %v1286 = vadd.f32 %v1278, %v1284
    %v1287 = vxor.u32 %v1286, 2147483648
    %v1288 = vmul.f32 %v1287, 1.442695
    %v1289 = vpow.pop %v1288
    %v1290 = vadd.f32 %v1289, 1.0
    %v1291 = vrcp.pop %v1290
    %v1292 = vmul.f32 1.0, %v1291
    %1294 = vrot.lane.b32.xlu0 %v1280, 32
    %v1295 = vpop.permute.xlu0 %1294
    %v1297 = vadd.f32 %v1278, %v1295
    %v1298 = vxor.u32 %v1297, 2147483648
    %v1299 = vmul.f32 %v1298, 1.442695
    %v1300 = vpow.pop %v1299
    %v1301 = vadd.f32 %v1300, 1.0
    %v1302 = vrcp.pop %v1301
    %v1303 = vmul.f32 1.0, %v1302
    %1304 = vrot.lane.b32.xlu0 %v1280, 96
    %v1305 = vpop.permute.xlu0 %1304
    %v1307 = vmul.f32 %v1292, %v1305
    %1309 = vrot.lane.b32.xlu0 %v1307, 64
    %v1310 = vpop.permute.xlu0 %1309
    %v1312 = vadd.f32 %v1278, %v1310
    %v1313 = vtanh.pop %v1312
    %v1314 = vsub.f32 1.0, %v1303
    %1316 = vrot.lane.b32.xlu0 %v1313, 96
    %v1317 = vpop.permute.xlu0 %1316
    %v1319 = vmul.f32 %v1314, %v1317
    %v1320 = vmul.f32 %v1303, %v1087
    %v1321 = vadd.f32 %v1319, %v1320
    %1323 = vrot.lane.b32.xlu0 %v1321, 96
    %v1324 = vpop.permute.xlu0 %1323
    %v1326 = vsel %vm219, %v1324, %v1206
    %v1328 = vsel %vm232, %v1326, 0
    %1330 = vmatprep.subr.mxu0 %v349
    %1331 = vmatpush1.msra.mxu0 %v348
    %1332 = vmatprep.subr.mxu0 %v351
    %1333 = vmatpush1.msra.mxu0 %v350
    %1334 = vmatprep.subr.mxu0 %v353
    %1335 = vmatpush1.msra.mxu0 %v352
    %1336 = vmatprep.subr.mxu0 %v355
    %1337 = vmatpush1.msra.mxu0 %v354
    %1338 = vmatprep.subr.mxu0 %v357
    %1339 = vmatpush1.msra.mxu0 %v356
    %1340 = vmatprep.subr.mxu0 %v359
    %1341 = vmatpush1.msra.mxu0 %v358
    %1342 = vmatprep.subr.mxu0 %v361
    %1343 = vmatpush1.msra.mxu0 %v360
    %1344 = vmatprep.subr.mxu0 %v363
    %1345 = vmatpush1.msra.mxu0 %v362
    %1346 = vmatprep.subr.mxu0 0.0
    %1347 = vmatpush1.msra.mxu0 0.0
    %1348 = vmatprep.subr.mxu0 0.0
    %1349 = vmatpush1.msra.mxu0 0.0
    %1350 = vmatprep.subr.mxu0 0.0
    %1351 = vmatpush1.msra.mxu0 0.0
    %1352 = vmatprep.subr.mxu0 0.0
    %1353 = vmatpush1.msra.mxu0 0.0
    %1354 = vmatprep.subr.mxu0 0.0
    %1355 = vmatpush1.msra.mxu0 0.0
    %1356 = vmatprep.subr.mxu0 0.0
    %1357 = vmatpush1.msra.mxu0 0.0
    %1358 = vmatprep.subr.mxu0 0.0
    %1359 = vmatpush1.msra.mxu0 0.0
    %1360 = vmatprep.subr.mxu0 0.0
    %1361 = vmatpush1.msra.mxu0 0.0
    %1362 = vmatprep.subr.mxu0 0.0
    %1363 = vmatpush1.msra.mxu0 0.0
    %1364 = vmatprep.subr.mxu0 0.0
    %1365 = vmatpush1.msra.mxu0 0.0
    %1366 = vmatprep.subr.mxu0 0.0
    %1367 = vmatpush1.msra.mxu0 0.0
    %1368 = vmatprep.subr.mxu0 0.0
    %1369 = vmatpush1.msra.mxu0 0.0
    %1370 = vmatprep.subr.mxu0 0.0
    %1371 = vmatpush1.msra.mxu0 0.0
    %1372 = vmatprep.subr.mxu0 0.0
    %1373 = vmatpush1.msra.mxu0 0.0
    %1374 = vmatprep.subr.mxu0 0.0
    %1375 = vmatpush1.msra.mxu0 0.0
    %1376 = vmatprep.subr.mxu0 0.0
    %1377 = vmatpush1.msra.mxu0 0.0
    %1378 = vmatprep.subr.mxu0 0.0
    %1379 = vmatpush1.msra.mxu0 0.0
    %1380 = vmatprep.subr.mxu0 0.0
    %1381 = vmatpush1.msra.mxu0 0.0
    %1382 = vmatprep.subr.mxu0 0.0
    %1383 = vmatpush1.msra.mxu0 0.0
    %1384 = vmatprep.subr.mxu0 0.0
    %1385 = vmatpush1.msra.mxu0 0.0
    %1386 = vmatprep.subr.mxu0 0.0
    %1387 = vmatpush1.msra.mxu0 0.0
    %1388 = vmatprep.subr.mxu0 0.0
    %1389 = vmatpush1.msra.mxu0 0.0
    %1390 = vmatprep.subr.mxu0 0.0
    %1391 = vmatpush1.msra.mxu0 0.0
    %1392 = vmatprep.subr.mxu0 0.0
    %1393 = vmatpush1.msra.mxu0 0.0
    %1394 = vmatprep.mubr.f32.mxu0 0.0
    %1395 = vmatmul.mubr.f32.gmra.mrb[0].mxu0 %v1328
    %v1396 = vpop.f32.mrb[0].mxu0
    %v1397 = vadd.f32 %v375, %v1396
    %v1398 = vpop.f32.mrb[0].mxu0
    %v1399 = vadd.f32 %v379, %v1398
    %1400 = vdwg.mxu0
    %1402 = vrot.lane.b32.xlu0 %v1397, 32
    %v1403 = vpop.permute.xlu0 %1402
    %v1405 = vadd.f32 %v1397, %v1403
    %v1406 = vxor.u32 %v1405, 2147483648
    %v1407 = vmul.f32 %v1406, 1.442695
    %v1408 = vpow.pop %v1407
    %v1409 = vadd.f32 %v1408, 1.0
    %v1410 = vrcp.pop %v1409
    %v1411 = vmul.f32 1.0, %v1410
    %1413 = vrot.lane.b32.xlu0 %v1399, 32
    %v1414 = vpop.permute.xlu0 %1413
    %v1416 = vadd.f32 %v1397, %v1414
    %v1417 = vxor.u32 %v1416, 2147483648
    %v1418 = vmul.f32 %v1417, 1.442695
    %v1419 = vpow.pop %v1418
    %v1420 = vadd.f32 %v1419, 1.0
    %v1421 = vrcp.pop %v1420
    %v1422 = vmul.f32 1.0, %v1421
    %1423 = vrot.lane.b32.xlu0 %v1399, 96
    %v1424 = vpop.permute.xlu0 %1423
    %v1426 = vmul.f32 %v1411, %v1424
    %1428 = vrot.lane.b32.xlu0 %v1426, 64
    %v1429 = vpop.permute.xlu0 %1428
    %v1431 = vadd.f32 %v1397, %v1429
    %v1432 = vtanh.pop %v1431
    %v1433 = vsub.f32 1.0, %v1422
    %1435 = vrot.lane.b32.xlu0 %v1432, 96
    %v1436 = vpop.permute.xlu0 %1435
    %v1438 = vmul.f32 %v1433, %v1436
    %v1439 = vmul.f32 %v1422, %v1206
    %v1440 = vadd.f32 %v1438, %v1439
    %v1441 = vrot.slane %v1321, 6
    %v1443 = vsel %vm219, %v199, %v1441
    %v1445 = vrot.slane %v1443, 2
    %v1446 = vsel %vm232, %v1445, 0
    %1448 = vmatprep.subr.mxu0 %v203
    %1449 = vmatpush1.msra.mxu0 %v202
    %1450 = vmatprep.subr.mxu0 %v205
    %1451 = vmatpush1.msra.mxu0 %v204
    %1452 = vmatprep.subr.mxu0 %v207
    %1453 = vmatpush1.msra.mxu0 %v206
    %1454 = vmatprep.subr.mxu0 %v209
    %1455 = vmatpush1.msra.mxu0 %v208
    %1456 = vmatprep.subr.mxu0 %v211
    %1457 = vmatpush1.msra.mxu0 %v210
    %1458 = vmatprep.subr.mxu0 %v213
    %1459 = vmatpush1.msra.mxu0 %v212
    %1460 = vmatprep.subr.mxu0 %v215
    %1461 = vmatpush1.msra.mxu0 %v214
    %1462 = vmatprep.subr.mxu0 %v217
    %1463 = vmatpush1.msra.mxu0 %v216
    %1464 = vmatprep.subr.mxu0 0.0
    %1465 = vmatpush1.msra.mxu0 0.0
    %1466 = vmatprep.subr.mxu0 0.0
    %1467 = vmatpush1.msra.mxu0 0.0
    %1468 = vmatprep.subr.mxu0 0.0
    %1469 = vmatpush1.msra.mxu0 0.0
    %1470 = vmatprep.subr.mxu0 0.0
    %1471 = vmatpush1.msra.mxu0 0.0
    %1472 = vmatprep.subr.mxu0 0.0
    %1473 = vmatpush1.msra.mxu0 0.0
    %1474 = vmatprep.subr.mxu0 0.0
    %1475 = vmatpush1.msra.mxu0 0.0
    %1476 = vmatprep.subr.mxu0 0.0
    %1477 = vmatpush1.msra.mxu0 0.0
    %1478 = vmatprep.subr.mxu0 0.0
    %1479 = vmatpush1.msra.mxu0 0.0
    %1480 = vmatprep.subr.mxu0 0.0
    %1481 = vmatpush1.msra.mxu0 0.0
    %1482 = vmatprep.subr.mxu0 0.0
    %1483 = vmatpush1.msra.mxu0 0.0
    %1484 = vmatprep.subr.mxu0 0.0
    %1485 = vmatpush1.msra.mxu0 0.0
    %1486 = vmatprep.subr.mxu0 0.0
    %1487 = vmatpush1.msra.mxu0 0.0
    %1488 = vmatprep.subr.mxu0 0.0
    %1489 = vmatpush1.msra.mxu0 0.0
    %1490 = vmatprep.subr.mxu0 0.0
    %1491 = vmatpush1.msra.mxu0 0.0
    %1492 = vmatprep.subr.mxu0 0.0
    %1493 = vmatpush1.msra.mxu0 0.0
    %1494 = vmatprep.subr.mxu0 0.0
    %1495 = vmatpush1.msra.mxu0 0.0
    %1496 = vmatprep.subr.mxu0 0.0
    %1497 = vmatpush1.msra.mxu0 0.0
    %1498 = vmatprep.subr.mxu0 0.0
    %1499 = vmatpush1.msra.mxu0 0.0
    %1500 = vmatprep.subr.mxu0 0.0
    %1501 = vmatpush1.msra.mxu0 0.0
    %1502 = vmatprep.subr.mxu0 0.0
    %1503 = vmatpush1.msra.mxu0 0.0
    %1504 = vmatprep.subr.mxu0 0.0
    %1505 = vmatpush1.msra.mxu0 0.0
    %1506 = vmatprep.subr.mxu0 0.0
    %1507 = vmatpush1.msra.mxu0 0.0
    %1508 = vmatprep.subr.mxu0 0.0
    %1509 = vmatpush1.msra.mxu0 0.0
    %1510 = vmatprep.subr.mxu0 0.0
    %1511 = vmatpush1.msra.mxu0 0.0
    %1512 = vmatprep.mubr.f32.mxu0 0.0
    %1513 = vmatmul.mubr.f32.gmra.mrb[0].mxu0 %v1446
    %v1514 = vpop.f32.mrb[0].mxu0
    %v1515 = vadd.f32 %v225, %v1514
    %v1516 = vpop.f32.mrb[0].mxu0
    %v1517 = vadd.f32 %v229, %v1516
    %1518 = vdwg.mxu0
    %1520 = vrot.lane.b32.xlu0 %v1515, 32
    %v1521 = vpop.permute.xlu0 %1520
    %v1523 = vadd.f32 %v1515, %v1521
    %v1524 = vxor.u32 %v1523, 2147483648
    %v1525 = vmul.f32 %v1524, 1.442695
    %v1526 = vpow.pop %v1525
    %v1527 = vadd.f32 %v1526, 1.0
    %v1528 = vrcp.pop %v1527
    %v1529 = vmul.f32 1.0, %v1528
    %1531 = vrot.lane.b32.xlu0 %v1517, 32
    %v1532 = vpop.permute.xlu0 %1531
    %v1534 = vadd.f32 %v1515, %v1532
    %v1535 = vxor.u32 %v1534, 2147483648
    %v1536 = vmul.f32 %v1535, 1.442695
    %v1537 = vpow.pop %v1536
    %v1538 = vadd.f32 %v1537, 1.0
    %v1539 = vrcp.pop %v1538
    %v1540 = vmul.f32 1.0, %v1539
    %1541 = vrot.lane.b32.xlu0 %v1517, 96
    %v1542 = vpop.permute.xlu0 %1541
    %v1544 = vmul.f32 %v1529, %v1542
    %1546 = vrot.lane.b32.xlu0 %v1544, 64
    %v1547 = vpop.permute.xlu0 %1546
    %v1549 = vadd.f32 %v1515, %v1547
    %v1550 = vtanh.pop %v1549
    %v1551 = vsub.f32 1.0, %v1540
    %1553 = vrot.lane.b32.xlu0 %v1550, 96
    %v1554 = vpop.permute.xlu0 %1553
    %v1556 = vmul.f32 %v1551, %v1554
    %v1557 = vmul.f32 %v1540, %v1321
    %v1558 = vadd.f32 %v1556, %v1557
    %1560 = vrot.lane.b32.xlu0 %v1558, 96
    %v1561 = vpop.permute.xlu0 %1560
    %v1563 = vsel %vm219, %v1561, %v1440
    %v1565 = vsel %vm232, %v1563, 0
    %1567 = vmatprep.subr.mxu0 %v349
    %1568 = vmatpush1.msra.mxu0 %v348
    %1569 = vmatprep.subr.mxu0 %v351
    %1570 = vmatpush1.msra.mxu0 %v350
    %1571 = vmatprep.subr.mxu0 %v353
    %1572 = vmatpush1.msra.mxu0 %v352
    %1573 = vmatprep.subr.mxu0 %v355
    %1574 = vmatpush1.msra.mxu0 %v354
    %1575 = vmatprep.subr.mxu0 %v357
    %1576 = vmatpush1.msra.mxu0 %v356
    %1577 = vmatprep.subr.mxu0 %v359
    %1578 = vmatpush1.msra.mxu0 %v358
    %1579 = vmatprep.subr.mxu0 %v361
    %1580 = vmatpush1.msra.mxu0 %v360
    %1581 = vmatprep.subr.mxu0 %v363
    %1582 = vmatpush1.msra.mxu0 %v362
    %1583 = vmatprep.subr.mxu0 0.0
    %1584 = vmatpush1.msra.mxu0 0.0
    %1585 = vmatprep.subr.mxu0 0.0
    %1586 = vmatpush1.msra.mxu0 0.0
    %1587 = vmatprep.subr.mxu0 0.0
    %1588 = vmatpush1.msra.mxu0 0.0
    %1589 = vmatprep.subr.mxu0 0.0
    %1590 = vmatpush1.msra.mxu0 0.0
    %1591 = vmatprep.subr.mxu0 0.0
    %1592 = vmatpush1.msra.mxu0 0.0
    %1593 = vmatprep.subr.mxu0 0.0
    %1594 = vmatpush1.msra.mxu0 0.0
    %1595 = vmatprep.subr.mxu0 0.0
    %1596 = vmatpush1.msra.mxu0 0.0
    %1597 = vmatprep.subr.mxu0 0.0
    %1598 = vmatpush1.msra.mxu0 0.0
    %1599 = vmatprep.subr.mxu0 0.0
    %1600 = vmatpush1.msra.mxu0 0.0
    %1601 = vmatprep.subr.mxu0 0.0
    %1602 = vmatpush1.msra.mxu0 0.0
    %1603 = vmatprep.subr.mxu0 0.0
    %1604 = vmatpush1.msra.mxu0 0.0
    %1605 = vmatprep.subr.mxu0 0.0
    %1606 = vmatpush1.msra.mxu0 0.0
    %1607 = vmatprep.subr.mxu0 0.0
    %1608 = vmatpush1.msra.mxu0 0.0
    %1609 = vmatprep.subr.mxu0 0.0
    %1610 = vmatpush1.msra.mxu0 0.0
    %1611 = vmatprep.subr.mxu0 0.0
    %1612 = vmatpush1.msra.mxu0 0.0
    %1613 = vmatprep.subr.mxu0 0.0
    %1614 = vmatpush1.msra.mxu0 0.0
    %1615 = vmatprep.subr.mxu0 0.0
    %1616 = vmatpush1.msra.mxu0 0.0
    %1617 = vmatprep.subr.mxu0 0.0
    %1618 = vmatpush1.msra.mxu0 0.0
    %1619 = vmatprep.subr.mxu0 0.0
    %1620 = vmatpush1.msra.mxu0 0.0
    %1621 = vmatprep.subr.mxu0 0.0
    %1622 = vmatpush1.msra.mxu0 0.0
    %1623 = vmatprep.subr.mxu0 0.0
    %1624 = vmatpush1.msra.mxu0 0.0
    %1625 = vmatprep.subr.mxu0 0.0
    %1626 = vmatpush1.msra.mxu0 0.0
    %1627 = vmatprep.subr.mxu0 0.0
    %1628 = vmatpush1.msra.mxu0 0.0
    %1629 = vmatprep.subr.mxu0 0.0
    %1630 = vmatpush1.msra.mxu0 0.0
    %1631 = vmatprep.mubr.f32.mxu0 0.0
    %1632 = vmatmul.mubr.f32.gmra.mrb[0].mxu0 %v1565
    %v1633 = vpop.f32.mrb[0].mxu0
    %v1634 = vadd.f32 %v375, %v1633
    %v1635 = vpop.f32.mrb[0].mxu0
    %v1636 = vadd.f32 %v379, %v1635
    %1637 = vdwg.mxu0
    %1639 = vrot.lane.b32.xlu0 %v1634, 32
    %v1640 = vpop.permute.xlu0 %1639
    %v1642 = vadd.f32 %v1634, %v1640
    %v1643 = vxor.u32 %v1642, 2147483648
    %v1644 = vmul.f32 %v1643, 1.442695
    %v1645 = vpow.pop %v1644
    %v1646 = vadd.f32 %v1645, 1.0
    %v1647 = vrcp.pop %v1646
    %v1648 = vmul.f32 1.0, %v1647
    %1650 = vrot.lane.b32.xlu0 %v1636, 32
    %v1651 = vpop.permute.xlu0 %1650
    %v1653 = vadd.f32 %v1634, %v1651
    %v1654 = vxor.u32 %v1653, 2147483648
    %v1655 = vmul.f32 %v1654, 1.442695
    %v1656 = vpow.pop %v1655
    %v1657 = vadd.f32 %v1656, 1.0
    %v1658 = vrcp.pop %v1657
    %v1659 = vmul.f32 1.0, %v1658
    %1660 = vrot.lane.b32.xlu0 %v1636, 96
    %v1661 = vpop.permute.xlu0 %1660
    %v1663 = vmul.f32 %v1648, %v1661
    %1665 = vrot.lane.b32.xlu0 %v1663, 64
    %v1666 = vpop.permute.xlu0 %1665
    %v1668 = vadd.f32 %v1634, %v1666
    %v1669 = vtanh.pop %v1668
    %v1670 = vsub.f32 1.0, %v1659
    %1672 = vrot.lane.b32.xlu0 %v1669, 96
    %v1673 = vpop.permute.xlu0 %1672
    %v1675 = vmul.f32 %v1670, %v1673
    %v1676 = vmul.f32 %v1659, %v1440
    %v1677 = vadd.f32 %v1675, %v1676
    %v1678 = vrot.slane %v1558, 4
    %v1680 = vsel %vm219, %v199, %v1678
    %v1682 = vrot.slane %v1680, 4
    %v1683 = vsel %vm232, %v1682, 0
    %1685 = vmatprep.subr.mxu0 %v203
    %1686 = vmatpush1.msra.mxu0 %v202
    %1687 = vmatprep.subr.mxu0 %v205
    %1688 = vmatpush1.msra.mxu0 %v204
    %1689 = vmatprep.subr.mxu0 %v207
    %1690 = vmatpush1.msra.mxu0 %v206
    %1691 = vmatprep.subr.mxu0 %v209
    %1692 = vmatpush1.msra.mxu0 %v208
    %1693 = vmatprep.subr.mxu0 %v211
    %1694 = vmatpush1.msra.mxu0 %v210
    %1695 = vmatprep.subr.mxu0 %v213
    %1696 = vmatpush1.msra.mxu0 %v212
    %1697 = vmatprep.subr.mxu0 %v215
    %1698 = vmatpush1.msra.mxu0 %v214
    %1699 = vmatprep.subr.mxu0 %v217
    %1700 = vmatpush1.msra.mxu0 %v216
    %1701 = vmatprep.subr.mxu0 0.0
    %1702 = vmatpush1.msra.mxu0 0.0
    %1703 = vmatprep.subr.mxu0 0.0
    %1704 = vmatpush1.msra.mxu0 0.0
    %1705 = vmatprep.subr.mxu0 0.0
    %1706 = vmatpush1.msra.mxu0 0.0
    %1707 = vmatprep.subr.mxu0 0.0
    %1708 = vmatpush1.msra.mxu0 0.0
    %1709 = vmatprep.subr.mxu0 0.0
    %1710 = vmatpush1.msra.mxu0 0.0
    %1711 = vmatprep.subr.mxu0 0.0
    %1712 = vmatpush1.msra.mxu0 0.0
    %1713 = vmatprep.subr.mxu0 0.0
    %1714 = vmatpush1.msra.mxu0 0.0
    %1715 = vmatprep.subr.mxu0 0.0
    %1716 = vmatpush1.msra.mxu0 0.0
    %1717 = vmatprep.subr.mxu0 0.0
    %1718 = vmatpush1.msra.mxu0 0.0
    %1719 = vmatprep.subr.mxu0 0.0
    %1720 = vmatpush1.msra.mxu0 0.0
    %1721 = vmatprep.subr.mxu0 0.0
    %1722 = vmatpush1.msra.mxu0 0.0
    %1723 = vmatprep.subr.mxu0 0.0
    %1724 = vmatpush1.msra.mxu0 0.0
    %1725 = vmatprep.subr.mxu0 0.0
    %1726 = vmatpush1.msra.mxu0 0.0
    %1727 = vmatprep.subr.mxu0 0.0
    %1728 = vmatpush1.msra.mxu0 0.0
    %1729 = vmatprep.subr.mxu0 0.0
    %1730 = vmatpush1.msra.mxu0 0.0
    %1731 = vmatprep.subr.mxu0 0.0
    %1732 = vmatpush1.msra.mxu0 0.0
    %1733 = vmatprep.subr.mxu0 0.0
    %1734 = vmatpush1.msra.mxu0 0.0
    %1735 = vmatprep.subr.mxu0 0.0
    %1736 = vmatpush1.msra.mxu0 0.0
    %1737 = vmatprep.subr.mxu0 0.0
    %1738 = vmatpush1.msra.mxu0 0.0
    %1739 = vmatprep.subr.mxu0 0.0
    %1740 = vmatpush1.msra.mxu0 0.0
    %1741 = vmatprep.subr.mxu0 0.0
    %1742 = vmatpush1.msra.mxu0 0.0
    %1743 = vmatprep.subr.mxu0 0.0
    %1744 = vmatpush1.msra.mxu0 0.0
    %1745 = vmatprep.subr.mxu0 0.0
    %1746 = vmatpush1.msra.mxu0 0.0
    %1747 = vmatprep.subr.mxu0 0.0
    %1748 = vmatpush1.msra.mxu0 0.0
    %1749 = vmatprep.mubr.f32.mxu0 0.0
    %1750 = vmatmul.mubr.f32.gmra.mrb[0].mxu0 %v1683
    %v1751 = vpop.f32.mrb[0].mxu0
    %v1752 = vadd.f32 %v225, %v1751
    %v1753 = vpop.f32.mrb[0].mxu0
    %v1754 = vadd.f32 %v229, %v1753
    %1755 = vdwg.mxu0
    %1757 = vrot.lane.b32.xlu0 %v1752, 32
    %v1758 = vpop.permute.xlu0 %1757
    %v1760 = vadd.f32 %v1752, %v1758
    %v1761 = vxor.u32 %v1760, 2147483648
    %v1762 = vmul.f32 %v1761, 1.442695
    %v1763 = vpow.pop %v1762
    %v1764 = vadd.f32 %v1763, 1.0
    %v1765 = vrcp.pop %v1764
    %v1766 = vmul.f32 1.0, %v1765
    %1768 = vrot.lane.b32.xlu0 %v1754, 32
    %v1769 = vpop.permute.xlu0 %1768
    %v1771 = vadd.f32 %v1752, %v1769
    %v1772 = vxor.u32 %v1771, 2147483648
    %v1773 = vmul.f32 %v1772, 1.442695
    %v1774 = vpow.pop %v1773
    %v1775 = vadd.f32 %v1774, 1.0
    %v1776 = vrcp.pop %v1775
    %v1777 = vmul.f32 1.0, %v1776
    %1778 = vrot.lane.b32.xlu0 %v1754, 96
    %v1779 = vpop.permute.xlu0 %1778
    %v1781 = vmul.f32 %v1766, %v1779
    %1783 = vrot.lane.b32.xlu0 %v1781, 64
    %v1784 = vpop.permute.xlu0 %1783
    %v1786 = vadd.f32 %v1752, %v1784
    %v1787 = vtanh.pop %v1786
    %v1788 = vsub.f32 1.0, %v1777
    %1790 = vrot.lane.b32.xlu0 %v1787, 96
    %v1791 = vpop.permute.xlu0 %1790
    %v1793 = vmul.f32 %v1788, %v1791
    %v1794 = vmul.f32 %v1777, %v1558
    %v1795 = vadd.f32 %v1793, %v1794
    %1797 = vrot.lane.b32.xlu0 %v1795, 96
    %v1798 = vpop.permute.xlu0 %1797
    %v1800 = vsel %vm219, %v1798, %v1677
    %v1802 = vsel %vm232, %v1800, 0
    %1804 = vmatprep.subr.mxu0 %v349
    %1805 = vmatpush1.msra.mxu0 %v348
    %1806 = vmatprep.subr.mxu0 %v351
    %1807 = vmatpush1.msra.mxu0 %v350
    %1808 = vmatprep.subr.mxu0 %v353
    %1809 = vmatpush1.msra.mxu0 %v352
    %1810 = vmatprep.subr.mxu0 %v355
    %1811 = vmatpush1.msra.mxu0 %v354
    %1812 = vmatprep.subr.mxu0 %v357
    %1813 = vmatpush1.msra.mxu0 %v356
    %1814 = vmatprep.subr.mxu0 %v359
    %1815 = vmatpush1.msra.mxu0 %v358
    %1816 = vmatprep.subr.mxu0 %v361
    %1817 = vmatpush1.msra.mxu0 %v360
    %1818 = vmatprep.subr.mxu0 %v363
    %1819 = vmatpush1.msra.mxu0 %v362
    %1820 = vmatprep.subr.mxu0 0.0
    %1821 = vmatpush1.msra.mxu0 0.0
    %1822 = vmatprep.subr.mxu0 0.0
    %1823 = vmatpush1.msra.mxu0 0.0
    %1824 = vmatprep.subr.mxu0 0.0
    %1825 = vmatpush1.msra.mxu0 0.0
    %1826 = vmatprep.subr.mxu0 0.0
    %1827 = vmatpush1.msra.mxu0 0.0
    %1828 = vmatprep.subr.mxu0 0.0
    %1829 = vmatpush1.msra.mxu0 0.0
    %1830 = vmatprep.subr.mxu0 0.0
    %1831 = vmatpush1.msra.mxu0 0.0
    %1832 = vmatprep.subr.mxu0 0.0
    %1833 = vmatpush1.msra.mxu0 0.0
    %1834 = vmatprep.subr.mxu0 0.0
    %1835 = vmatpush1.msra.mxu0 0.0
    %1836 = vmatprep.subr.mxu0 0.0
    %1837 = vmatpush1.msra.mxu0 0.0
    %1838 = vmatprep.subr.mxu0 0.0
    %1839 = vmatpush1.msra.mxu0 0.0
    %1840 = vmatprep.subr.mxu0 0.0
    %1841 = vmatpush1.msra.mxu0 0.0
    %1842 = vmatprep.subr.mxu0 0.0
    %1843 = vmatpush1.msra.mxu0 0.0
    %1844 = vmatprep.subr.mxu0 0.0
    %1845 = vmatpush1.msra.mxu0 0.0
    %1846 = vmatprep.subr.mxu0 0.0
    %1847 = vmatpush1.msra.mxu0 0.0
    %1848 = vmatprep.subr.mxu0 0.0
    %1849 = vmatpush1.msra.mxu0 0.0
    %1850 = vmatprep.subr.mxu0 0.0
    %1851 = vmatpush1.msra.mxu0 0.0
    %1852 = vmatprep.subr.mxu0 0.0
    %1853 = vmatpush1.msra.mxu0 0.0
    %1854 = vmatprep.subr.mxu0 0.0
    %1855 = vmatpush1.msra.mxu0 0.0
    %1856 = vmatprep.subr.mxu0 0.0
    %1857 = vmatpush1.msra.mxu0 0.0
    %1858 = vmatprep.subr.mxu0 0.0
    %1859 = vmatpush1.msra.mxu0 0.0
    %1860 = vmatprep.subr.mxu0 0.0
    %1861 = vmatpush1.msra.mxu0 0.0
    %1862 = vmatprep.subr.mxu0 0.0
    %1863 = vmatpush1.msra.mxu0 0.0
    %1864 = vmatprep.subr.mxu0 0.0
    %1865 = vmatpush1.msra.mxu0 0.0
    %1866 = vmatprep.subr.mxu0 0.0
    %1867 = vmatpush1.msra.mxu0 0.0
    %1868 = vmatprep.mubr.f32.mxu0 0.0
    %1869 = vmatmul.mubr.f32.gmra.mrb[0].mxu0 %v1802
    %v1870 = vpop.f32.mrb[0].mxu0
    %v1871 = vadd.f32 %v375, %v1870
    %v1872 = vpop.f32.mrb[0].mxu0
    %v1873 = vadd.f32 %v379, %v1872
    %1874 = vdwg.mxu0
    %1876 = vrot.lane.b32.xlu0 %v1871, 32
    %v1877 = vpop.permute.xlu0 %1876
    %v1879 = vadd.f32 %v1871, %v1877
    %v1880 = vxor.u32 %v1879, 2147483648
    %v1881 = vmul.f32 %v1880, 1.442695
    %v1882 = vpow.pop %v1881
    %v1883 = vadd.f32 %v1882, 1.0
    %v1884 = vrcp.pop %v1883
    %v1885 = vmul.f32 1.0, %v1884
    %1887 = vrot.lane.b32.xlu0 %v1873, 32
    %v1888 = vpop.permute.xlu0 %1887
    %v1890 = vadd.f32 %v1871, %v1888
    %v1891 = vxor.u32 %v1890, 2147483648
    %v1892 = vmul.f32 %v1891, 1.442695
    %v1893 = vpow.pop %v1892
    %v1894 = vadd.f32 %v1893, 1.0
    %v1895 = vrcp.pop %v1894
    %v1896 = vmul.f32 1.0, %v1895
    %1897 = vrot.lane.b32.xlu0 %v1873, 96
    %v1898 = vpop.permute.xlu0 %1897
    %v1900 = vmul.f32 %v1885, %v1898
    %1902 = vrot.lane.b32.xlu0 %v1900, 64
    %v1903 = vpop.permute.xlu0 %1902
    %v1905 = vadd.f32 %v1871, %v1903
    %v1906 = vtanh.pop %v1905
    %v1907 = vsub.f32 1.0, %v1896
    %1909 = vrot.lane.b32.xlu0 %v1906, 96
    %v1910 = vpop.permute.xlu0 %1909
    %v1912 = vmul.f32 %v1907, %v1910
    %v1913 = vmul.f32 %v1896, %v1677
    %v1914 = vadd.f32 %v1912, %v1913
    %v1915 = vrot.slane %v1795, 2
    %v1917 = vsel %vm219, %v199, %v1915
    %v1919 = vrot.slane %v1917, 6
    %v1920 = vsel %vm232, %v1919, 0
    %1922 = vmatprep.subr.mxu0 %v203
    %1923 = vmatpush1.msra.mxu0 %v202
    %1924 = vmatprep.subr.mxu0 %v205
    %1925 = vmatpush1.msra.mxu0 %v204
    %1926 = vmatprep.subr.mxu0 %v207
    %1927 = vmatpush1.msra.mxu0 %v206
    %1928 = vmatprep.subr.mxu0 %v209
    %1929 = vmatpush1.msra.mxu0 %v208
    %1930 = vmatprep.subr.mxu0 %v211
    %1931 = vmatpush1.msra.mxu0 %v210
    %1932 = vmatprep.subr.mxu0 %v213
    %1933 = vmatpush1.msra.mxu0 %v212
    %1934 = vmatprep.subr.mxu0 %v215
    %1935 = vmatpush1.msra.mxu0 %v214
    %1936 = vmatprep.subr.mxu0 %v217
    %1937 = vmatpush1.msra.mxu0 %v216
    %1938 = vmatprep.subr.mxu0 0.0
    %1939 = vmatpush1.msra.mxu0 0.0
    %1940 = vmatprep.subr.mxu0 0.0
    %1941 = vmatpush1.msra.mxu0 0.0
    %1942 = vmatprep.subr.mxu0 0.0
    %1943 = vmatpush1.msra.mxu0 0.0
    %1944 = vmatprep.subr.mxu0 0.0
    %1945 = vmatpush1.msra.mxu0 0.0
    %1946 = vmatprep.subr.mxu0 0.0
    %1947 = vmatpush1.msra.mxu0 0.0
    %1948 = vmatprep.subr.mxu0 0.0
    %1949 = vmatpush1.msra.mxu0 0.0
    %1950 = vmatprep.subr.mxu0 0.0
    %1951 = vmatpush1.msra.mxu0 0.0
    %1952 = vmatprep.subr.mxu0 0.0
    %1953 = vmatpush1.msra.mxu0 0.0
    %1954 = vmatprep.subr.mxu0 0.0
    %1955 = vmatpush1.msra.mxu0 0.0
    %1956 = vmatprep.subr.mxu0 0.0
    %1957 = vmatpush1.msra.mxu0 0.0
    %1958 = vmatprep.subr.mxu0 0.0
    %1959 = vmatpush1.msra.mxu0 0.0
    %1960 = vmatprep.subr.mxu0 0.0
    %1961 = vmatpush1.msra.mxu0 0.0
    %1962 = vmatprep.subr.mxu0 0.0
    %1963 = vmatpush1.msra.mxu0 0.0
    %1964 = vmatprep.subr.mxu0 0.0
    %1965 = vmatpush1.msra.mxu0 0.0
    %1966 = vmatprep.subr.mxu0 0.0
    %1967 = vmatpush1.msra.mxu0 0.0
    %1968 = vmatprep.subr.mxu0 0.0
    %1969 = vmatpush1.msra.mxu0 0.0
    %1970 = vmatprep.subr.mxu0 0.0
    %1971 = vmatpush1.msra.mxu0 0.0
    %1972 = vmatprep.subr.mxu0 0.0
    %1973 = vmatpush1.msra.mxu0 0.0
    %1974 = vmatprep.subr.mxu0 0.0
    %1975 = vmatpush1.msra.mxu0 0.0
    %1976 = vmatprep.subr.mxu0 0.0
    %1977 = vmatpush1.msra.mxu0 0.0
    %1978 = vmatprep.subr.mxu0 0.0
    %1979 = vmatpush1.msra.mxu0 0.0
    %1980 = vmatprep.subr.mxu0 0.0
    %1981 = vmatpush1.msra.mxu0 0.0
    %1982 = vmatprep.subr.mxu0 0.0
    %1983 = vmatpush1.msra.mxu0 0.0
    %1984 = vmatprep.subr.mxu0 0.0
    %1985 = vmatpush1.msra.mxu0 0.0
    %1986 = vmatprep.mubr.f32.mxu0 0.0
    %1987 = vmatmul.mubr.f32.gmra.mrb[0].mxu0 %v1920
    %v1988 = vpop.f32.mrb[0].mxu0
    %v1989 = vadd.f32 %v225, %v1988
    %v1990 = vpop.f32.mrb[0].mxu0
    %v1991 = vadd.f32 %v229, %v1990
    %1992 = vdwg.mxu0
    %1994 = vrot.lane.b32.xlu0 %v1989, 32
    %v1995 = vpop.permute.xlu0 %1994
    %v1997 = vadd.f32 %v1989, %v1995
    %v1998 = vxor.u32 %v1997, 2147483648
    %v1999 = vmul.f32 %v1998, 1.442695
    %v2000 = vpow.pop %v1999
    %v2001 = vadd.f32 %v2000, 1.0
    %v2002 = vrcp.pop %v2001
    %v2003 = vmul.f32 1.0, %v2002
    %2005 = vrot.lane.b32.xlu0 %v1991, 32
    %v2006 = vpop.permute.xlu0 %2005
    %v2008 = vadd.f32 %v1989, %v2006
    %v2009 = vxor.u32 %v2008, 2147483648
    %v2010 = vmul.f32 %v2009, 1.442695
    %v2011 = vpow.pop %v2010
    %v2012 = vadd.f32 %v2011, 1.0
    %v2013 = vrcp.pop %v2012
    %v2014 = vmul.f32 1.0, %v2013
    %2015 = vrot.lane.b32.xlu0 %v1991, 96
    %v2016 = vpop.permute.xlu0 %2015
    %v2018 = vmul.f32 %v2003, %v2016
    %2020 = vrot.lane.b32.xlu0 %v2018, 64
    %v2021 = vpop.permute.xlu0 %2020
    %v2023 = vadd.f32 %v1989, %v2021
    %v2024 = vtanh.pop %v2023
    %v2025 = vsub.f32 1.0, %v2014
    %2027 = vrot.lane.b32.xlu0 %v2024, 96
    %v2028 = vpop.permute.xlu0 %2027
    %v2030 = vmul.f32 %v2025, %v2028
    %v2031 = vmul.f32 %v2014, %v1795
    %v2032 = vadd.f32 %v2030, %v2031
    %2034 = vrot.lane.b32.xlu0 %v2032, 96
    %v2035 = vpop.permute.xlu0 %2034
    %v2037 = vsel %vm219, %v2035, %v1914
    %v2039 = vsel %vm232, %v2037, 0
    %2041 = vmatprep.subr.mxu0 %v349
    %2042 = vmatpush1.msra.mxu0 %v348
    %2043 = vmatprep.subr.mxu0 %v351
    %2044 = vmatpush1.msra.mxu0 %v350
    %2045 = vmatprep.subr.mxu0 %v353
    %2046 = vmatpush1.msra.mxu0 %v352
    %2047 = vmatprep.subr.mxu0 %v355
    %2048 = vmatpush1.msra.mxu0 %v354
    %2049 = vmatprep.subr.mxu0 %v357
    %2050 = vmatpush1.msra.mxu0 %v356
    %2051 = vmatprep.subr.mxu0 %v359
    %2052 = vmatpush1.msra.mxu0 %v358
    %2053 = vmatprep.subr.mxu0 %v361
    %2054 = vmatpush1.msra.mxu0 %v360
    %2055 = vmatprep.subr.mxu0 %v363
    %2056 = vmatpush1.msra.mxu0 %v362
    %2057 = vmatprep.subr.mxu0 0.0
    %2058 = vmatpush1.msra.mxu0 0.0
    %2059 = vmatprep.subr.mxu0 0.0
    %2060 = vmatpush1.msra.mxu0 0.0
    %2061 = vmatprep.subr.mxu0 0.0
    %2062 = vmatpush1.msra.mxu0 0.0
    %2063 = vmatprep.subr.mxu0 0.0
    %2064 = vmatpush1.msra.mxu0 0.0
    %2065 = vmatprep.subr.mxu0 0.0
    %2066 = vmatpush1.msra.mxu0 0.0
    %2067 = vmatprep.subr.mxu0 0.0
    %2068 = vmatpush1.msra.mxu0 0.0
    %2069 = vmatprep.subr.mxu0 0.0
    %2070 = vmatpush1.msra.mxu0 0.0
    %2071 = vmatprep.subr.mxu0 0.0
    %2072 = vmatpush1.msra.mxu0 0.0
    %2073 = vmatprep.subr.mxu0 0.0
    %2074 = vmatpush1.msra.mxu0 0.0
    %2075 = vmatprep.subr.mxu0 0.0
    %2076 = vmatpush1.msra.mxu0 0.0
    %2077 = vmatprep.subr.mxu0 0.0
    %2078 = vmatpush1.msra.mxu0 0.0
    %2079 = vmatprep.subr.mxu0 0.0
    %2080 = vmatpush1.msra.mxu0 0.0
    %2081 = vmatprep.subr.mxu0 0.0
    %2082 = vmatpush1.msra.mxu0 0.0
    %2083 = vmatprep.subr.mxu0 0.0
    %2084 = vmatpush1.msra.mxu0 0.0
    %2085 = vmatprep.subr.mxu0 0.0
    %2086 = vmatpush1.msra.mxu0 0.0
    %2087 = vmatprep.subr.mxu0 0.0
    %2088 = vmatpush1.msra.mxu0 0.0
    %2089 = vmatprep.subr.mxu0 0.0
    %2090 = vmatpush1.msra.mxu0 0.0
    %2091 = vmatprep.subr.mxu0 0.0
    %2092 = vmatpush1.msra.mxu0 0.0
    %2093 = vmatprep.subr.mxu0 0.0
    %2094 = vmatpush1.msra.mxu0 0.0
    %2095 = vmatprep.subr.mxu0 0.0
    %2096 = vmatpush1.msra.mxu0 0.0
    %2097 = vmatprep.subr.mxu0 0.0
    %2098 = vmatpush1.msra.mxu0 0.0
    %2099 = vmatprep.subr.mxu0 0.0
    %2100 = vmatpush1.msra.mxu0 0.0
    %2101 = vmatprep.subr.mxu0 0.0
    %2102 = vmatpush1.msra.mxu0 0.0
    %2103 = vmatprep.subr.mxu0 0.0
    %2104 = vmatpush1.msra.mxu0 0.0
    %2105 = vmatprep.mubr.f32.mxu0 0.0
    %2106 = vmatmul.mubr.f32.gmra.mrb[0].mxu0 %v2039
    %v2107 = vpop.f32.mrb[0].mxu0
    %v2108 = vadd.f32 %v375, %v2107
    %v2109 = vpop.f32.mrb[0].mxu0
    %v2110 = vadd.f32 %v379, %v2109
    %2111 = vdwg.mxu0
    %2113 = vrot.lane.b32.xlu0 %v2108, 32
    %v2114 = vpop.permute.xlu0 %2113
    %v2116 = vadd.f32 %v2108, %v2114
    %v2117 = vxor.u32 %v2116, 2147483648
    %v2118 = vmul.f32 %v2117, 1.442695
    %v2119 = vpow.pop %v2118
    %v2120 = vadd.f32 %v2119, 1.0
    %v2121 = vrcp.pop %v2120
    %v2122 = vmul.f32 1.0, %v2121
    %2124 = vrot.lane.b32.xlu0 %v2110, 32
    %v2125 = vpop.permute.xlu0 %2124
    %v2127 = vadd.f32 %v2108, %v2125
    %v2128 = vxor.u32 %v2127, 2147483648
    %v2129 = vmul.f32 %v2128, 1.442695
    %v2130 = vpow.pop %v2129
    %v2131 = vadd.f32 %v2130, 1.0
    %v2132 = vrcp.pop %v2131
    %v2133 = vmul.f32 1.0, %v2132
    %2134 = vrot.lane.b32.xlu0 %v2110, 96
    %v2135 = vpop.permute.xlu0 %2134
    %v2137 = vmul.f32 %v2122, %v2135
    %2139 = vrot.lane.b32.xlu0 %v2137, 64
    %v2140 = vpop.permute.xlu0 %2139
    %v2142 = vadd.f32 %v2108, %v2140
    %v2143 = vtanh.pop %v2142
    %v2144 = vsub.f32 1.0, %v2133
    %2146 = vrot.lane.b32.xlu0 %v2143, 96
    %v2147 = vpop.permute.xlu0 %2146
    %v2149 = vmul.f32 %v2144, %v2147
    %v2150 = vmul.f32 %v2133, %v1914
    %v2151 = vadd.f32 %v2149, %v2150
    %v2152 = vld [vmem:[#allocation5] sm:$0x1]
    %v2153 = vlaneseq
    %v2154 = vshrl.u32 %v2153, 7
    %v2155 = vsub.s32 0, %v2154
    %v2156 = vrot.slane %v2152, %v2155
    %v2157 = vld [vmem:[#allocation7] sm:$0xff]
    %v2158 = vld [vmem:[#allocation7 + $0x8] sm:$0xff]
    %v2159 = vld [vmem:[#allocation7 + $0x10] sm:$0xff]
    %v2160 = vld [vmem:[#allocation7 + $0x18] sm:$0xff]
    %v2161 = vld [vmem:[#allocation7 + $0x20] sm:$0xff]
    %v2162 = vld [vmem:[#allocation7 + $0x28] sm:$0xff]
    %v2163 = vld [vmem:[#allocation7 + $0x30] sm:$0xff]
    %v2164 = vld [vmem:[#allocation7 + $0x38] sm:$0xff]
    %v2165 = vld [vmem:[#allocation7 + $0x40] sm:$0xff]
    %v2166 = vld [vmem:[#allocation7 + $0x48] sm:$0xff]
    %v2167 = vld [vmem:[#allocation7 + $0x50] sm:$0xff]
    %v2168 = vld [vmem:[#allocation7 + $0x58] sm:$0xff]
    %v2169 = vld [vmem:[#allocation7 + $0x60] sm:$0xff]
    %v2170 = vld [vmem:[#allocation7 + $0x68] sm:$0xff]
    %v2171 = vld [vmem:[#allocation7 + $0x70] sm:$0xff]
    %v2172 = vld [vmem:[#allocation7 + $0x78] sm:$0xff]
    %v2173 = vld [vmem:[#allocation8] sm:$0x3]
    %v2174 = vsel %vm219, %v2156, %v2032
    %v2176 = vlaneseq
    %v2177 = vshrl.u32 %v2176, 7
    %v2178 = vsub.s32 0, %v2177
    %v2179 = vrot.slane %v2173, %v2178
    %v2180 = vlaneseq
    %v2181 = vshrl.u32 %v2180, 7
    %v2182 = vsub.s32 1, %v2181
    %v2183 = vrot.slane %v2173, %v2182
    %v2187 = vsel %vm232, %v2174, 0
    %2189 = vmatprep.subr.mxu0 %v2158
    %2190 = vmatpush1.msra.mxu0 %v2157
    %2191 = vmatprep.subr.mxu0 %v2160
    %2192 = vmatpush1.msra.mxu0 %v2159
    %2193 = vmatprep.subr.mxu0 %v2162
    %2194 = vmatpush1.msra.mxu0 %v2161
    %2195 = vmatprep.subr.mxu0 %v2164
    %2196 = vmatpush1.msra.mxu0 %v2163
    %2197 = vmatprep.subr.mxu0 %v2166
    %2198 = vmatpush1.msra.mxu0 %v2165
    %2199 = vmatprep.subr.mxu0 %v2168
    %2200 = vmatpush1.msra.mxu0 %v2167
    %2201 = vmatprep.subr.mxu0 %v2170
    %2202 = vmatpush1.msra.mxu0 %v2169
    %2203 = vmatprep.subr.mxu0 %v2172
    %2204 = vmatpush1.msra.mxu0 %v2171
    %2205 = vmatprep.subr.mxu0 0.0
    %2206 = vmatpush1.msra.mxu0 0.0
    %2207 = vmatprep.subr.mxu0 0.0
    %2208 = vmatpush1.msra.mxu0 0.0
    %2209 = vmatprep.subr.mxu0 0.0
    %2210 = vmatpush1.msra.mxu0 0.0
    %2211 = vmatprep.subr.mxu0 0.0
    %2212 = vmatpush1.msra.mxu0 0.0
    %2213 = vmatprep.subr.mxu0 0.0
    %2214 = vmatpush1.msra.mxu0 0.0
    %2215 = vmatprep.subr.mxu0 0.0
    %2216 = vmatpush1.msra.mxu0 0.0
    %2217 = vmatprep.subr.mxu0 0.0
    %2218 = vmatpush1.msra.mxu0 0.0
    %2219 = vmatprep.subr.mxu0 0.0
    %2220 = vmatpush1.msra.mxu0 0.0
    %2221 = vmatprep.subr.mxu0 0.0
    %2222 = vmatpush1.msra.mxu0 0.0
    %2223 = vmatprep.subr.mxu0 0.0
    %2224 = vmatpush1.msra.mxu0 0.0
    %2225 = vmatprep.subr.mxu0 0.0
    %2226 = vmatpush1.msra.mxu0 0.0
    %2227 = vmatprep.subr.mxu0 0.0
    %2228 = vmatpush1.msra.mxu0 0.0
    %2229 = vmatprep.subr.mxu0 0.0
    %2230 = vmatpush1.msra.mxu0 0.0
    %2231 = vmatprep.subr.mxu0 0.0
    %2232 = vmatpush1.msra.mxu0 0.0
    %2233 = vmatprep.subr.mxu0 0.0
    %2234 = vmatpush1.msra.mxu0 0.0
    %2235 = vmatprep.subr.mxu0 0.0
    %2236 = vmatpush1.msra.mxu0 0.0
    %2237 = vmatprep.subr.mxu0 0.0
    %2238 = vmatpush1.msra.mxu0 0.0
    %2239 = vmatprep.subr.mxu0 0.0
    %2240 = vmatpush1.msra.mxu0 0.0
    %2241 = vmatprep.subr.mxu0 0.0
    %2242 = vmatpush1.msra.mxu0 0.0
    %2243 = vmatprep.subr.mxu0 0.0
    %2244 = vmatpush1.msra.mxu0 0.0
    %2245 = vmatprep.subr.mxu0 0.0
    %2246 = vmatpush1.msra.mxu0 0.0
    %2247 = vmatprep.subr.mxu0 0.0
    %2248 = vmatpush1.msra.mxu0 0.0
    %2249 = vmatprep.subr.mxu0 0.0
    %2250 = vmatpush1.msra.mxu0 0.0
    %2251 = vmatprep.subr.mxu0 0.0
    %2252 = vmatpush1.msra.mxu0 0.0
    %2253 = vmatprep.mubr.f32.mxu0 0.0
    %2254 = vmatmul.mubr.f32.gmra.mrb[0].mxu0 %v2187
    %v2255 = vpop.f32.mrb[0].mxu0
    %v2256 = vadd.f32 %v2179, %v2255
    %v2257 = vpop.f32.mrb[0].mxu0
    %v2258 = vadd.f32 %v2183, %v2257
    %2259 = vdwg.mxu0
    %2261 = vrot.lane.b32.xlu0 %v2256, 32
    %v2262 = vpop.permute.xlu0 %2261
    %v2264 = vadd.f32 %v2256, %v2262
    %v2265 = vxor.u32 %v2264, 2147483648
    %v2266 = vmul.f32 %v2265, 1.442695
    %v2267 = vpow.pop %v2266
    %v2268 = vadd.f32 %v2267, 1.0
    %v2269 = vrcp.pop %v2268
    %v2270 = vmul.f32 1.0, %v2269
    %2272 = vrot.lane.b32.xlu0 %v2258, 32
    %v2273 = vpop.permute.xlu0 %2272
    %v2275 = vadd.f32 %v2256, %v2273
    %v2276 = vxor.u32 %v2275, 2147483648
    %v2277 = vmul.f32 %v2276, 1.442695
    %v2278 = vpow.pop %v2277
    %v2279 = vadd.f32 %v2278, 1.0
    %v2280 = vrcp.pop %v2279
    %v2281 = vmul.f32 1.0, %v2280
    %2282 = vrot.lane.b32.xlu0 %v2258, 96
    %v2283 = vpop.permute.xlu0 %2282
    %v2285 = vmul.f32 %v2270, %v2283
    %2287 = vrot.lane.b32.xlu0 %v2285, 64
    %v2288 = vpop.permute.xlu0 %2287
    %v2290 = vadd.f32 %v2256, %v2288
    %v2291 = vtanh.pop %v2290
    %v2292 = vsub.f32 1.0, %v2281
    %2294 = vrot.lane.b32.xlu0 %v2291, 96
    %v2295 = vpop.permute.xlu0 %2294
    %v2297 = vmul.f32 %v2292, %v2295
    %v2298 = vmul.f32 %v2281, %v2032
    %v2299 = vadd.f32 %v2297, %v2298
    %s2300 = scalar_lea.vmem [#allocation7], 128
    %v2301 = vld [vmem:[%s2300] sm:$0xff]
    %v2302 = vld [vmem:[%s2300 + $0x8] sm:$0xff]
    %v2303 = vld [vmem:[%s2300 + $0x10] sm:$0xff]
    %v2304 = vld [vmem:[%s2300 + $0x18] sm:$0xff]
    %v2305 = vld [vmem:[%s2300 + $0x20] sm:$0xff]
    %v2306 = vld [vmem:[%s2300 + $0x28] sm:$0xff]
    %v2307 = vld [vmem:[%s2300 + $0x30] sm:$0xff]
    %v2308 = vld [vmem:[%s2300 + $0x38] sm:$0xff]
    %v2309 = vld [vmem:[%s2300 + $0x40] sm:$0xff]
    %v2310 = vld [vmem:[%s2300 + $0x48] sm:$0xff]
    %v2311 = vld [vmem:[%s2300 + $0x50] sm:$0xff]
    %v2312 = vld [vmem:[%s2300 + $0x58] sm:$0xff]
    %v2313 = vld [vmem:[%s2300 + $0x60] sm:$0xff]
    %v2314 = vld [vmem:[%s2300 + $0x68] sm:$0xff]
    %v2315 = vld [vmem:[%s2300 + $0x70] sm:$0xff]
    %v2316 = vld [vmem:[%s2300 + $0x78] sm:$0xff]
    %s2317 = scalar_lea.vmem [#allocation8], 2
    %v2318 = vld [vmem:[%s2317] sm:$0x3]
    %2320 = vrot.lane.b32.xlu0 %v2299, 96
    %v2321 = vpop.permute.xlu0 %2320
    %v2323 = vsel %vm219, %v2321, %v2151
    %v2325 = vlaneseq
    %v2326 = vshrl.u32 %v2325, 7
    %v2327 = vsub.s32 0, %v2326
    %v2328 = vrot.slane %v2318, %v2327
    %v2329 = vlaneseq
    %v2330 = vshrl.u32 %v2329, 7
    %v2331 = vsub.s32 1, %v2330
    %v2332 = vrot.slane %v2318, %v2331
    %v2336 = vsel %vm232, %v2323, 0
    %2338 = vmatprep.subr.mxu0 %v2302
    %2339 = vmatpush1.msra.mxu0 %v2301
    %2340 = vmatprep.subr.mxu0 %v2304
    %2341 = vmatpush1.msra.mxu0 %v2303
    %2342 = vmatprep.subr.mxu0 %v2306
    %2343 = vmatpush1.msra.mxu0 %v2305
    %2344 = vmatprep.subr.mxu0 %v2308
    %2345 = vmatpush1.msra.mxu0 %v2307
    %2346 = vmatprep.subr.mxu0 %v2310
    %2347 = vmatpush1.msra.mxu0 %v2309
    %2348 = vmatprep.subr.mxu0 %v2312
    %2349 = vmatpush1.msra.mxu0 %v2311
    %2350 = vmatprep.subr.mxu0 %v2314
    %2351 = vmatpush1.msra.mxu0 %v2313
    %2352 = vmatprep.subr.mxu0 %v2316
    %2353 = vmatpush1.msra.mxu0 %v2315
    %2354 = vmatprep.subr.mxu0 0.0
    %2355 = vmatpush1.msra.mxu0 0.0
    %2356 = vmatprep.subr.mxu0 0.0
    %2357 = vmatpush1.msra.mxu0 0.0
    %2358 = vmatprep.subr.mxu0 0.0
    %2359 = vmatpush1.msra.mxu0 0.0
    %2360 = vmatprep.subr.mxu0 0.0
    %2361 = vmatpush1.msra.mxu0 0.0
    %2362 = vmatprep.subr.mxu0 0.0
    %2363 = vmatpush1.msra.mxu0 0.0
    %2364 = vmatprep.subr.mxu0 0.0
    %2365 = vmatpush1.msra.mxu0 0.0
    %2366 = vmatprep.subr.mxu0 0.0
    %2367 = vmatpush1.msra.mxu0 0.0
    %2368 = vmatprep.subr.mxu0 0.0
    %2369 = vmatpush1.msra.mxu0 0.0
    %2370 = vmatprep.subr.mxu0 0.0
    %2371 = vmatpush1.msra.mxu0 0.0
    %2372 = vmatprep.subr.mxu0 0.0
    %2373 = vmatpush1.msra.mxu0 0.0
    %2374 = vmatprep.subr.mxu0 0.0
    %2375 = vmatpush1.msra.mxu0 0.0
    %2376 = vmatprep.subr.mxu0 0.0
    %2377 = vmatpush1.msra.mxu0 0.0
    %2378 = vmatprep.subr.mxu0 0.0
    %2379 = vmatpush1.msra.mxu0 0.0
    %2380 = vmatprep.subr.mxu0 0.0
    %2381 = vmatpush1.msra.mxu0 0.0
    %2382 = vmatprep.subr.mxu0 0.0
    %2383 = vmatpush1.msra.mxu0 0.0
    %2384 = vmatprep.subr.mxu0 0.0
    %2385 = vmatpush1.msra.mxu0 0.0
    %2386 = vmatprep.subr.mxu0 0.0
    %2387 = vmatpush1.msra.mxu0 0.0
    %2388 = vmatprep.subr.mxu0 0.0
    %2389 = vmatpush1.msra.mxu0 0.0
    %2390 = vmatprep.subr.mxu0 0.0
    %2391 = vmatpush1.msra.mxu0 0.0
    %2392 = vmatprep.subr.mxu0 0.0
    %2393 = vmatpush1.msra.mxu0 0.0
    %2394 = vmatprep.subr.mxu0 0.0
    %2395 = vmatpush1.msra.mxu0 0.0
    %2396 = vmatprep.subr.mxu0 0.0
    %2397 = vmatpush1.msra.mxu0 0.0
    %2398 = vmatprep.subr.mxu0 0.0
    %2399 = vmatpush1.msra.mxu0 0.0
    %2400 = vmatprep.subr.mxu0 0.0
    %2401 = vmatpush1.msra.mxu0 0.0
    %2402 = vmatprep.mubr.f32.mxu0 0.0
    %2403 = vmatmul.mubr.f32.gmra.mrb[0].mxu0 %v2336
    %v2404 = vpop.f32.mrb[0].mxu0
    %v2405 = vadd.f32 %v2328, %v2404
    %v2406 = vpop.f32.mrb[0].mxu0
    %v2407 = vadd.f32 %v2332, %v2406
    %2408 = vdwg.mxu0
    %2410 = vrot.lane.b32.xlu0 %v2405, 32
    %v2411 = vpop.permute.xlu0 %2410
    %v2413 = vadd.f32 %v2405, %v2411
    %v2414 = vxor.u32 %v2413, 2147483648
    %v2415 = vmul.f32 %v2414, 1.442695
    %v2416 = vpow.pop %v2415
    %v2417 = vadd.f32 %v2416, 1.0
    %v2418 = vrcp.pop %v2417
    %v2419 = vmul.f32 1.0, %v2418
    %2421 = vrot.lane.b32.xlu0 %v2407, 32
    %v2422 = vpop.permute.xlu0 %2421
    %v2424 = vadd.f32 %v2405, %v2422
    %v2425 = vxor.u32 %v2424, 2147483648
    %v2426 = vmul.f32 %v2425, 1.442695
    %v2427 = vpow.pop %v2426
    %v2428 = vadd.f32 %v2427, 1.0
    %v2429 = vrcp.pop %v2428
    %v2430 = vmul.f32 1.0, %v2429
    %2431 = vrot.lane.b32.xlu0 %v2407, 96
    %v2432 = vpop.permute.xlu0 %2431
    %v2434 = vmul.f32 %v2419, %v2432
    %2436 = vrot.lane.b32.xlu0 %v2434, 64
    %v2437 = vpop.permute.xlu0 %2436
    %v2439 = vadd.f32 %v2405, %v2437
    %v2440 = vtanh.pop %v2439
    %v2441 = vsub.f32 1.0, %v2430
    %2443 = vrot.lane.b32.xlu0 %v2440, 96
    %v2444 = vpop.permute.xlu0 %2443
    %v2446 = vmul.f32 %v2441, %v2444
    %v2447 = vmul.f32 %v2430, %v2151
    %v2448 = vadd.f32 %v2446, %v2447
    %v2449 = vld [vmem:[%s7] sm:$0xff]
    %v2450 = vld [vmem:[%s7 + $0x8] sm:$0xff]
    %v2451 = vld [vmem:[%s7 + $0x10] sm:$0xff]
    %v2452 = vld [vmem:[%s7 + $0x18] sm:$0xff]
    %v2453 = vld [vmem:[#allocation10] sm:$0x1]
    %v2455 = vlaneseq
    %v2456 = vshrl.u32 %v2455, 7
    %v2457 = vsub.s32 0, %v2456
    %v2458 = vrot.slane %v2453, %v2457
    %2461 = vrot.lane.b32.xlu0 %v2448, 96
    %v2462 = vpop.permute.xlu0 %2461
    %v2463 = vsel %vm219, %v2462, 0
    %2465 = vmatprep.subr.mxu0 0.0
    %2466 = vmatpush1.msra.mxu0 %v2449
    %2467 = vmatprep.subr.mxu0 0.0
    %2468 = vmatpush1.msra.mxu0 %v2450
    %2469 = vmatprep.subr.mxu0 0.0
    %2470 = vmatpush1.msra.mxu0 %v2451
    %2471 = vmatprep.subr.mxu0 0.0
    %2472 = vmatpush1.msra.mxu0 %v2452
    %2473 = vmatprep.subr.mxu0 0.0
    %2474 = vmatpush1.msra.mxu0 0.0
    %2475 = vmatprep.subr.mxu0 0.0
    %2476 = vmatpush1.msra.mxu0 0.0
    %2477 = vmatprep.subr.mxu0 0.0
    %2478 = vmatpush1.msra.mxu0 0.0
    %2479 = vmatprep.subr.mxu0 0.0
    %2480 = vmatpush1.msra.mxu0 0.0
    %2481 = vmatprep.subr.mxu0 0.0
    %2482 = vmatpush1.msra.mxu0 0.0
    %2483 = vmatprep.subr.mxu0 0.0
    %2484 = vmatpush1.msra.mxu0 0.0
    %2485 = vmatprep.subr.mxu0 0.0
    %2486 = vmatpush1.msra.mxu0 0.0
    %2487 = vmatprep.subr.mxu0 0.0
    %2488 = vmatpush1.msra.mxu0 0.0
    %2489 = vmatprep.subr.mxu0 0.0
    %2490 = vmatpush1.msra.mxu0 0.0
    %2491 = vmatprep.subr.mxu0 0.0
    %2492 = vmatpush1.msra.mxu0 0.0
    %2493 = vmatprep.subr.mxu0 0.0
    %2494 = vmatpush1.msra.mxu0 0.0
    %2495 = vmatprep.subr.mxu0 0.0
    %2496 = vmatpush1.msra.mxu0 0.0
    %2497 = vmatprep.subr.mxu0 0.0
    %2498 = vmatpush1.msra.mxu0 0.0
    %2499 = vmatprep.subr.mxu0 0.0
    %2500 = vmatpush1.msra.mxu0 0.0
    %2501 = vmatprep.subr.mxu0 0.0
    %2502 = vmatpush1.msra.mxu0 0.0
    %2503 = vmatprep.subr.mxu0 0.0
    %2504 = vmatpush1.msra.mxu0 0.0
    %2505 = vmatprep.subr.mxu0 0.0
    %2506 = vmatpush1.msra.mxu0 0.0
    %2507 = vmatprep.subr.mxu0 0.0
    %2508 = vmatpush1.msra.mxu0 0.0
    %2509 = vmatprep.subr.mxu0 0.0
    %2510 = vmatpush1.msra.mxu0 0.0
    %2511 = vmatprep.subr.mxu0 0.0
    %2512 = vmatpush1.msra.mxu0 0.0
    %2513 = vmatprep.subr.mxu0 0.0
    %2514 = vmatpush1.msra.mxu0 0.0
    %2515 = vmatprep.subr.mxu0 0.0
    %2516 = vmatpush1.msra.mxu0 0.0
    %2517 = vmatprep.subr.mxu0 0.0
    %2518 = vmatpush1.msra.mxu0 0.0
    %2519 = vmatprep.subr.mxu0 0.0
    %2520 = vmatpush1.msra.mxu0 0.0
    %2521 = vmatprep.subr.mxu0 0.0
    %2522 = vmatpush1.msra.mxu0 0.0
    %2523 = vmatprep.subr.mxu0 0.0
    %2524 = vmatpush1.msra.mxu0 0.0
    %2525 = vmatprep.subr.mxu0 0.0
    %2526 = vmatpush1.msra.mxu0 0.0
    %2527 = vmatprep.subr.mxu0 0.0
    %2528 = vmatpush1.msra.mxu0 0.0
    %2529 = vmatprep.mubr.f32.mxu0 0.0
    %2530 = vmatmul.mubr.f32.gmra.mrb[0].mxu0 %v2463
    %v2531 = vpop.f32.mrb[0].mxu0
    %v2532 = vadd.f32 %v2458, %v2531
    %v2533 = vpop.f32.mrb[0].mxu0
    %2534 = vdwg.mxu0
    %vm2535 = vcmask 156672
    %v2536 = vsel %vm2535, %v2532, -inf
    %2537 = vmax.xlane.f32.xlu0 %v2536
    %v2538 = vpop.xlane.xlu0 %2537
    %vm2539 = vcmp.ge.f32.partialorder %v2532, %v2538
    %v2540 = vsel %vm2539, %v102, 20
    %v2541 = vsel %vm2535, %v2540, 2147483647
    %v2542 = vand.u32 %v2541, 65535
    %v2543 = vshra.s32 %v2541, 16
    %v2544 = vcvt.s32.f32 %v2542
    %v2545 = vcvt.s32.f32 %v2543
    %2546 = vmin.xlane.f32.xlu0 %v2545
    %v2547 = vpop.xlane.xlu0 %2546
    %vm2548 = vcmp.eq.f32.partialorder %v2545, %v2547
    %v2549 = vsel %vm2548, %v2544, inf
    %2550 = vmin.xlane.f32.xlu0 %v2549
    %v2551 = vpop.xlane.xlu0 %2550
    %v2552 = vcvt.f32.s32 %v2551
    %v2553 = vcvt.f32.s32 %v2547
    %v2554 = vshll.u32 %v2553, 16
    %v2555 = vadd.s32 %v2554, %v2552
    %vm2556 = vcmp.eq.s32.totalorder %v102, %v2555
    %v2557 = vsel %vm2556, 1, 0
    %v2558 = vcvt.s32.f32 %v2557
    %v2559 = vld [vmem:[#allocation5] sm:$0xff]
    %v2560 = vld [vmem:[#allocation5 + $0x8] sm:$0xff]
    %v2561 = vld [vmem:[#allocation5 + $0x10] sm:$0xf]
    %vm2562 = vcmask 162816
    %v2564 = vsel %vm2562, %v2558, 0
    %vm2566 = vcmask 1043456
    %v2568 = vsel %vm2566, %v2561, 0
    %2570 = vmatprep.subr.mxu0 0.0
    %2571 = vmatpush1.msra.mxu0 %v2559
    %2572 = vmatprep.subr.mxu0 0.0
    %2573 = vmatpush1.msra.mxu0 %v2560
    %2574 = vmatprep.subr.mxu0 0.0
    %2575 = vmatpush1.msra.mxu0 %v2568
    %2576 = vmatprep.subr.mxu0 0.0
    %2577 = vmatpush1.msra.mxu0 0.0
    %2578 = vmatprep.subr.mxu0 0.0
    %2579 = vmatpush1.msra.mxu0 0.0
    %2580 = vmatprep.subr.mxu0 0.0
    %2581 = vmatpush1.msra.mxu0 0.0
    %2582 = vmatprep.subr.mxu0 0.0
    %2583 = vmatpush1.msra.mxu0 0.0
    %2584 = vmatprep.subr.mxu0 0.0
    %2585 = vmatpush1.msra.mxu0 0.0
    %2586 = vmatprep.subr.mxu0 0.0
    %2587 = vmatpush1.msra.mxu0 0.0
    %2588 = vmatprep.subr.mxu0 0.0
    %2589 = vmatpush1.msra.mxu0 0.0
    %2590 = vmatprep.subr.mxu0 0.0
    %2591 = vmatpush1.msra.mxu0 0.0
    %2592 = vmatprep.subr.mxu0 0.0
    %2593 = vmatpush1.msra.mxu0 0.0
    %2594 = vmatprep.subr.mxu0 0.0
    %2595 = vmatpush1.msra.mxu0 0.0
    %2596 = vmatprep.subr.mxu0 0.0
    %2597 = vmatpush1.msra.mxu0 0.0
    %2598 = vmatprep.subr.mxu0 0.0
    %2599 = vmatpush1.msra.mxu0 0.0
    %2600 = vmatprep.subr.mxu0 0.0
    %2601 = vmatpush1.msra.mxu0 0.0
    %2602 = vmatprep.subr.mxu0 0.0
    %2603 = vmatpush1.msra.mxu0 0.0
    %2604 = vmatprep.subr.mxu0 0.0
    %2605 = vmatpush1.msra.mxu0 0.0
    %2606 = vmatprep.subr.mxu0 0.0
    %2607 = vmatpush1.msra.mxu0 0.0
    %2608 = vmatprep.subr.mxu0 0.0
    %2609 = vmatpush1.msra.mxu0 0.0
    %2610 = vmatprep.subr.mxu0 0.0
    %2611 = vmatpush1.msra.mxu0 0.0
    %2612 = vmatprep.subr.mxu0 0.0
    %2613 = vmatpush1.msra.mxu0 0.0
    %2614 = vmatprep.subr.mxu0 0.0
    %2615 = vmatpush1.msra.mxu0 0.0
    %2616 = vmatprep.subr.mxu0 0.0
    %2617 = vmatpush1.msra.mxu0 0.0
    %2618 = vmatprep.subr.mxu0 0.0
    %2619 = vmatpush1.msra.mxu0 0.0
    %2620 = vmatprep.subr.mxu0 0.0
    %2621 = vmatpush1.msra.mxu0 0.0
    %2622 = vmatprep.subr.mxu0 0.0
    %2623 = vmatpush1.msra.mxu0 0.0
    %2624 = vmatprep.subr.mxu0 0.0
    %2625 = vmatpush1.msra.mxu0 0.0
    %2626 = vmatprep.subr.mxu0 0.0
    %2627 = vmatpush1.msra.mxu0 0.0
    %2628 = vmatprep.subr.mxu0 0.0
    %2629 = vmatpush1.msra.mxu0 0.0
    %2630 = vmatprep.subr.mxu0 0.0
    %2631 = vmatpush1.msra.mxu0 0.0
    %2632 = vmatprep.subr.mxu0 0.0
    %2633 = vmatpush1.msra.mxu0 0.0
    %2634 = vmatprep.mubr.f32.mxu0 0.0
    %2635 = vmatmul.mubr.f32.gmra.mrb[0].mxu0 %v2564
    %v2636 = vpop.f32.mrb[0].mxu0
    %v2637 = vadd.f32 0.0, %v2636
    %v2638 = vpop.f32.mrb[0].mxu0
    %2639 = vdwg.mxu0
    %v2640 = vsel %vm219, %v2637, %v2299
    %v2642 = vsel %vm232, %v2640, 0
    %2644 = vmatprep.subr.mxu0 %v2158
    %2645 = vmatpush1.msra.mxu0 %v2157
    %2646 = vmatprep.subr.mxu0 %v2160
    %2647 = vmatpush1.msra.mxu0 %v2159
    %2648 = vmatprep.subr.mxu0 %v2162
    %2649 = vmatpush1.msra.mxu0 %v2161
    %2650 = vmatprep.subr.mxu0 %v2164
    %2651 = vmatpush1.msra.mxu0 %v2163
    %2652 = vmatprep.subr.mxu0 %v2166
    %2653 = vmatpush1.msra.mxu0 %v2165
    %2654 = vmatprep.subr.mxu0 %v2168
    %2655 = vmatpush1.msra.mxu0 %v2167
    %2656 = vmatprep.subr.mxu0 %v2170
    %2657 = vmatpush1.msra.mxu0 %v2169
    %2658 = vmatprep.subr.mxu0 %v2172
    %2659 = vmatpush1.msra.mxu0 %v2171
    %2660 = vmatprep.subr.mxu0 0.0
    %2661 = vmatpush1.msra.mxu0 0.0
    %2662 = vmatprep.subr.mxu0 0.0
    %2663 = vmatpush1.msra.mxu0 0.0
    %2664 = vmatprep.subr.mxu0 0.0
    %2665 = vmatpush1.msra.mxu0 0.0
    %2666 = vmatprep.subr.mxu0 0.0
    %2667 = vmatpush1.msra.mxu0 0.0
    %2668 = vmatprep.subr.mxu0 0.0
    %2669 = vmatpush1.msra.mxu0 0.0
    %2670 = vmatprep.subr.mxu0 0.0
    %2671 = vmatpush1.msra.mxu0 0.0
    %2672 = vmatprep.subr.mxu0 0.0
    %2673 = vmatpush1.msra.mxu0 0.0
    %2674 = vmatprep.subr.mxu0 0.0
    %2675 = vmatpush1.msra.mxu0 0.0
    %2676 = vmatprep.subr.mxu0 0.0
    %2677 = vmatpush1.msra.mxu0 0.0
    %2678 = vmatprep.subr.mxu0 0.0
    %2679 = vmatpush1.msra.mxu0 0.0
    %2680 = vmatprep.subr.mxu0 0.0
    %2681 = vmatpush1.msra.mxu0 0.0
    %2682 = vmatprep.subr.mxu0 0.0
    %2683 = vmatpush1.msra.mxu0 0.0
    %2684 = vmatprep.subr.mxu0 0.0
    %2685 = vmatpush1.msra.mxu0 0.0
    %2686 = vmatprep.subr.mxu0 0.0
    %2687 = vmatpush1.msra.mxu0 0.0
    %2688 = vmatprep.subr.mxu0 0.0
    %2689 = vmatpush1.msra.mxu0 0.0
    %2690 = vmatprep.subr.mxu0 0.0
    %2691 = vmatpush1.msra.mxu0 0.0
    %2692 = vmatprep.subr.mxu0 0.0
    %2693 = vmatpush1.msra.mxu0 0.0
    %2694 = vmatprep.subr.mxu0 0.0
    %2695 = vmatpush1.msra.mxu0 0.0
    %2696 = vmatprep.subr.mxu0 0.0
    %2697 = vmatpush1.msra.mxu0 0.0
    %2698 = vmatprep.subr.mxu0 0.0
    %2699 = vmatpush1.msra.mxu0 0.0
    %2700 = vmatprep.subr.mxu0 0.0
    %2701 = vmatpush1.msra.mxu0 0.0
    %2702 = vmatprep.subr.mxu0 0.0
    %2703 = vmatpush1.msra.mxu0 0.0
    %2704 = vmatprep.subr.mxu0 0.0
    %2705 = vmatpush1.msra.mxu0 0.0
    %2706 = vmatprep.subr.mxu0 0.0
    %2707 = vmatpush1.msra.mxu0 0.0
    %2708 = vmatprep.mubr.f32.mxu0 0.0
    %2709 = vmatmul.mubr.f32.gmra.mrb[0].mxu0 %v2642
    %v2710 = vpop.f32.mrb[0].mxu0
    %v2711 = vadd.f32 %v2179, %v2710
    %v2712 = vpop.f32.mrb[0].mxu0
    %v2713 = vadd.f32 %v2183, %v2712
    %2714 = vdwg.mxu0
    %2716 = vrot.lane.b32.xlu0 %v2711, 32
    %v2717 = vpop.permute.xlu0 %2716
    %v2719 = vadd.f32 %v2711, %v2717
    %v2720 = vxor.u32 %v2719, 2147483648
    %v2721 = vmul.f32 %v2720, 1.442695
    %v2722 = vpow.pop %v2721
    %v2723 = vadd.f32 %v2722, 1.0
    %v2724 = vrcp.pop %v2723
    %v2725 = vmul.f32 1.0, %v2724
    %2727 = vrot.lane.b32.xlu0 %v2713, 32
    %v2728 = vpop.permute.xlu0 %2727
    %v2730 = vadd.f32 %v2711, %v2728
    %v2731 = vxor.u32 %v2730, 2147483648
    %v2732 = vmul.f32 %v2731, 1.442695
    %v2733 = vpow.pop %v2732
    %v2734 = vadd.f32 %v2733, 1.0
    %v2735 = vrcp.pop %v2734
    %v2736 = vmul.f32 1.0, %v2735
    %2737 = vrot.lane.b32.xlu0 %v2713, 96
    %v2738 = vpop.permute.xlu0 %2737
    %v2740 = vmul.f32 %v2725, %v2738
    %2742 = vrot.lane.b32.xlu0 %v2740, 64
    %v2743 = vpop.permute.xlu0 %2742
    %v2745 = vadd.f32 %v2711, %v2743
    %v2746 = vtanh.pop %v2745
    %v2747 = vsub.f32 1.0, %v2736
    %2749 = vrot.lane.b32.xlu0 %v2746, 96
    %v2750 = vpop.permute.xlu0 %2749
    %v2752 = vmul.f32 %v2747, %v2750
    %v2753 = vmul.f32 %v2736, %v2299
    %v2754 = vadd.f32 %v2752, %v2753
    %2756 = vrot.lane.b32.xlu0 %v2754, 96
    %v2757 = vpop.permute.xlu0 %2756
    %v2759 = vsel %vm219, %v2757, %v2448
    %v2761 = vsel %vm232, %v2759, 0
    %2763 = vmatprep.subr.mxu0 %v2302
    %2764 = vmatpush1.msra.mxu0 %v2301
    %2765 = vmatprep.subr.mxu0 %v2304
    %2766 = vmatpush1.msra.mxu0 %v2303
    %2767 = vmatprep.subr.mxu0 %v2306
    %2768 = vmatpush1.msra.mxu0 %v2305
    %2769 = vmatprep.subr.mxu0 %v2308
    %2770 = vmatpush1.msra.mxu0 %v2307
    %2771 = vmatprep.subr.mxu0 %v2310
    %2772 = vmatpush1.msra.mxu0 %v2309
    %2773 = vmatprep.subr.mxu0 %v2312
    %2774 = vmatpush1.msra.mxu0 %v2311
    %2775 = vmatprep.subr.mxu0 %v2314
    %2776 = vmatpush1.msra.mxu0 %v2313
    %2777 = vmatprep.subr.mxu0 %v2316
    %2778 = vmatpush1.msra.mxu0 %v2315
    %2779 = vmatprep.subr.mxu0 0.0
    %2780 = vmatpush1.msra.mxu0 0.0
    %2781 = vmatprep.subr.mxu0 0.0
    %2782 = vmatpush1.msra.mxu0 0.0
    %2783 = vmatprep.subr.mxu0 0.0
    %2784 = vmatpush1.msra.mxu0 0.0
    %2785 = vmatprep.subr.mxu0 0.0
    %2786 = vmatpush1.msra.mxu0 0.0
    %2787 = vmatprep.subr.mxu0 0.0
    %2788 = vmatpush1.msra.mxu0 0.0
    %2789 = vmatprep.subr.mxu0 0.0
    %2790 = vmatpush1.msra.mxu0 0.0
    %2791 = vmatprep.subr.mxu0 0.0
    %2792 = vmatpush1.msra.mxu0 0.0
    %2793 = vmatprep.subr.mxu0 0.0
    %2794 = vmatpush1.msra.mxu0 0.0
    %2795 = vmatprep.subr.mxu0 0.0
    %2796 = vmatpush1.msra.mxu0 0.0
    %2797 = vmatprep.subr.mxu0 0.0
    %2798 = vmatpush1.msra.mxu0 0.0
    %2799 = vmatprep.subr.mxu0 0.0
    %2800 = vmatpush1.msra.mxu0 0.0
    %2801 = vmatprep.subr.mxu0 0.0
    %2802 = vmatpush1.msra.mxu0 0.0
    %2803 = vmatprep.subr.mxu0 0.0
    %2804 = vmatpush1.msra.mxu0 0.0
    %2805 = vmatprep.subr.mxu0 0.0
    %2806 = vmatpush1.msra.mxu0 0.0
    %2807 = vmatprep.subr.mxu0 0.0
    %2808 = vmatpush1.msra.mxu0 0.0
    %2809 = vmatprep.subr.mxu0 0.0
    %2810 = vmatpush1.msra.mxu0 0.0
    %2811 = vmatprep.subr.mxu0 0.0
    %2812 = vmatpush1.msra.mxu0 0.0
    %2813 = vmatprep.subr.mxu0 0.0
    %2814 = vmatpush1.msra.mxu0 0.0
    %2815 = vmatprep.subr.mxu0 0.0
    %2816 = vmatpush1.msra.mxu0 0.0
    %2817 = vmatprep.subr.mxu0 0.0
    %2818 = vmatpush1.msra.mxu0 0.0
    %2819 = vmatprep.subr.mxu0 0.0
    %2820 = vmatpush1.msra.mxu0 0.0
    %2821 = vmatprep.subr.mxu0 0.0
    %2822 = vmatpush1.msra.mxu0 0.0
    %2823 = vmatprep.subr.mxu0 0.0
    %2824 = vmatpush1.msra.mxu0 0.0
    %2825 = vmatprep.subr.mxu0 0.0
    %2826 = vmatpush1.msra.mxu0 0.0
    %2827 = vmatprep.mubr.f32.mxu0 0.0
    %2828 = vmatmul.mubr.f32.gmra.mrb[0].mxu0 %v2761
    %v2829 = vpop.f32.mrb[0].mxu0
    %v2830 = vadd.f32 %v2328, %v2829
    %v2831 = vpop.f32.mrb[0].mxu0
    %v2832 = vadd.f32 %v2332, %v2831
    %2833 = vdwg.mxu0
    %2835 = vrot.lane.b32.xlu0 %v2830, 32
    %v2836 = vpop.permute.xlu0 %2835
    %v2838 = vadd.f32 %v2830, %v2836
    %v2839 = vxor.u32 %v2838, 2147483648
    %v2840 = vmul.f32 %v2839, 1.442695
    %v2841 = vpow.pop %v2840
    %v2842 = vadd.f32 %v2841, 1.0
    %v2843 = vrcp.pop %v2842
    %v2844 = vmul.f32 1.0, %v2843
    %2846 = vrot.lane.b32.xlu0 %v2832, 32
    %v2847 = vpop.permute.xlu0 %2846
    %v2849 = vadd.f32 %v2830, %v2847
    %v2850 = vxor.u32 %v2849, 2147483648
    %v2851 = vmul.f32 %v2850, 1.442695
    %v2852 = vpow.pop %v2851
    %v2853 = vadd.f32 %v2852, 1.0
    %v2854 = vrcp.pop %v2853
    %v2855 = vmul.f32 1.0, %v2854
    %2856 = vrot.lane.b32.xlu0 %v2832, 96
    %v2857 = vpop.permute.xlu0 %2856
    %v2859 = vmul.f32 %v2844, %v2857
    %2861 = vrot.lane.b32.xlu0 %v2859, 64
    %v2862 = vpop.permute.xlu0 %2861
    %v2864 = vadd.f32 %v2830, %v2862
    %v2865 = vtanh.pop %v2864
    %v2866 = vsub.f32 1.0, %v2855
    %2868 = vrot.lane.b32.xlu0 %v2865, 96
    %v2869 = vpop.permute.xlu0 %2868
    %v2871 = vmul.f32 %v2866, %v2869
    %v2872 = vmul.f32 %v2855, %v2448
    %v2873 = vadd.f32 %v2871, %v2872
    %2875 = vrot.lane.b32.xlu0 %v2873, 96
    %v2876 = vpop.permute.xlu0 %2875
    %v2877 = vsel %vm219, %v2876, 0
    %2879 = vmatprep.subr.mxu0 0.0
    %2880 = vmatpush1.msra.mxu0 %v2449
    %2881 = vmatprep.subr.mxu0 0.0
    %2882 = vmatpush1.msra.mxu0 %v2450
    %2883 = vmatprep.subr.mxu0 0.0
    %2884 = vmatpush1.msra.mxu0 %v2451
    %2885 = vmatprep.subr.mxu0 0.0
    %2886 = vmatpush1.msra.mxu0 %v2452
    %2887 = vmatprep.subr.mxu0 0.0
    %2888 = vmatpush1.msra.mxu0 0.0
    %2889 = vmatprep.subr.mxu0 0.0
    %2890 = vmatpush1.msra.mxu0 0.0
    %2891 = vmatprep.subr.mxu0 0.0
    %2892 = vmatpush1.msra.mxu0 0.0
    %2893 = vmatprep.subr.mxu0 0.0
    %2894 = vmatpush1.msra.mxu0 0.0
    %2895 = vmatprep.subr.mxu0 0.0
    %2896 = vmatpush1.msra.mxu0 0.0
    %2897 = vmatprep.subr.mxu0 0.0
    %2898 = vmatpush1.msra.mxu0 0.0
    %2899 = vmatprep.subr.mxu0 0.0
    %2900 = vmatpush1.msra.mxu0 0.0
    %2901 = vmatprep.subr.mxu0 0.0
    %2902 = vmatpush1.msra.mxu0 0.0
    %2903 = vmatprep.subr.mxu0 0.0
    %2904 = vmatpush1.msra.mxu0 0.0
    %2905 = vmatprep.subr.mxu0 0.0
    %2906 = vmatpush1.msra.mxu0 0.0
    %2907 = vmatprep.subr.mxu0 0.0
    %2908 = vmatpush1.msra.mxu0 0.0
    %2909 = vmatprep.subr.mxu0 0.0
    %2910 = vmatpush1.msra.mxu0 0.0
    %2911 = vmatprep.subr.mxu0 0.0
    %2912 = vmatpush1.msra.mxu0 0.0
    %2913 = vmatprep.subr.mxu0 0.0
    %2914 = vmatpush1.msra.mxu0 0.0
    %2915 = vmatprep.subr.mxu0 0.0
    %2916 = vmatpush1.msra.mxu0 0.0
    %2917 = vmatprep.subr.mxu0 0.0
    %2918 = vmatpush1.msra.mxu0 0.0
    %2919 = vmatprep.subr.mxu0 0.0
    %2920 = vmatpush1.msra.mxu0 0.0
    %2921 = vmatprep.subr.mxu0 0.0
    %2922 = vmatpush1.msra.mxu0 0.0
    %2923 = vmatprep.subr.mxu0 0.0
    %2924 = vmatpush1.msra.mxu0 0.0
    %2925 = vmatprep.subr.mxu0 0.0
    %2926 = vmatpush1.msra.mxu0 0.0
    %2927 = vmatprep.subr.mxu0 0.0
    %2928 = vmatpush1.msra.mxu0 0.0
    %2929 = vmatprep.subr.mxu0 0.0
    %2930 = vmatpush1.msra.mxu0 0.0
    %2931 = vmatprep.subr.mxu0 0.0
    %2932 = vmatpush1.msra.mxu0 0.0
    %2933 = vmatprep.subr.mxu0 0.0
    %2934 = vmatpush1.msra.mxu0 0.0
    %2935 = vmatprep.subr.mxu0 0.0
    %2936 = vmatpush1.msra.mxu0 0.0
    %2937 = vmatprep.subr.mxu0 0.0
    %2938 = vmatpush1.msra.mxu0 0.0
    %2939 = vmatprep.subr.mxu0 0.0
    %2940 = vmatpush1.msra.mxu0 0.0
    %2941 = vmatprep.subr.mxu0 0.0
    %2942 = vmatpush1.msra.mxu0 0.0
    %2943 = vmatprep.mubr.f32.mxu0 0.0
    %2944 = vmatmul.mubr.f32.gmra.mrb[0].mxu0 %v2877
    %v2945 = vpop.f32.mrb[0].mxu0
    %v2946 = vadd.f32 %v2458, %v2945
    %v2947 = vpop.f32.mrb[0].mxu0
    %2948 = vdwg.mxu0
    %v2949 = vsel %vm2535, %v2946, -inf
    %2950 = vmax.xlane.f32.xlu0 %v2949
    %v2951 = vpop.xlane.xlu0 %2950
    %vm2952 = vcmp.ge.f32.partialorder %v2946, %v2951
    %v2953 = vsel %vm2952, %v102, 20
    %v2954 = vsel %vm2535, %v2953, 2147483647
    %v2955 = vand.u32 %v2954, 65535
    %v2956 = vshra.s32 %v2954, 16
    %v2957 = vcvt.s32.f32 %v2955
    %v2958 = vcvt.s32.f32 %v2956
    %2959 = vmin.xlane.f32.xlu0 %v2958
    %v2960 = vpop.xlane.xlu0 %2959
    %vm2961 = vcmp.eq.f32.partialorder %v2958, %v2960
    %v2962 = vsel %vm2961, %v2957, inf
    %2963 = vmin.xlane.f32.xlu0 %v2962
    %v2964 = vpop.xlane.xlu0 %2963
    %v2965 = vcvt.f32.s32 %v2964
    %v2966 = vcvt.f32.s32 %v2960
    %v2967 = vshll.u32 %v2966, 16
    %v2968 = vadd.s32 %v2967, %v2965
    %vm2969 = vcmp.eq.s32.totalorder %v102, %v2968
    %v2970 = vsel %vm2969, 1, 0
    %v2971 = vcvt.s32.f32 %v2970
    %v2973 = vsel %vm2562, %v2971, 0
    %2975 = vmatprep.subr.mxu0 0.0
    %2976 = vmatpush1.msra.mxu0 %v2559
    %2977 = vmatprep.subr.mxu0 0.0
    %2978 = vmatpush1.msra.mxu0 %v2560
    %2979 = vmatprep.subr.mxu0 0.0
    %2980 = vmatpush1.msra.mxu0 %v2568
    %2981 = vmatprep.subr.mxu0 0.0
    %2982 = vmatpush1.msra.mxu0 0.0
    %2983 = vmatprep.subr.mxu0 0.0
    %2984 = vmatpush1.msra.mxu0 0.0
    %2985 = vmatprep.subr.mxu0 0.0
    %2986 = vmatpush1.msra.mxu0 0.0
    %2987 = vmatprep.subr.mxu0 0.0
    %2988 = vmatpush1.msra.mxu0 0.0
    %2989 = vmatprep.subr.mxu0 0.0
    %2990 = vmatpush1.msra.mxu0 0.0
    %2991 = vmatprep.subr.mxu0 0.0
    %2992 = vmatpush1.msra.mxu0 0.0
    %2993 = vmatprep.subr.mxu0 0.0
    %2994 = vmatpush1.msra.mxu0 0.0
    %2995 = vmatprep.subr.mxu0 0.0
    %2996 = vmatpush1.msra.mxu0 0.0
    %2997 = vmatprep.subr.mxu0 0.0
    %2998 = vmatpush1.msra.mxu0 0.0
    %2999 = vmatprep.subr.mxu0 0.0
    %3000 = vmatpush1.msra.mxu0 0.0
    %3001 = vmatprep.subr.mxu0 0.0
    %3002 = vmatpush1.msra.mxu0 0.0
    %3003 = vmatprep.subr.mxu0 0.0
    %3004 = vmatpush1.msra.mxu0 0.0
    %3005 = vmatprep.subr.mxu0 0.0
    %3006 = vmatpush1.msra.mxu0 0.0
    %3007 = vmatprep.subr.mxu0 0.0
    %3008 = vmatpush1.msra.mxu0 0.0
    %3009 = vmatprep.subr.mxu0 0.0
    %3010 = vmatpush1.msra.mxu0 0.0
    %3011 = vmatprep.subr.mxu0 0.0
    %3012 = vmatpush1.msra.mxu0 0.0
    %3013 = vmatprep.subr.mxu0 0.0
    %3014 = vmatpush1.msra.mxu0 0.0
    %3015 = vmatprep.subr.mxu0 0.0
    %3016 = vmatpush1.msra.mxu0 0.0
    %3017 = vmatprep.subr.mxu0 0.0
    %3018 = vmatpush1.msra.mxu0 0.0
    %3019 = vmatprep.subr.mxu0 0.0
    %3020 = vmatpush1.msra.mxu0 0.0
    %3021 = vmatprep.subr.mxu0 0.0
    %3022 = vmatpush1.msra.mxu0 0.0
    %3023 = vmatprep.subr.mxu0 0.0
    %3024 = vmatpush1.msra.mxu0 0.0
    %3025 = vmatprep.subr.mxu0 0.0
    %3026 = vmatpush1.msra.mxu0 0.0
    %3027 = vmatprep.subr.mxu0 0.0
    %3028 = vmatpush1.msra.mxu0 0.0
    %3029 = vmatprep.subr.mxu0 0.0
    %3030 = vmatpush1.msra.mxu0 0.0
    %3031 = vmatprep.subr.mxu0 0.0
    %3032 = vmatpush1.msra.mxu0 0.0
    %3033 = vmatprep.subr.mxu0 0.0
    %3034 = vmatpush1.msra.mxu0 0.0
    %3035 = vmatprep.subr.mxu0 0.0
    %3036 = vmatpush1.msra.mxu0 0.0
    %3037 = vmatprep.subr.mxu0 0.0
    %3038 = vmatpush1.msra.mxu0 0.0
    %3039 = vmatprep.mubr.f32.mxu0 0.0
    %3040 = vmatmul.mubr.f32.gmra.mrb[0].mxu0 %v2973
    %v3041 = vpop.f32.mrb[0].mxu0
    %v3042 = vadd.f32 0.0, %v3041
    %v3043 = vpop.f32.mrb[0].mxu0
    %3044 = vdwg.mxu0
    %v3045 = vsel %vm219, %v3042, %v2754
    %v3047 = vsel %vm232, %v3045, 0
    %3049 = vmatprep.subr.mxu0 %v2158
    %3050 = vmatpush1.msra.mxu0 %v2157
    %3051 = vmatprep.subr.mxu0 %v2160
    %3052 = vmatpush1.msra.mxu0 %v2159
    %3053 = vmatprep.subr.mxu0 %v2162
    %3054 = vmatpush1.msra.mxu0 %v2161
    %3055 = vmatprep.subr.mxu0 %v2164
    %3056 = vmatpush1.msra.mxu0 %v2163
    %3057 = vmatprep.subr.mxu0 %v2166
    %3058 = vmatpush1.msra.mxu0 %v2165
    %3059 = vmatprep.subr.mxu0 %v2168
    %3060 = vmatpush1.msra.mxu0 %v2167
    %3061 = vmatprep.subr.mxu0 %v2170
    %3062 = vmatpush1.msra.mxu0 %v2169
    %3063 = vmatprep.subr.mxu0 %v2172
    %3064 = vmatpush1.msra.mxu0 %v2171
    %3065 = vmatprep.subr.mxu0 0.0
    %3066 = vmatpush1.msra.mxu0 0.0
    %3067 = vmatprep.subr.mxu0 0.0
    %3068 = vmatpush1.msra.mxu0 0.0
    %3069 = vmatprep.subr.mxu0 0.0
    %3070 = vmatpush1.msra.mxu0 0.0
    %3071 = vmatprep.subr.mxu0 0.0
    %3072 = vmatpush1.msra.mxu0 0.0
    %3073 = vmatprep.subr.mxu0 0.0
    %3074 = vmatpush1.msra.mxu0 0.0
    %3075 = vmatprep.subr.mxu0 0.0
    %3076 = vmatpush1.msra.mxu0 0.0
    %3077 = vmatprep.subr.mxu0 0.0
    %3078 = vmatpush1.msra.mxu0 0.0
    %3079 = vmatprep.subr.mxu0 0.0
    %3080 = vmatpush1.msra.mxu0 0.0
    %3081 = vmatprep.subr.mxu0 0.0
    %3082 = vmatpush1.msra.mxu0 0.0
    %3083 = vmatprep.subr.mxu0 0.0
    %3084 = vmatpush1.msra.mxu0 0.0
    %3085 = vmatprep.subr.mxu0 0.0
    %3086 = vmatpush1.msra.mxu0 0.0
    %3087 = vmatprep.subr.mxu0 0.0
    %3088 = vmatpush1.msra.mxu0 0.0
    %3089 = vmatprep.subr.mxu0 0.0
    %3090 = vmatpush1.msra.mxu0 0.0
    %3091 = vmatprep.subr.mxu0 0.0
    %3092 = vmatpush1.msra.mxu0 0.0
    %3093 = vmatprep.subr.mxu0 0.0
    %3094 = vmatpush1.msra.mxu0 0.0
    %3095 = vmatprep.subr.mxu0 0.0
    %3096 = vmatpush1.msra.mxu0 0.0
    %3097 = vmatprep.subr.mxu0 0.0
    %3098 = vmatpush1.msra.mxu0 0.0
    %3099 = vmatprep.subr.mxu0 0.0
    %3100 = vmatpush1.msra.mxu0 0.0
    %3101 = vmatprep.subr.mxu0 0.0
    %3102 = vmatpush1.msra.mxu0 0.0
    %3103 = vmatprep.subr.mxu0 0.0
    %3104 = vmatpush1.msra.mxu0 0.0
    %3105 = vmatprep.subr.mxu0 0.0
    %3106 = vmatpush1.msra.mxu0 0.0
    %3107 = vmatprep.subr.mxu0 0.0
    %3108 = vmatpush1.msra.mxu0 0.0
    %3109 = vmatprep.subr.mxu0 0.0
    %3110 = vmatpush1.msra.mxu0 0.0
    %3111 = vmatprep.subr.mxu0 0.0
    %3112 = vmatpush1.msra.mxu0 0.0
    %3113 = vmatprep.mubr.f32.mxu0 0.0
    %3114 = vmatmul.mubr.f32.gmra.mrb[0].mxu0 %v3047
    %v3115 = vpop.f32.mrb[0].mxu0
    %v3116 = vadd.f32 %v2179, %v3115
    %v3117 = vpop.f32.mrb[0].mxu0
    %v3118 = vadd.f32 %v2183, %v3117
    %3119 = vdwg.mxu0
    %3121 = vrot.lane.b32.xlu0 %v3116, 32
    %v3122 = vpop.permute.xlu0 %3121
    %v3124 = vadd.f32 %v3116, %v3122
    %v3125 = vxor.u32 %v3124, 2147483648
    %v3126 = vmul.f32 %v3125, 1.442695
    %v3127 = vpow.pop %v3126
    %v3128 = vadd.f32 %v3127, 1.0
    %v3129 = vrcp.pop %v3128
    %v3130 = vmul.f32 1.0, %v3129
    %3132 = vrot.lane.b32.xlu0 %v3118, 32
    %v3133 = vpop.permute.xlu0 %3132
    %v3135 = vadd.f32 %v3116, %v3133
    %v3136 = vxor.u32 %v3135, 2147483648
    %v3137 = vmul.f32 %v3136, 1.442695
    %v3138 = vpow.pop %v3137
    %v3139 = vadd.f32 %v3138, 1.0
    %v3140 = vrcp.pop %v3139
    %v3141 = vmul.f32 1.0, %v3140
    %3142 = vrot.lane.b32.xlu0 %v3118, 96
    %v3143 = vpop.permute.xlu0 %3142
    %v3145 = vmul.f32 %v3130, %v3143
    %3147 = vrot.lane.b32.xlu0 %v3145, 64
    %v3148 = vpop.permute.xlu0 %3147
    %v3150 = vadd.f32 %v3116, %v3148
    %v3151 = vtanh.pop %v3150
    %v3152 = vsub.f32 1.0, %v3141
    %3154 = vrot.lane.b32.xlu0 %v3151, 96
    %v3155 = vpop.permute.xlu0 %3154
    %v3157 = vmul.f32 %v3152, %v3155
    %v3158 = vmul.f32 %v3141, %v2754
    %v3159 = vadd.f32 %v3157, %v3158
    %3161 = vrot.lane.b32.xlu0 %v3159, 96
    %v3162 = vpop.permute.xlu0 %3161
    %v3164 = vsel %vm219, %v3162, %v2873
    %v3166 = vsel %vm232, %v3164, 0
    %3168 = vmatprep.subr.mxu0 %v2302
    %3169 = vmatpush1.msra.mxu0 %v2301
    %3170 = vmatprep.subr.mxu0 %v2304
    %3171 = vmatpush1.msra.mxu0 %v2303
    %3172 = vmatprep.subr.mxu0 %v2306
    %3173 = vmatpush1.msra.mxu0 %v2305
    %3174 = vmatprep.subr.mxu0 %v2308
    %3175 = vmatpush1.msra.mxu0 %v2307
    %3176 = vmatprep.subr.mxu0 %v2310
    %3177 = vmatpush1.msra.mxu0 %v2309
    %3178 = vmatprep.subr.mxu0 %v2312
    %3179 = vmatpush1.msra.mxu0 %v2311
    %3180 = vmatprep.subr.mxu0 %v2314
    %3181 = vmatpush1.msra.mxu0 %v2313
    %3182 = vmatprep.subr.mxu0 %v2316
    %3183 = vmatpush1.msra.mxu0 %v2315
    %3184 = vmatprep.subr.mxu0 0.0
    %3185 = vmatpush1.msra.mxu0 0.0
    %3186 = vmatprep.subr.mxu0 0.0
    %3187 = vmatpush1.msra.mxu0 0.0
    %3188 = vmatprep.subr.mxu0 0.0
    %3189 = vmatpush1.msra.mxu0 0.0
    %3190 = vmatprep.subr.mxu0 0.0
    %3191 = vmatpush1.msra.mxu0 0.0
    %3192 = vmatprep.subr.mxu0 0.0
    %3193 = vmatpush1.msra.mxu0 0.0
    %3194 = vmatprep.subr.mxu0 0.0
    %3195 = vmatpush1.msra.mxu0 0.0
    %3196 = vmatprep.subr.mxu0 0.0
    %3197 = vmatpush1.msra.mxu0 0.0
    %3198 = vmatprep.subr.mxu0 0.0
    %3199 = vmatpush1.msra.mxu0 0.0
    %3200 = vmatprep.subr.mxu0 0.0
    %3201 = vmatpush1.msra.mxu0 0.0
    %3202 = vmatprep.subr.mxu0 0.0
    %3203 = vmatpush1.msra.mxu0 0.0
    %3204 = vmatprep.subr.mxu0 0.0
    %3205 = vmatpush1.msra.mxu0 0.0
    %3206 = vmatprep.subr.mxu0 0.0
    %3207 = vmatpush1.msra.mxu0 0.0
    %3208 = vmatprep.subr.mxu0 0.0
    %3209 = vmatpush1.msra.mxu0 0.0
    %3210 = vmatprep.subr.mxu0 0.0
    %3211 = vmatpush1.msra.mxu0 0.0
    %3212 = vmatprep.subr.mxu0 0.0
    %3213 = vmatpush1.msra.mxu0 0.0
    %3214 = vmatprep.subr.mxu0 0.0
    %3215 = vmatpush1.msra.mxu0 0.0
    %3216 = vmatprep.subr.mxu0 0.0
    %3217 = vmatpush1.msra.mxu0 0.0
    %3218 = vmatprep.subr.mxu0 0.0
    %3219 = vmatpush1.msra.mxu0 0.0
    %3220 = vmatprep.subr.mxu0 0.0
    %3221 = vmatpush1.msra.mxu0 0.0
    %3222 = vmatprep.subr.mxu0 0.0
    %3223 = vmatpush1.msra.mxu0 0.0
    %3224 = vmatprep.subr.mxu0 0.0
    %3225 = vmatpush1.msra.mxu0 0.0
    %3226 = vmatprep.subr.mxu0 0.0
    %3227 = vmatpush1.msra.mxu0 0.0
    %3228 = vmatprep.subr.mxu0 0.0
    %3229 = vmatpush1.msra.mxu0 0.0
    %3230 = vmatprep.subr.mxu0 0.0
    %3231 = vmatpush1.msra.mxu0 0.0
    %3232 = vmatprep.mubr.f32.mxu0 0.0
    %3233 = vmatmul.mubr.f32.gmra.mrb[0].mxu0 %v3166
    %v3234 = vpop.f32.mrb[0].mxu0
    %v3235 = vadd.f32 %v2328, %v3234
    %v3236 = vpop.f32.mrb[0].mxu0
    %v3237 = vadd.f32 %v2332, %v3236
    %3238 = vdwg.mxu0
    %3240 = vrot.lane.b32.xlu0 %v3235, 32
    %v3241 = vpop.permute.xlu0 %3240
    %v3243 = vadd.f32 %v3235, %v3241
    %v3244 = vxor.u32 %v3243, 2147483648
    %v3245 = vmul.f32 %v3244, 1.442695
    %v3246 = vpow.pop %v3245
    %v3247 = vadd.f32 %v3246, 1.0
    %v3248 = vrcp.pop %v3247
    %v3249 = vmul.f32 1.0, %v3248
    %3251 = vrot.lane.b32.xlu0 %v3237, 32
    %v3252 = vpop.permute.xlu0 %3251
    %v3254 = vadd.f32 %v3235, %v3252
    %v3255 = vxor.u32 %v3254, 2147483648
    %v3256 = vmul.f32 %v3255, 1.442695
    %v3257 = vpow.pop %v3256
    %v3258 = vadd.f32 %v3257, 1.0
    %v3259 = vrcp.pop %v3258
    %v3260 = vmul.f32 1.0, %v3259
    %3261 = vrot.lane.b32.xlu0 %v3237, 96
    %v3262 = vpop.permute.xlu0 %3261
    %v3264 = vmul.f32 %v3249, %v3262
    %3266 = vrot.lane.b32.xlu0 %v3264, 64
    %v3267 = vpop.permute.xlu0 %3266
    %v3269 = vadd.f32 %v3235, %v3267
    %v3270 = vtanh.pop %v3269
    %v3271 = vsub.f32 1.0, %v3260
    %3273 = vrot.lane.b32.xlu0 %v3270, 96
    %v3274 = vpop.permute.xlu0 %3273
    %v3276 = vmul.f32 %v3271, %v3274
    %v3277 = vmul.f32 %v3260, %v2873
    %v3278 = vadd.f32 %v3276, %v3277
    %3280 = vrot.lane.b32.xlu0 %v3278, 96
    %v3281 = vpop.permute.xlu0 %3280
    %v3282 = vsel %vm219, %v3281, 0
    %3284 = vmatprep.subr.mxu0 0.0
    %3285 = vmatpush1.msra.mxu0 %v2449
    %3286 = vmatprep.subr.mxu0 0.0
    %3287 = vmatpush1.msra.mxu0 %v2450
    %3288 = vmatprep.subr.mxu0 0.0
    %3289 = vmatpush1.msra.mxu0 %v2451
    %3290 = vmatprep.subr.mxu0 0.0
    %3291 = vmatpush1.msra.mxu0 %v2452
    %3292 = vmatprep.subr.mxu0 0.0
    %3293 = vmatpush1.msra.mxu0 0.0
    %3294 = vmatprep.subr.mxu0 0.0
    %3295 = vmatpush1.msra.mxu0 0.0
    %3296 = vmatprep.subr.mxu0 0.0
    %3297 = vmatpush1.msra.mxu0 0.0
    %3298 = vmatprep.subr.mxu0 0.0
    %3299 = vmatpush1.msra.mxu0 0.0
    %3300 = vmatprep.subr.mxu0 0.0
    %3301 = vmatpush1.msra.mxu0 0.0
    %3302 = vmatprep.subr.mxu0 0.0
    %3303 = vmatpush1.msra.mxu0 0.0
    %3304 = vmatprep.subr.mxu0 0.0
    %3305 = vmatpush1.msra.mxu0 0.0
    %3306 = vmatprep.subr.mxu0 0.0
    %3307 = vmatpush1.msra.mxu0 0.0
    %3308 = vmatprep.subr.mxu0 0.0
    %3309 = vmatpush1.msra.mxu0 0.0
    %3310 = vmatprep.subr.mxu0 0.0
    %3311 = vmatpush1.msra.mxu0 0.0
    %3312 = vmatprep.subr.mxu0 0.0
    %3313 = vmatpush1.msra.mxu0 0.0
    %3314 = vmatprep.subr.mxu0 0.0
    %3315 = vmatpush1.msra.mxu0 0.0
    %3316 = vmatprep.subr.mxu0 0.0
    %3317 = vmatpush1.msra.mxu0 0.0
    %3318 = vmatprep.subr.mxu0 0.0
    %3319 = vmatpush1.msra.mxu0 0.0
    %3320 = vmatprep.subr.mxu0 0.0
    %3321 = vmatpush1.msra.mxu0 0.0
    %3322 = vmatprep.subr.mxu0 0.0
    %3323 = vmatpush1.msra.mxu0 0.0
    %3324 = vmatprep.subr.mxu0 0.0
    %3325 = vmatpush1.msra.mxu0 0.0
    %3326 = vmatprep.subr.mxu0 0.0
    %3327 = vmatpush1.msra.mxu0 0.0
    %3328 = vmatprep.subr.mxu0 0.0
    %3329 = vmatpush1.msra.mxu0 0.0
    %3330 = vmatprep.subr.mxu0 0.0
    %3331 = vmatpush1.msra.mxu0 0.0
    %3332 = vmatprep.subr.mxu0 0.0
    %3333 = vmatpush1.msra.mxu0 0.0
    %3334 = vmatprep.subr.mxu0 0.0
    %3335 = vmatpush1.msra.mxu0 0.0
    %3336 = vmatprep.subr.mxu0 0.0
    %3337 = vmatpush1.msra.mxu0 0.0
    %3338 = vmatprep.subr.mxu0 0.0
    %3339 = vmatpush1.msra.mxu0 0.0
    %3340 = vmatprep.subr.mxu0 0.0
    %3341 = vmatpush1.msra.mxu0 0.0
    %3342 = vmatprep.subr.mxu0 0.0
    %3343 = vmatpush1.msra.mxu0 0.0
    %3344 = vmatprep.subr.mxu0 0.0
    %3345 = vmatpush1.msra.mxu0 0.0
    %3346 = vmatprep.subr.mxu0 0.0
    %3347 = vmatpush1.msra.mxu0 0.0
    %3348 = vmatprep.mubr.f32.mxu0 0.0
    %3349 = vmatmul.mubr.f32.gmra.mrb[0].mxu0 %v3282
    %v3350 = vpop.f32.mrb[0].mxu0
    %v3351 = vadd.f32 %v2458, %v3350
    %v3352 = vpop.f32.mrb[0].mxu0
    %3353 = vdwg.mxu0
    %v3354 = vsel %vm2535, %v3351, -inf
    %3355 = vmax.xlane.f32.xlu0 %v3354
    %v3356 = vpop.xlane.xlu0 %3355
    %vm3357 = vcmp.ge.f32.partialorder %v3351, %v3356
    %v3358 = vsel %vm3357, %v102, 20
    %v3359 = vsel %vm2535, %v3358, 2147483647
    %v3360 = vand.u32 %v3359, 65535
    %v3361 = vshra.s32 %v3359, 16
    %v3362 = vcvt.s32.f32 %v3360
    %v3363 = vcvt.s32.f32 %v3361
    %3364 = vmin.xlane.f32.xlu0 %v3363
    %v3365 = vpop.xlane.xlu0 %3364
    %vm3366 = vcmp.eq.f32.partialorder %v3363, %v3365
    %v3367 = vsel %vm3366, %v3362, inf
    %3368 = vmin.xlane.f32.xlu0 %v3367
    %v3369 = vpop.xlane.xlu0 %3368
    %v3370 = vcvt.f32.s32 %v3369
    %v3371 = vcvt.f32.s32 %v3365
    %v3372 = vshll.u32 %v3371, 16
    %v3373 = vadd.s32 %v3372, %v3370
    %vm3374 = vcmp.eq.s32.totalorder %v102, %v3373
    %v3375 = vsel %vm3374, 1, 0
    %v3376 = vcvt.s32.f32 %v3375
    %v3378 = vsel %vm2562, %v3376, 0
    %3380 = vmatprep.subr.mxu0 0.0
    %3381 = vmatpush1.msra.mxu0 %v2559
    %3382 = vmatprep.subr.mxu0 0.0
    %3383 = vmatpush1.msra.mxu0 %v2560
    %3384 = vmatprep.subr.mxu0 0.0
    %3385 = vmatpush1.msra.mxu0 %v2568
    %3386 = vmatprep.subr.mxu0 0.0
    %3387 = vmatpush1.msra.mxu0 0.0
    %3388 = vmatprep.subr.mxu0 0.0
    %3389 = vmatpush1.msra.mxu0 0.0
    %3390 = vmatprep.subr.mxu0 0.0
    %3391 = vmatpush1.msra.mxu0 0.0
    %3392 = vmatprep.subr.mxu0 0.0
    %3393 = vmatpush1.msra.mxu0 0.0
    %3394 = vmatprep.subr.mxu0 0.0
    %3395 = vmatpush1.msra.mxu0 0.0
    %3396 = vmatprep.subr.mxu0 0.0
    %3397 = vmatpush1.msra.mxu0 0.0
    %3398 = vmatprep.subr.mxu0 0.0
    %3399 = vmatpush1.msra.mxu0 0.0
    %3400 = vmatprep.subr.mxu0 0.0
    %3401 = vmatpush1.msra.mxu0 0.0
    %3402 = vmatprep.subr.mxu0 0.0
    %3403 = vmatpush1.msra.mxu0 0.0
    %3404 = vmatprep.subr.mxu0 0.0
    %3405 = vmatpush1.msra.mxu0 0.0
    %3406 = vmatprep.subr.mxu0 0.0
    %3407 = vmatpush1.msra.mxu0 0.0
    %3408 = vmatprep.subr.mxu0 0.0
    %3409 = vmatpush1.msra.mxu0 0.0
    %3410 = vmatprep.subr.mxu0 0.0
    %3411 = vmatpush1.msra.mxu0 0.0
    %3412 = vmatprep.subr.mxu0 0.0
    %3413 = vmatpush1.msra.mxu0 0.0
    %3414 = vmatprep.subr.mxu0 0.0
    %3415 = vmatpush1.msra.mxu0 0.0
    %3416 = vmatprep.subr.mxu0 0.0
    %3417 = vmatpush1.msra.mxu0 0.0
    %3418 = vmatprep.subr.mxu0 0.0
    %3419 = vmatpush1.msra.mxu0 0.0
    %3420 = vmatprep.subr.mxu0 0.0
    %3421 = vmatpush1.msra.mxu0 0.0
    %3422 = vmatprep.subr.mxu0 0.0
    %3423 = vmatpush1.msra.mxu0 0.0
    %3424 = vmatprep.subr.mxu0 0.0
    %3425 = vmatpush1.msra.mxu0 0.0
    %3426 = vmatprep.subr.mxu0 0.0
    %3427 = vmatpush1.msra.mxu0 0.0
    %3428 = vmatprep.subr.mxu0 0.0
    %3429 = vmatpush1.msra.mxu0 0.0
    %3430 = vmatprep.subr.mxu0 0.0
    %3431 = vmatpush1.msra.mxu0 0.0
    %3432 = vmatprep.subr.mxu0 0.0
    %3433 = vmatpush1.msra.mxu0 0.0
    %3434 = vmatprep.subr.mxu0 0.0
    %3435 = vmatpush1.msra.mxu0 0.0
    %3436 = vmatprep.subr.mxu0 0.0
    %3437 = vmatpush1.msra.mxu0 0.0
    %3438 = vmatprep.subr.mxu0 0.0
    %3439 = vmatpush1.msra.mxu0 0.0
    %3440 = vmatprep.subr.mxu0 0.0
    %3441 = vmatpush1.msra.mxu0 0.0
    %3442 = vmatprep.subr.mxu0 0.0
    %3443 = vmatpush1.msra.mxu0 0.0
    %3444 = vmatprep.mubr.f32.mxu0 0.0
    %3445 = vmatmul.mubr.f32.gmra.mrb[0].mxu0 %v3378
    %v3446 = vpop.f32.mrb[0].mxu0
    %v3447 = vadd.f32 0.0, %v3446
    %v3448 = vpop.f32.mrb[0].mxu0
    %3449 = vdwg.mxu0
    %v3450 = vsel %vm219, %v3447, %v3159
    %v3452 = vsel %vm232, %v3450, 0
    %3454 = vmatprep.subr.mxu0 %v2158
    %3455 = vmatpush1.msra.mxu0 %v2157
    %3456 = vmatprep.subr.mxu0 %v2160
    %3457 = vmatpush1.msra.mxu0 %v2159
    %3458 = vmatprep.subr.mxu0 %v2162
    %3459 = vmatpush1.msra.mxu0 %v2161
    %3460 = vmatprep.subr.mxu0 %v2164
    %3461 = vmatpush1.msra.mxu0 %v2163
    %3462 = vmatprep.subr.mxu0 %v2166
    %3463 = vmatpush1.msra.mxu0 %v2165
    %3464 = vmatprep.subr.mxu0 %v2168
    %3465 = vmatpush1.msra.mxu0 %v2167
    %3466 = vmatprep.subr.mxu0 %v2170
    %3467 = vmatpush1.msra.mxu0 %v2169
    %3468 = vmatprep.subr.mxu0 %v2172
    %3469 = vmatpush1.msra.mxu0 %v2171
    %3470 = vmatprep.subr.mxu0 0.0
    %3471 = vmatpush1.msra.mxu0 0.0
    %3472 = vmatprep.subr.mxu0 0.0
    %3473 = vmatpush1.msra.mxu0 0.0
    %3474 = vmatprep.subr.mxu0 0.0
    %3475 = vmatpush1.msra.mxu0 0.0
    %3476 = vmatprep.subr.mxu0 0.0
    %3477 = vmatpush1.msra.mxu0 0.0
    %3478 = vmatprep.subr.mxu0 0.0
    %3479 = vmatpush1.msra.mxu0 0.0
    %3480 = vmatprep.subr.mxu0 0.0
    %3481 = vmatpush1.msra.mxu0 0.0
    %3482 = vmatprep.subr.mxu0 0.0
    %3483 = vmatpush1.msra.mxu0 0.0
    %3484 = vmatprep.subr.mxu0 0.0
    %3485 = vmatpush1.msra.mxu0 0.0
    %3486 = vmatprep.subr.mxu0 0.0
    %3487 = vmatpush1.msra.mxu0 0.0
    %3488 = vmatprep.subr.mxu0 0.0
    %3489 = vmatpush1.msra.mxu0 0.0
    %3490 = vmatprep.subr.mxu0 0.0
    %3491 = vmatpush1.msra.mxu0 0.0
    %3492 = vmatprep.subr.mxu0 0.0
    %3493 = vmatpush1.msra.mxu0 0.0
    %3494 = vmatprep.subr.mxu0 0.0
    %3495 = vmatpush1.msra.mxu0 0.0
    %3496 = vmatprep.subr.mxu0 0.0
    %3497 = vmatpush1.msra.mxu0 0.0
    %3498 = vmatprep.subr.mxu0 0.0
    %3499 = vmatpush1.msra.mxu0 0.0
    %3500 = vmatprep.subr.mxu0 0.0
    %3501 = vmatpush1.msra.mxu0 0.0
    %3502 = vmatprep.subr.mxu0 0.0
    %3503 = vmatpush1.msra.mxu0 0.0
    %3504 = vmatprep.subr.mxu0 0.0
    %3505 = vmatpush1.msra.mxu0 0.0
    %3506 = vmatprep.subr.mxu0 0.0
    %3507 = vmatpush1.msra.mxu0 0.0
    %3508 = vmatprep.subr.mxu0 0.0
    %3509 = vmatpush1.msra.mxu0 0.0
    %3510 = vmatprep.subr.mxu0 0.0
    %3511 = vmatpush1.msra.mxu0 0.0
    %3512 = vmatprep.subr.mxu0 0.0
    %3513 = vmatpush1.msra.mxu0 0.0
    %3514 = vmatprep.subr.mxu0 0.0
    %3515 = vmatpush1.msra.mxu0 0.0
    %3516 = vmatprep.subr.mxu0 0.0
    %3517 = vmatpush1.msra.mxu0 0.0
    %3518 = vmatprep.mubr.f32.mxu0 0.0
    %3519 = vmatmul.mubr.f32.gmra.mrb[0].mxu0 %v3452
    %v3520 = vpop.f32.mrb[0].mxu0
    %v3521 = vadd.f32 %v2179, %v3520
    %v3522 = vpop.f32.mrb[0].mxu0
    %v3523 = vadd.f32 %v2183, %v3522
    %3524 = vdwg.mxu0
    %3526 = vrot.lane.b32.xlu0 %v3521, 32
    %v3527 = vpop.permute.xlu0 %3526
    %v3529 = vadd.f32 %v3521, %v3527
    %v3530 = vxor.u32 %v3529, 2147483648
    %v3531 = vmul.f32 %v3530, 1.442695
    %v3532 = vpow.pop %v3531
    %v3533 = vadd.f32 %v3532, 1.0
    %v3534 = vrcp.pop %v3533
    %v3535 = vmul.f32 1.0, %v3534
    %3537 = vrot.lane.b32.xlu0 %v3523, 32
    %v3538 = vpop.permute.xlu0 %3537
    %v3540 = vadd.f32 %v3521, %v3538
    %v3541 = vxor.u32 %v3540, 2147483648
    %v3542 = vmul.f32 %v3541, 1.442695
    %v3543 = vpow.pop %v3542
    %v3544 = vadd.f32 %v3543, 1.0
    %v3545 = vrcp.pop %v3544
    %v3546 = vmul.f32 1.0, %v3545
    %3547 = vrot.lane.b32.xlu0 %v3523, 96
    %v3548 = vpop.permute.xlu0 %3547
    %v3550 = vmul.f32 %v3535, %v3548
    %3552 = vrot.lane.b32.xlu0 %v3550, 64
    %v3553 = vpop.permute.xlu0 %3552
    %v3555 = vadd.f32 %v3521, %v3553
    %v3556 = vtanh.pop %v3555
    %v3557 = vsub.f32 1.0, %v3546
    %3559 = vrot.lane.b32.xlu0 %v3556, 96
    %v3560 = vpop.permute.xlu0 %3559
    %v3562 = vmul.f32 %v3557, %v3560
    %v3563 = vmul.f32 %v3546, %v3159
    %v3564 = vadd.f32 %v3562, %v3563
    %3566 = vrot.lane.b32.xlu0 %v3564, 96
    %v3567 = vpop.permute.xlu0 %3566
    %v3569 = vsel %vm219, %v3567, %v3278
    %v3571 = vsel %vm232, %v3569, 0
    %3573 = vmatprep.subr.mxu0 %v2302
    %3574 = vmatpush1.msra.mxu0 %v2301
    %3575 = vmatprep.subr.mxu0 %v2304
    %3576 = vmatpush1.msra.mxu0 %v2303
    %3577 = vmatprep.subr.mxu0 %v2306
    %3578 = vmatpush1.msra.mxu0 %v2305
    %3579 = vmatprep.subr.mxu0 %v2308
    %3580 = vmatpush1.msra.mxu0 %v2307
    %3581 = vmatprep.subr.mxu0 %v2310
    %3582 = vmatpush1.msra.mxu0 %v2309
    %3583 = vmatprep.subr.mxu0 %v2312
    %3584 = vmatpush1.msra.mxu0 %v2311
    %3585 = vmatprep.subr.mxu0 %v2314
    %3586 = vmatpush1.msra.mxu0 %v2313
    %3587 = vmatprep.subr.mxu0 %v2316
    %3588 = vmatpush1.msra.mxu0 %v2315
    %3589 = vmatprep.subr.mxu0 0.0
    %3590 = vmatpush1.msra.mxu0 0.0
    %3591 = vmatprep.subr.mxu0 0.0
    %3592 = vmatpush1.msra.mxu0 0.0
    %3593 = vmatprep.subr.mxu0 0.0
    %3594 = vmatpush1.msra.mxu0 0.0
    %3595 = vmatprep.subr.mxu0 0.0
    %3596 = vmatpush1.msra.mxu0 0.0
    %3597 = vmatprep.subr.mxu0 0.0
    %3598 = vmatpush1.msra.mxu0 0.0
    %3599 = vmatprep.subr.mxu0 0.0
    %3600 = vmatpush1.msra.mxu0 0.0
    %3601 = vmatprep.subr.mxu0 0.0
    %3602 = vmatpush1.msra.mxu0 0.0
    %3603 = vmatprep.subr.mxu0 0.0
    %3604 = vmatpush1.msra.mxu0 0.0
    %3605 = vmatprep.subr.mxu0 0.0
    %3606 = vmatpush1.msra.mxu0 0.0
    %3607 = vmatprep.subr.mxu0 0.0
    %3608 = vmatpush1.msra.mxu0 0.0
    %3609 = vmatprep.subr.mxu0 0.0
    %3610 = vmatpush1.msra.mxu0 0.0
    %3611 = vmatprep.subr.mxu0 0.0
    %3612 = vmatpush1.msra.mxu0 0.0
    %3613 = vmatprep.subr.mxu0 0.0
    %3614 = vmatpush1.msra.mxu0 0.0
    %3615 = vmatprep.subr.mxu0 0.0
    %3616 = vmatpush1.msra.mxu0 0.0
    %3617 = vmatprep.subr.mxu0 0.0
    %3618 = vmatpush1.msra.mxu0 0.0
    %3619 = vmatprep.subr.mxu0 0.0
    %3620 = vmatpush1.msra.mxu0 0.0
    %3621 = vmatprep.subr.mxu0 0.0
    %3622 = vmatpush1.msra.mxu0 0.0
    %3623 = vmatprep.subr.mxu0 0.0
    %3624 = vmatpush1.msra.mxu0 0.0
    %3625 = vmatprep.subr.mxu0 0.0
    %3626 = vmatpush1.msra.mxu0 0.0
    %3627 = vmatprep.subr.mxu0 0.0
    %3628 = vmatpush1.msra.mxu0 0.0
    %3629 = vmatprep.subr.mxu0 0.0
    %3630 = vmatpush1.msra.mxu0 0.0
    %3631 = vmatprep.subr.mxu0 0.0
    %3632 = vmatpush1.msra.mxu0 0.0
    %3633 = vmatprep.subr.mxu0 0.0
    %3634 = vmatpush1.msra.mxu0 0.0
    %3635 = vmatprep.subr.mxu0 0.0
    %3636 = vmatpush1.msra.mxu0 0.0
    %3637 = vmatprep.mubr.f32.mxu0 0.0
    %3638 = vmatmul.mubr.f32.gmra.mrb[0].mxu0 %v3571
    %v3639 = vpop.f32.mrb[0].mxu0
    %v3640 = vadd.f32 %v2328, %v3639
    %v3641 = vpop.f32.mrb[0].mxu0
    %v3642 = vadd.f32 %v2332, %v3641
    %3643 = vdwg.mxu0
    %3645 = vrot.lane.b32.xlu0 %v3640, 32
    %v3646 = vpop.permute.xlu0 %3645
    %v3648 = vadd.f32 %v3640, %v3646
    %v3649 = vxor.u32 %v3648, 2147483648
    %v3650 = vmul.f32 %v3649, 1.442695
    %v3651 = vpow.pop %v3650
    %v3652 = vadd.f32 %v3651, 1.0
    %v3653 = vrcp.pop %v3652
    %v3654 = vmul.f32 1.0, %v3653
    %3656 = vrot.lane.b32.xlu0 %v3642, 32
    %v3657 = vpop.permute.xlu0 %3656
    %v3659 = vadd.f32 %v3640, %v3657
    %v3660 = vxor.u32 %v3659, 2147483648
    %v3661 = vmul.f32 %v3660, 1.442695
    %v3662 = vpow.pop %v3661
    %v3663 = vadd.f32 %v3662, 1.0
    %v3664 = vrcp.pop %v3663
    %v3665 = vmul.f32 1.0, %v3664
    %3666 = vrot.lane.b32.xlu0 %v3642, 96
    %v3667 = vpop.permute.xlu0 %3666
    %v3669 = vmul.f32 %v3654, %v3667
    %3671 = vrot.lane.b32.xlu0 %v3669, 64
    %v3672 = vpop.permute.xlu0 %3671
    %v3674 = vadd.f32 %v3640, %v3672
    %v3675 = vtanh.pop %v3674
    %v3676 = vsub.f32 1.0, %v3665
    %3678 = vrot.lane.b32.xlu0 %v3675, 96
    %v3679 = vpop.permute.xlu0 %3678
    %v3681 = vmul.f32 %v3676, %v3679
    %v3682 = vmul.f32 %v3665, %v3278
    %v3683 = vadd.f32 %v3681, %v3682
    %3685 = vrot.lane.b32.xlu0 %v3683, 96
    %v3686 = vpop.permute.xlu0 %3685
    %v3687 = vsel %vm219, %v3686, 0
    %3689 = vmatprep.subr.mxu0 0.0
    %3690 = vmatpush1.msra.mxu0 %v2449
    %3691 = vmatprep.subr.mxu0 0.0
    %3692 = vmatpush1.msra.mxu0 %v2450
    %3693 = vmatprep.subr.mxu0 0.0
    %3694 = vmatpush1.msra.mxu0 %v2451
    %3695 = vmatprep.subr.mxu0 0.0
    %3696 = vmatpush1.msra.mxu0 %v2452
    %3697 = vmatprep.subr.mxu0 0.0
    %3698 = vmatpush1.msra.mxu0 0.0
    %3699 = vmatprep.subr.mxu0 0.0
    %3700 = vmatpush1.msra.mxu0 0.0
    %3701 = vmatprep.subr.mxu0 0.0
    %3702 = vmatpush1.msra.mxu0 0.0
    %3703 = vmatprep.subr.mxu0 0.0
    %3704 = vmatpush1.msra.mxu0 0.0
    %3705 = vmatprep.subr.mxu0 0.0
    %3706 = vmatpush1.msra.mxu0 0.0
    %3707 = vmatprep.subr.mxu0 0.0
    %3708 = vmatpush1.msra.mxu0 0.0
    %3709 = vmatprep.subr.mxu0 0.0
    %3710 = vmatpush1.msra.mxu0 0.0
    %3711 = vmatprep.subr.mxu0 0.0
    %3712 = vmatpush1.msra.mxu0 0.0
    %3713 = vmatprep.subr.mxu0 0.0
    %3714 = vmatpush1.msra.mxu0 0.0
    %3715 = vmatprep.subr.mxu0 0.0
    %3716 = vmatpush1.msra.mxu0 0.0
    %3717 = vmatprep.subr.mxu0 0.0
    %3718 = vmatpush1.msra.mxu0 0.0
    %3719 = vmatprep.subr.mxu0 0.0
    %3720 = vmatpush1.msra.mxu0 0.0
    %3721 = vmatprep.subr.mxu0 0.0
    %3722 = vmatpush1.msra.mxu0 0.0
    %3723 = vmatprep.subr.mxu0 0.0
    %3724 = vmatpush1.msra.mxu0 0.0
    %3725 = vmatprep.subr.mxu0 0.0
    %3726 = vmatpush1.msra.mxu0 0.0
    %3727 = vmatprep.subr.mxu0 0.0
    %3728 = vmatpush1.msra.mxu0 0.0
    %3729 = vmatprep.subr.mxu0 0.0
    %3730 = vmatpush1.msra.mxu0 0.0
    %3731 = vmatprep.subr.mxu0 0.0
    %3732 = vmatpush1.msra.mxu0 0.0
    %3733 = vmatprep.subr.mxu0 0.0
    %3734 = vmatpush1.msra.mxu0 0.0
    %3735 = vmatprep.subr.mxu0 0.0
    %3736 = vmatpush1.msra.mxu0 0.0
    %3737 = vmatprep.subr.mxu0 0.0
    %3738 = vmatpush1.msra.mxu0 0.0
    %3739 = vmatprep.subr.mxu0 0.0
    %3740 = vmatpush1.msra.mxu0 0.0
    %3741 = vmatprep.subr.mxu0 0.0
    %3742 = vmatpush1.msra.mxu0 0.0
    %3743 = vmatprep.subr.mxu0 0.0
    %3744 = vmatpush1.msra.mxu0 0.0
    %3745 = vmatprep.subr.mxu0 0.0
    %3746 = vmatpush1.msra.mxu0 0.0
    %3747 = vmatprep.subr.mxu0 0.0
    %3748 = vmatpush1.msra.mxu0 0.0
    %3749 = vmatprep.subr.mxu0 0.0
    %3750 = vmatpush1.msra.mxu0 0.0
    %3751 = vmatprep.subr.mxu0 0.0
    %3752 = vmatpush1.msra.mxu0 0.0
    %3753 = vmatprep.mubr.f32.mxu0 0.0
    %3754 = vmatmul.mubr.f32.gmra.mrb[0].mxu0 %v3687
    %v3755 = vpop.f32.mrb[0].mxu0
    %v3756 = vadd.f32 %v2458, %v3755
    %v3757 = vpop.f32.mrb[0].mxu0
    %3758 = vdwg.mxu0
    %v3759 = vsel %vm2535, %v3756, -inf
    %3760 = vmax.xlane.f32.xlu0 %v3759
    %v3761 = vpop.xlane.xlu0 %3760
    %vm3762 = vcmp.ge.f32.partialorder %v3756, %v3761
    %v3763 = vsel %vm3762, %v102, 20
    %v3764 = vsel %vm2535, %v3763, 2147483647
    %v3765 = vand.u32 %v3764, 65535
    %v3766 = vshra.s32 %v3764, 16
    %v3767 = vcvt.s32.f32 %v3765
    %v3768 = vcvt.s32.f32 %v3766
    %3769 = vmin.xlane.f32.xlu0 %v3768
    %v3770 = vpop.xlane.xlu0 %3769
    %vm3771 = vcmp.eq.f32.partialorder %v3768, %v3770
    %v3772 = vsel %vm3771, %v3767, inf
    %3773 = vmin.xlane.f32.xlu0 %v3772
    %v3774 = vpop.xlane.xlu0 %3773
    %v3775 = vcvt.f32.s32 %v3774
    %v3776 = vcvt.f32.s32 %v3770
    %v3777 = vshll.u32 %v3776, 16
    %v3778 = vadd.s32 %v3777, %v3775
    %vm3779 = vcmp.eq.s32.totalorder %v102, %v3778
    %v3780 = vsel %vm3779, 1, 0
    %v3781 = vcvt.s32.f32 %v3780
    %v3783 = vsel %vm2562, %v3781, 0
    %3785 = vmatprep.subr.mxu0 0.0
    %3786 = vmatpush1.msra.mxu0 %v2559
    %3787 = vmatprep.subr.mxu0 0.0
    %3788 = vmatpush1.msra.mxu0 %v2560
    %3789 = vmatprep.subr.mxu0 0.0
    %3790 = vmatpush1.msra.mxu0 %v2568
    %3791 = vmatprep.subr.mxu0 0.0
    %3792 = vmatpush1.msra.mxu0 0.0
    %3793 = vmatprep.subr.mxu0 0.0
    %3794 = vmatpush1.msra.mxu0 0.0
    %3795 = vmatprep.subr.mxu0 0.0
    %3796 = vmatpush1.msra.mxu0 0.0
    %3797 = vmatprep.subr.mxu0 0.0
    %3798 = vmatpush1.msra.mxu0 0.0
    %3799 = vmatprep.subr.mxu0 0.0
    %3800 = vmatpush1.msra.mxu0 0.0
    %3801 = vmatprep.subr.mxu0 0.0
    %3802 = vmatpush1.msra.mxu0 0.0
    %3803 = vmatprep.subr.mxu0 0.0
    %3804 = vmatpush1.msra.mxu0 0.0
    %3805 = vmatprep.subr.mxu0 0.0
    %3806 = vmatpush1.msra.mxu0 0.0
    %3807 = vmatprep.subr.mxu0 0.0
    %3808 = vmatpush1.msra.mxu0 0.0
    %3809 = vmatprep.subr.mxu0 0.0
    %3810 = vmatpush1.msra.mxu0 0.0
    %3811 = vmatprep.subr.mxu0 0.0
    %3812 = vmatpush1.msra.mxu0 0.0
    %3813 = vmatprep.subr.mxu0 0.0
    %3814 = vmatpush1.msra.mxu0 0.0
    %3815 = vmatprep.subr.mxu0 0.0
    %3816 = vmatpush1.msra.mxu0 0.0
    %3817 = vmatprep.subr.mxu0 0.0
    %3818 = vmatpush1.msra.mxu0 0.0
    %3819 = vmatprep.subr.mxu0 0.0
    %3820 = vmatpush1.msra.mxu0 0.0
    %3821 = vmatprep.subr.mxu0 0.0
    %3822 = vmatpush1.msra.mxu0 0.0
    %3823 = vmatprep.subr.mxu0 0.0
    %3824 = vmatpush1.msra.mxu0 0.0
    %3825 = vmatprep.subr.mxu0 0.0
    %3826 = vmatpush1.msra.mxu0 0.0
    %3827 = vmatprep.subr.mxu0 0.0
    %3828 = vmatpush1.msra.mxu0 0.0
    %3829 = vmatprep.subr.mxu0 0.0
    %3830 = vmatpush1.msra.mxu0 0.0
    %3831 = vmatprep.subr.mxu0 0.0
    %3832 = vmatpush1.msra.mxu0 0.0
    %3833 = vmatprep.subr.mxu0 0.0
    %3834 = vmatpush1.msra.mxu0 0.0
    %3835 = vmatprep.subr.mxu0 0.0
    %3836 = vmatpush1.msra.mxu0 0.0
    %3837 = vmatprep.subr.mxu0 0.0
    %3838 = vmatpush1.msra.mxu0 0.0
    %3839 = vmatprep.subr.mxu0 0.0
    %3840 = vmatpush1.msra.mxu0 0.0
    %3841 = vmatprep.subr.mxu0 0.0
    %3842 = vmatpush1.msra.mxu0 0.0
    %3843 = vmatprep.subr.mxu0 0.0
    %3844 = vmatpush1.msra.mxu0 0.0
    %3845 = vmatprep.subr.mxu0 0.0
    %3846 = vmatpush1.msra.mxu0 0.0
    %3847 = vmatprep.subr.mxu0 0.0
    %3848 = vmatpush1.msra.mxu0 0.0
    %3849 = vmatprep.mubr.f32.mxu0 0.0
    %3850 = vmatmul.mubr.f32.gmra.mrb[0].mxu0 %v3783
    %v3851 = vpop.f32.mrb[0].mxu0
    %v3852 = vadd.f32 0.0, %v3851
    %v3853 = vpop.f32.mrb[0].mxu0
    %3854 = vdwg.mxu0
    %v3855 = vsel %vm219, %v3852, %v3564
    %v3857 = vsel %vm232, %v3855, 0
    %3859 = vmatprep.subr.mxu0 %v2158
    %3860 = vmatpush1.msra.mxu0 %v2157
    %3861 = vmatprep.subr.mxu0 %v2160
    %3862 = vmatpush1.msra.mxu0 %v2159
    %3863 = vmatprep.subr.mxu0 %v2162
    %3864 = vmatpush1.msra.mxu0 %v2161
    %3865 = vmatprep.subr.mxu0 %v2164
    %3866 = vmatpush1.msra.mxu0 %v2163
    %3867 = vmatprep.subr.mxu0 %v2166
    %3868 = vmatpush1.msra.mxu0 %v2165
    %3869 = vmatprep.subr.mxu0 %v2168
    %3870 = vmatpush1.msra.mxu0 %v2167
    %3871 = vmatprep.subr.mxu0 %v2170
    %3872 = vmatpush1.msra.mxu0 %v2169
    %3873 = vmatprep.subr.mxu0 %v2172
    %3874 = vmatpush1.msra.mxu0 %v2171
    %3875 = vmatprep.subr.mxu0 0.0
    %3876 = vmatpush1.msra.mxu0 0.0
    %3877 = vmatprep.subr.mxu0 0.0
    %3878 = vmatpush1.msra.mxu0 0.0
    %3879 = vmatprep.subr.mxu0 0.0
    %3880 = vmatpush1.msra.mxu0 0.0
    %3881 = vmatprep.subr.mxu0 0.0
    %3882 = vmatpush1.msra.mxu0 0.0
    %3883 = vmatprep.subr.mxu0 0.0
    %3884 = vmatpush1.msra.mxu0 0.0
    %3885 = vmatprep.subr.mxu0 0.0
    %3886 = vmatpush1.msra.mxu0 0.0
    %3887 = vmatprep.subr.mxu0 0.0
    %3888 = vmatpush1.msra.mxu0 0.0
    %3889 = vmatprep.subr.mxu0 0.0
    %3890 = vmatpush1.msra.mxu0 0.0
    %3891 = vmatprep.subr.mxu0 0.0
    %3892 = vmatpush1.msra.mxu0 0.0
    %3893 = vmatprep.subr.mxu0 0.0
    %3894 = vmatpush1.msra.mxu0 0.0
    %3895 = vmatprep.subr.mxu0 0.0
    %3896 = vmatpush1.msra.mxu0 0.0
    %3897 = vmatprep.subr.mxu0 0.0
    %3898 = vmatpush1.msra.mxu0 0.0
    %3899 = vmatprep.subr.mxu0 0.0
    %3900 = vmatpush1.msra.mxu0 0.0
    %3901 = vmatprep.subr.mxu0 0.0
    %3902 = vmatpush1.msra.mxu0 0.0
    %3903 = vmatprep.subr.mxu0 0.0
    %3904 = vmatpush1.msra.mxu0 0.0
    %3905 = vmatprep.subr.mxu0 0.0
    %3906 = vmatpush1.msra.mxu0 0.0
    %3907 = vmatprep.subr.mxu0 0.0
    %3908 = vmatpush1.msra.mxu0 0.0
    %3909 = vmatprep.subr.mxu0 0.0
    %3910 = vmatpush1.msra.mxu0 0.0
    %3911 = vmatprep.subr.mxu0 0.0
    %3912 = vmatpush1.msra.mxu0 0.0
    %3913 = vmatprep.subr.mxu0 0.0
    %3914 = vmatpush1.msra.mxu0 0.0
    %3915 = vmatprep.subr.mxu0 0.0
    %3916 = vmatpush1.msra.mxu0 0.0
    %3917 = vmatprep.subr.mxu0 0.0
    %3918 = vmatpush1.msra.mxu0 0.0
    %3919 = vmatprep.subr.mxu0 0.0
    %3920 = vmatpush1.msra.mxu0 0.0
    %3921 = vmatprep.subr.mxu0 0.0
    %3922 = vmatpush1.msra.mxu0 0.0
    %3923 = vmatprep.mubr.f32.mxu0 0.0
    %3924 = vmatmul.mubr.f32.gmra.mrb[0].mxu0 %v3857
    %v3925 = vpop.f32.mrb[0].mxu0
    %v3926 = vadd.f32 %v2179, %v3925
    %v3927 = vpop.f32.mrb[0].mxu0
    %v3928 = vadd.f32 %v2183, %v3927
    %3929 = vdwg.mxu0
    %3931 = vrot.lane.b32.xlu0 %v3926, 32
    %v3932 = vpop.permute.xlu0 %3931
    %v3934 = vadd.f32 %v3926, %v3932
    %v3935 = vxor.u32 %v3934, 2147483648
    %v3936 = vmul.f32 %v3935, 1.442695
    %v3937 = vpow.pop %v3936
    %v3938 = vadd.f32 %v3937, 1.0
    %v3939 = vrcp.pop %v3938
    %v3940 = vmul.f32 1.0, %v3939
    %3942 = vrot.lane.b32.xlu0 %v3928, 32
    %v3943 = vpop.permute.xlu0 %3942
    %v3945 = vadd.f32 %v3926, %v3943
    %v3946 = vxor.u32 %v3945, 2147483648
    %v3947 = vmul.f32 %v3946, 1.442695
    %v3948 = vpow.pop %v3947
    %v3949 = vadd.f32 %v3948, 1.0
    %v3950 = vrcp.pop %v3949
    %v3951 = vmul.f32 1.0, %v3950
    %3952 = vrot.lane.b32.xlu0 %v3928, 96
    %v3953 = vpop.permute.xlu0 %3952
    %v3955 = vmul.f32 %v3940, %v3953
    %3957 = vrot.lane.b32.xlu0 %v3955, 64
    %v3958 = vpop.permute.xlu0 %3957
    %v3960 = vadd.f32 %v3926, %v3958
    %v3961 = vtanh.pop %v3960
    %v3962 = vsub.f32 1.0, %v3951
    %3964 = vrot.lane.b32.xlu0 %v3961, 96
    %v3965 = vpop.permute.xlu0 %3964
    %v3967 = vmul.f32 %v3962, %v3965
    %v3968 = vmul.f32 %v3951, %v3564
    %v3969 = vadd.f32 %v3967, %v3968
    %3971 = vrot.lane.b32.xlu0 %v3969, 96
    %v3972 = vpop.permute.xlu0 %3971
    %v3974 = vsel %vm219, %v3972, %v3683
    %v3976 = vsel %vm232, %v3974, 0
    %3978 = vmatprep.subr.mxu0 %v2302
    %3979 = vmatpush1.msra.mxu0 %v2301
    %3980 = vmatprep.subr.mxu0 %v2304
    %3981 = vmatpush1.msra.mxu0 %v2303
    %3982 = vmatprep.subr.mxu0 %v2306
    %3983 = vmatpush1.msra.mxu0 %v2305
    %3984 = vmatprep.subr.mxu0 %v2308
    %3985 = vmatpush1.msra.mxu0 %v2307
    %3986 = vmatprep.subr.mxu0 %v2310
    %3987 = vmatpush1.msra.mxu0 %v2309
    %3988 = vmatprep.subr.mxu0 %v2312
    %3989 = vmatpush1.msra.mxu0 %v2311
    %3990 = vmatprep.subr.mxu0 %v2314
    %3991 = vmatpush1.msra.mxu0 %v2313
    %3992 = vmatprep.subr.mxu0 %v2316
    %3993 = vmatpush1.msra.mxu0 %v2315
    %3994 = vmatprep.subr.mxu0 0.0
    %3995 = vmatpush1.msra.mxu0 0.0
    %3996 = vmatprep.subr.mxu0 0.0
    %3997 = vmatpush1.msra.mxu0 0.0
    %3998 = vmatprep.subr.mxu0 0.0
    %3999 = vmatpush1.msra.mxu0 0.0
    %4000 = vmatprep.subr.mxu0 0.0
    %4001 = vmatpush1.msra.mxu0 0.0
    %4002 = vmatprep.subr.mxu0 0.0
    %4003 = vmatpush1.msra.mxu0 0.0
    %4004 = vmatprep.subr.mxu0 0.0
    %4005 = vmatpush1.msra.mxu0 0.0
    %4006 = vmatprep.subr.mxu0 0.0
    %4007 = vmatpush1.msra.mxu0 0.0
    %4008 = vmatprep.subr.mxu0 0.0
    %4009 = vmatpush1.msra.mxu0 0.0
    %4010 = vmatprep.subr.mxu0 0.0
    %4011 = vmatpush1.msra.mxu0 0.0
    %4012 = vmatprep.subr.mxu0 0.0
    %4013 = vmatpush1.msra.mxu0 0.0
    %4014 = vmatprep.subr.mxu0 0.0
    %4015 = vmatpush1.msra.mxu0 0.0
    %4016 = vmatprep.subr.mxu0 0.0
    %4017 = vmatpush1.msra.mxu0 0.0
    %4018 = vmatprep.subr.mxu0 0.0
    %4019 = vmatpush1.msra.mxu0 0.0
    %4020 = vmatprep.subr.mxu0 0.0
    %4021 = vmatpush1.msra.mxu0 0.0
    %4022 = vmatprep.subr.mxu0 0.0
    %4023 = vmatpush1.msra.mxu0 0.0
    %4024 = vmatprep.subr.mxu0 0.0
    %4025 = vmatpush1.msra.mxu0 0.0
    %4026 = vmatprep.subr.mxu0 0.0
    %4027 = vmatpush1.msra.mxu0 0.0
    %4028 = vmatprep.subr.mxu0 0.0
    %4029 = vmatpush1.msra.mxu0 0.0
    %4030 = vmatprep.subr.mxu0 0.0
    %4031 = vmatpush1.msra.mxu0 0.0
    %4032 = vmatprep.subr.mxu0 0.0
    %4033 = vmatpush1.msra.mxu0 0.0
    %4034 = vmatprep.subr.mxu0 0.0
    %4035 = vmatpush1.msra.mxu0 0.0
    %4036 = vmatprep.subr.mxu0 0.0
    %4037 = vmatpush1.msra.mxu0 0.0
    %4038 = vmatprep.subr.mxu0 0.0
    %4039 = vmatpush1.msra.mxu0 0.0
    %4040 = vmatprep.subr.mxu0 0.0
    %4041 = vmatpush1.msra.mxu0 0.0
    %4042 = vmatprep.mubr.f32.mxu0 0.0
    %4043 = vmatmul.mubr.f32.gmra.mrb[0].mxu0 %v3976
    %v4044 = vpop.f32.mrb[0].mxu0
    %v4045 = vadd.f32 %v2328, %v4044
    %v4046 = vpop.f32.mrb[0].mxu0
    %v4047 = vadd.f32 %v2332, %v4046
    %4048 = vdwg.mxu0
    %4050 = vrot.lane.b32.xlu0 %v4045, 32
    %v4051 = vpop.permute.xlu0 %4050
    %v4053 = vadd.f32 %v4045, %v4051
    %v4054 = vxor.u32 %v4053, 2147483648
    %v4055 = vmul.f32 %v4054, 1.442695
    %v4056 = vpow.pop %v4055
    %v4057 = vadd.f32 %v4056, 1.0
    %v4058 = vrcp.pop %v4057
    %v4059 = vmul.f32 1.0, %v4058
    %4061 = vrot.lane.b32.xlu0 %v4047, 32
    %v4062 = vpop.permute.xlu0 %4061
    %v4064 = vadd.f32 %v4045, %v4062
    %v4065 = vxor.u32 %v4064, 2147483648
    %v4066 = vmul.f32 %v4065, 1.442695
    %v4067 = vpow.pop %v4066
    %v4068 = vadd.f32 %v4067, 1.0
    %v4069 = vrcp.pop %v4068
    %v4070 = vmul.f32 1.0, %v4069
    %4071 = vrot.lane.b32.xlu0 %v4047, 96
    %v4072 = vpop.permute.xlu0 %4071
    %v4074 = vmul.f32 %v4059, %v4072
    %4076 = vrot.lane.b32.xlu0 %v4074, 64
    %v4077 = vpop.permute.xlu0 %4076
    %v4079 = vadd.f32 %v4045, %v4077
    %v4080 = vtanh.pop %v4079
    %v4081 = vsub.f32 1.0, %v4070
    %4083 = vrot.lane.b32.xlu0 %v4080, 96
    %v4084 = vpop.permute.xlu0 %4083
    %v4086 = vmul.f32 %v4081, %v4084
    %v4087 = vmul.f32 %v4070, %v3683
    %v4088 = vadd.f32 %v4086, %v4087
    %4090 = vrot.lane.b32.xlu0 %v4088, 96
    %v4091 = vpop.permute.xlu0 %4090
    %v4092 = vsel %vm219, %v4091, 0
    %4094 = vmatprep.subr.mxu0 0.0
    %4095 = vmatpush1.msra.mxu0 %v2449
    %4096 = vmatprep.subr.mxu0 0.0
    %4097 = vmatpush1.msra.mxu0 %v2450
    %4098 = vmatprep.subr.mxu0 0.0
    %4099 = vmatpush1.msra.mxu0 %v2451
    %4100 = vmatprep.subr.mxu0 0.0
    %4101 = vmatpush1.msra.mxu0 %v2452
    %4102 = vmatprep.subr.mxu0 0.0
    %4103 = vmatpush1.msra.mxu0 0.0
    %4104 = vmatprep.subr.mxu0 0.0
    %4105 = vmatpush1.msra.mxu0 0.0
    %4106 = vmatprep.subr.mxu0 0.0
    %4107 = vmatpush1.msra.mxu0 0.0
    %4108 = vmatprep.subr.mxu0 0.0
    %4109 = vmatpush1.msra.mxu0 0.0
    %4110 = vmatprep.subr.mxu0 0.0
    %4111 = vmatpush1.msra.mxu0 0.0
    %4112 = vmatprep.subr.mxu0 0.0
    %4113 = vmatpush1.msra.mxu0 0.0
    %4114 = vmatprep.subr.mxu0 0.0
    %4115 = vmatpush1.msra.mxu0 0.0
    %4116 = vmatprep.subr.mxu0 0.0
    %4117 = vmatpush1.msra.mxu0 0.0
    %4118 = vmatprep.subr.mxu0 0.0
    %4119 = vmatpush1.msra.mxu0 0.0
    %4120 = vmatprep.subr.mxu0 0.0
    %4121 = vmatpush1.msra.mxu0 0.0
    %4122 = vmatprep.subr.mxu0 0.0
    %4123 = vmatpush1.msra.mxu0 0.0
    %4124 = vmatprep.subr.mxu0 0.0
    %4125 = vmatpush1.msra.mxu0 0.0
    %4126 = vmatprep.subr.mxu0 0.0
    %4127 = vmatpush1.msra.mxu0 0.0
    %4128 = vmatprep.subr.mxu0 0.0
    %4129 = vmatpush1.msra.mxu0 0.0
    %4130 = vmatprep.subr.mxu0 0.0
    %4131 = vmatpush1.msra.mxu0 0.0
    %4132 = vmatprep.subr.mxu0 0.0
    %4133 = vmatpush1.msra.mxu0 0.0
    %4134 = vmatprep.subr.mxu0 0.0
    %4135 = vmatpush1.msra.mxu0 0.0
    %4136 = vmatprep.subr.mxu0 0.0
    %4137 = vmatpush1.msra.mxu0 0.0
    %4138 = vmatprep.subr.mxu0 0.0
    %4139 = vmatpush1.msra.mxu0 0.0
    %4140 = vmatprep.subr.mxu0 0.0
    %4141 = vmatpush1.msra.mxu0 0.0
    %4142 = vmatprep.subr.mxu0 0.0
    %4143 = vmatpush1.msra.mxu0 0.0
    %4144 = vmatprep.subr.mxu0 0.0
    %4145 = vmatpush1.msra.mxu0 0.0
    %4146 = vmatprep.subr.mxu0 0.0
    %4147 = vmatpush1.msra.mxu0 0.0
    %4148 = vmatprep.subr.mxu0 0.0
    %4149 = vmatpush1.msra.mxu0 0.0
    %4150 = vmatprep.subr.mxu0 0.0
    %4151 = vmatpush1.msra.mxu0 0.0
    %4152 = vmatprep.subr.mxu0 0.0
    %4153 = vmatpush1.msra.mxu0 0.0
    %4154 = vmatprep.subr.mxu0 0.0
    %4155 = vmatpush1.msra.mxu0 0.0
    %4156 = vmatprep.subr.mxu0 0.0
    %4157 = vmatpush1.msra.mxu0 0.0
    %4158 = vmatprep.mubr.f32.mxu0 0.0
    %4159 = vmatmul.mubr.f32.gmra.mrb[0].mxu0 %v4092
    %v4160 = vpop.f32.mrb[0].mxu0
    %v4161 = vadd.f32 %v2458, %v4160
    %v4162 = vpop.f32.mrb[0].mxu0
    %4163 = vdwg.mxu0
    %v4164 = vsel %vm2535, %v4161, -inf
    %4165 = vmax.xlane.f32.xlu0 %v4164
    %v4166 = vpop.xlane.xlu0 %4165
    %vm4167 = vcmp.ge.f32.partialorder %v4161, %v4166
    %v4168 = vsel %vm4167, %v102, 20
    %v4169 = vsel %vm2535, %v4168, 2147483647
    %v4170 = vand.u32 %v4169, 65535
    %v4171 = vshra.s32 %v4169, 16
    %v4172 = vcvt.s32.f32 %v4170
    %v4173 = vcvt.s32.f32 %v4171
    %4174 = vmin.xlane.f32.xlu0 %v4173
    %v4175 = vpop.xlane.xlu0 %4174
    %vm4176 = vcmp.eq.f32.partialorder %v4173, %v4175
    %v4177 = vsel %vm4176, %v4172, inf
    %4178 = vmin.xlane.f32.xlu0 %v4177
    %v4179 = vpop.xlane.xlu0 %4178
    %v4180 = vcvt.f32.s32 %v4179
    %v4181 = vcvt.f32.s32 %v4175
    %v4182 = vshll.u32 %v4181, 16
    %v4183 = vadd.s32 %v4182, %v4180
    %vm4184 = vcmp.eq.s32.totalorder %v102, %v4183
    %v4185 = vsel %vm4184, 1, 0
    %v4186 = vcvt.s32.f32 %v4185
    %v4188 = vsel %vm2562, %v4186, 0
    %4190 = vmatprep.subr.mxu0 0.0
    %4191 = vmatpush1.msra.mxu0 %v2559
    %4192 = vmatprep.subr.mxu0 0.0
    %4193 = vmatpush1.msra.mxu0 %v2560
    %4194 = vmatprep.subr.mxu0 0.0
    %4195 = vmatpush1.msra.mxu0 %v2568
    %4196 = vmatprep.subr.mxu0 0.0
    %4197 = vmatpush1.msra.mxu0 0.0
    %4198 = vmatprep.subr.mxu0 0.0
    %4199 = vmatpush1.msra.mxu0 0.0
    %4200 = vmatprep.subr.mxu0 0.0
    %4201 = vmatpush1.msra.mxu0 0.0
    %4202 = vmatprep.subr.mxu0 0.0
    %4203 = vmatpush1.msra.mxu0 0.0
    %4204 = vmatprep.subr.mxu0 0.0
    %4205 = vmatpush1.msra.mxu0 0.0
    %4206 = vmatprep.subr.mxu0 0.0
    %4207 = vmatpush1.msra.mxu0 0.0
    %4208 = vmatprep.subr.mxu0 0.0
    %4209 = vmatpush1.msra.mxu0 0.0
    %4210 = vmatprep.subr.mxu0 0.0
    %4211 = vmatpush1.msra.mxu0 0.0
    %4212 = vmatprep.subr.mxu0 0.0
    %4213 = vmatpush1.msra.mxu0 0.0
    %4214 = vmatprep.subr.mxu0 0.0
    %4215 = vmatpush1.msra.mxu0 0.0
    %4216 = vmatprep.subr.mxu0 0.0
    %4217 = vmatpush1.msra.mxu0 0.0
    %4218 = vmatprep.subr.mxu0 0.0
    %4219 = vmatpush1.msra.mxu0 0.0
    %4220 = vmatprep.subr.mxu0 0.0
    %4221 = vmatpush1.msra.mxu0 0.0
    %4222 = vmatprep.subr.mxu0 0.0
    %4223 = vmatpush1.msra.mxu0 0.0
    %4224 = vmatprep.subr.mxu0 0.0
    %4225 = vmatpush1.msra.mxu0 0.0
    %4226 = vmatprep.subr.mxu0 0.0
    %4227 = vmatpush1.msra.mxu0 0.0
    %4228 = vmatprep.subr.mxu0 0.0
    %4229 = vmatpush1.msra.mxu0 0.0
    %4230 = vmatprep.subr.mxu0 0.0
    %4231 = vmatpush1.msra.mxu0 0.0
    %4232 = vmatprep.subr.mxu0 0.0
    %4233 = vmatpush1.msra.mxu0 0.0
    %4234 = vmatprep.subr.mxu0 0.0
    %4235 = vmatpush1.msra.mxu0 0.0
    %4236 = vmatprep.subr.mxu0 0.0
    %4237 = vmatpush1.msra.mxu0 0.0
    %4238 = vmatprep.subr.mxu0 0.0
    %4239 = vmatpush1.msra.mxu0 0.0
    %4240 = vmatprep.subr.mxu0 0.0
    %4241 = vmatpush1.msra.mxu0 0.0
    %4242 = vmatprep.subr.mxu0 0.0
    %4243 = vmatpush1.msra.mxu0 0.0
    %4244 = vmatprep.subr.mxu0 0.0
    %4245 = vmatpush1.msra.mxu0 0.0
    %4246 = vmatprep.subr.mxu0 0.0
    %4247 = vmatpush1.msra.mxu0 0.0
    %4248 = vmatprep.subr.mxu0 0.0
    %4249 = vmatpush1.msra.mxu0 0.0
    %4250 = vmatprep.subr.mxu0 0.0
    %4251 = vmatpush1.msra.mxu0 0.0
    %4252 = vmatprep.subr.mxu0 0.0
    %4253 = vmatpush1.msra.mxu0 0.0
    %4254 = vmatprep.mubr.f32.mxu0 0.0
    %4255 = vmatmul.mubr.f32.gmra.mrb[0].mxu0 %v4188
    %v4256 = vpop.f32.mrb[0].mxu0
    %v4257 = vadd.f32 0.0, %v4256
    %v4258 = vpop.f32.mrb[0].mxu0
    %4259 = vdwg.mxu0
    %v4260 = vsel %vm219, %v4257, %v3969
    %v4262 = vsel %vm232, %v4260, 0
    %4264 = vmatprep.subr.mxu0 %v2158
    %4265 = vmatpush1.msra.mxu0 %v2157
    %4266 = vmatprep.subr.mxu0 %v2160
    %4267 = vmatpush1.msra.mxu0 %v2159
    %4268 = vmatprep.subr.mxu0 %v2162
    %4269 = vmatpush1.msra.mxu0 %v2161
    %4270 = vmatprep.subr.mxu0 %v2164
    %4271 = vmatpush1.msra.mxu0 %v2163
    %4272 = vmatprep.subr.mxu0 %v2166
    %4273 = vmatpush1.msra.mxu0 %v2165
    %4274 = vmatprep.subr.mxu0 %v2168
    %4275 = vmatpush1.msra.mxu0 %v2167
    %4276 = vmatprep.subr.mxu0 %v2170
    %4277 = vmatpush1.msra.mxu0 %v2169
    %4278 = vmatprep.subr.mxu0 %v2172
    %4279 = vmatpush1.msra.mxu0 %v2171
    %4280 = vmatprep.subr.mxu0 0.0
    %4281 = vmatpush1.msra.mxu0 0.0
    %4282 = vmatprep.subr.mxu0 0.0
    %4283 = vmatpush1.msra.mxu0 0.0
    %4284 = vmatprep.subr.mxu0 0.0
    %4285 = vmatpush1.msra.mxu0 0.0
    %4286 = vmatprep.subr.mxu0 0.0
    %4287 = vmatpush1.msra.mxu0 0.0
    %4288 = vmatprep.subr.mxu0 0.0
    %4289 = vmatpush1.msra.mxu0 0.0
    %4290 = vmatprep.subr.mxu0 0.0
    %4291 = vmatpush1.msra.mxu0 0.0
    %4292 = vmatprep.subr.mxu0 0.0
    %4293 = vmatpush1.msra.mxu0 0.0
    %4294 = vmatprep.subr.mxu0 0.0
    %4295 = vmatpush1.msra.mxu0 0.0
    %4296 = vmatprep.subr.mxu0 0.0
    %4297 = vmatpush1.msra.mxu0 0.0
    %4298 = vmatprep.subr.mxu0 0.0
    %4299 = vmatpush1.msra.mxu0 0.0
    %4300 = vmatprep.subr.mxu0 0.0
    %4301 = vmatpush1.msra.mxu0 0.0
    %4302 = vmatprep.subr.mxu0 0.0
    %4303 = vmatpush1.msra.mxu0 0.0
    %4304 = vmatprep.subr.mxu0 0.0
    %4305 = vmatpush1.msra.mxu0 0.0
    %4306 = vmatprep.subr.mxu0 0.0
    %4307 = vmatpush1.msra.mxu0 0.0
    %4308 = vmatprep.subr.mxu0 0.0
    %4309 = vmatpush1.msra.mxu0 0.0
    %4310 = vmatprep.subr.mxu0 0.0
    %4311 = vmatpush1.msra.mxu0 0.0
    %4312 = vmatprep.subr.mxu0 0.0
    %4313 = vmatpush1.msra.mxu0 0.0
    %4314 = vmatprep.subr.mxu0 0.0
    %4315 = vmatpush1.msra.mxu0 0.0
    %4316 = vmatprep.subr.mxu0 0.0
    %4317 = vmatpush1.msra.mxu0 0.0
    %4318 = vmatprep.subr.mxu0 0.0
    %4319 = vmatpush1.msra.mxu0 0.0
    %4320 = vmatprep.subr.mxu0 0.0
    %4321 = vmatpush1.msra.mxu0 0.0
    %4322 = vmatprep.subr.mxu0 0.0
    %4323 = vmatpush1.msra.mxu0 0.0
    %4324 = vmatprep.subr.mxu0 0.0
    %4325 = vmatpush1.msra.mxu0 0.0
    %4326 = vmatprep.subr.mxu0 0.0
    %4327 = vmatpush1.msra.mxu0 0.0
    %4328 = vmatprep.mubr.f32.mxu0 0.0
    %4329 = vmatmul.mubr.f32.gmra.mrb[0].mxu0 %v4262
    %v4330 = vpop.f32.mrb[0].mxu0
    %v4331 = vadd.f32 %v2179, %v4330
    %v4332 = vpop.f32.mrb[0].mxu0
    %v4333 = vadd.f32 %v2183, %v4332
    %4334 = vdwg.mxu0
    %4336 = vrot.lane.b32.xlu0 %v4331, 32
    %v4337 = vpop.permute.xlu0 %4336
    %v4339 = vadd.f32 %v4331, %v4337
    %v4340 = vxor.u32 %v4339, 2147483648
    %v4341 = vmul.f32 %v4340, 1.442695
    %v4342 = vpow.pop %v4341
    %v4343 = vadd.f32 %v4342, 1.0
    %v4344 = vrcp.pop %v4343
    %v4345 = vmul.f32 1.0, %v4344
    %4347 = vrot.lane.b32.xlu0 %v4333, 32
    %v4348 = vpop.permute.xlu0 %4347
    %v4350 = vadd.f32 %v4331, %v4348
    %v4351 = vxor.u32 %v4350, 2147483648
    %v4352 = vmul.f32 %v4351, 1.442695
    %v4353 = vpow.pop %v4352
    %v4354 = vadd.f32 %v4353, 1.0
    %v4355 = vrcp.pop %v4354
    %v4356 = vmul.f32 1.0, %v4355
    %4357 = vrot.lane.b32.xlu0 %v4333, 96
    %v4358 = vpop.permute.xlu0 %4357
    %v4360 = vmul.f32 %v4345, %v4358
    %4362 = vrot.lane.b32.xlu0 %v4360, 64
    %v4363 = vpop.permute.xlu0 %4362
    %v4365 = vadd.f32 %v4331, %v4363
    %v4366 = vtanh.pop %v4365
    %v4367 = vsub.f32 1.0, %v4356
    %4369 = vrot.lane.b32.xlu0 %v4366, 96
    %v4370 = vpop.permute.xlu0 %4369
    %v4372 = vmul.f32 %v4367, %v4370
    %v4373 = vmul.f32 %v4356, %v3969
    %v4374 = vadd.f32 %v4372, %v4373
    %4376 = vrot.lane.b32.xlu0 %v4374, 96
    %v4377 = vpop.permute.xlu0 %4376
    %v4379 = vsel %vm219, %v4377, %v4088
    %v4381 = vsel %vm232, %v4379, 0
    %4383 = vmatprep.subr.mxu0 %v2302
    %4384 = vmatpush1.msra.mxu0 %v2301
    %4385 = vmatprep.subr.mxu0 %v2304
    %4386 = vmatpush1.msra.mxu0 %v2303
    %4387 = vmatprep.subr.mxu0 %v2306
    %4388 = vmatpush1.msra.mxu0 %v2305
    %4389 = vmatprep.subr.mxu0 %v2308
    %4390 = vmatpush1.msra.mxu0 %v2307
    %4391 = vmatprep.subr.mxu0 %v2310
    %4392 = vmatpush1.msra.mxu0 %v2309
    %4393 = vmatprep.subr.mxu0 %v2312
    %4394 = vmatpush1.msra.mxu0 %v2311
    %4395 = vmatprep.subr.mxu0 %v2314
    %4396 = vmatpush1.msra.mxu0 %v2313
    %4397 = vmatprep.subr.mxu0 %v2316
    %4398 = vmatpush1.msra.mxu0 %v2315
    %4399 = vmatprep.subr.mxu0 0.0
    %4400 = vmatpush1.msra.mxu0 0.0
    %4401 = vmatprep.subr.mxu0 0.0
    %4402 = vmatpush1.msra.mxu0 0.0
    %4403 = vmatprep.subr.mxu0 0.0
    %4404 = vmatpush1.msra.mxu0 0.0
    %4405 = vmatprep.subr.mxu0 0.0
    %4406 = vmatpush1.msra.mxu0 0.0
    %4407 = vmatprep.subr.mxu0 0.0
    %4408 = vmatpush1.msra.mxu0 0.0
    %4409 = vmatprep.subr.mxu0 0.0
    %4410 = vmatpush1.msra.mxu0 0.0
    %4411 = vmatprep.subr.mxu0 0.0
    %4412 = vmatpush1.msra.mxu0 0.0
    %4413 = vmatprep.subr.mxu0 0.0
    %4414 = vmatpush1.msra.mxu0 0.0
    %4415 = vmatprep.subr.mxu0 0.0
    %4416 = vmatpush1.msra.mxu0 0.0
    %4417 = vmatprep.subr.mxu0 0.0
    %4418 = vmatpush1.msra.mxu0 0.0
    %4419 = vmatprep.subr.mxu0 0.0
    %4420 = vmatpush1.msra.mxu0 0.0
    %4421 = vmatprep.subr.mxu0 0.0
    %4422 = vmatpush1.msra.mxu0 0.0
    %4423 = vmatprep.subr.mxu0 0.0
    %4424 = vmatpush1.msra.mxu0 0.0
    %4425 = vmatprep.subr.mxu0 0.0
    %4426 = vmatpush1.msra.mxu0 0.0
    %4427 = vmatprep.subr.mxu0 0.0
    %4428 = vmatpush1.msra.mxu0 0.0
    %4429 = vmatprep.subr.mxu0 0.0
    %4430 = vmatpush1.msra.mxu0 0.0
    %4431 = vmatprep.subr.mxu0 0.0
    %4432 = vmatpush1.msra.mxu0 0.0
    %4433 = vmatprep.subr.mxu0 0.0
    %4434 = vmatpush1.msra.mxu0 0.0
    %4435 = vmatprep.subr.mxu0 0.0
    %4436 = vmatpush1.msra.mxu0 0.0
    %4437 = vmatprep.subr.mxu0 0.0
    %4438 = vmatpush1.msra.mxu0 0.0
    %4439 = vmatprep.subr.mxu0 0.0
    %4440 = vmatpush1.msra.mxu0 0.0
    %4441 = vmatprep.subr.mxu0 0.0
    %4442 = vmatpush1.msra.mxu0 0.0
    %4443 = vmatprep.subr.mxu0 0.0
    %4444 = vmatpush1.msra.mxu0 0.0
    %4445 = vmatprep.subr.mxu0 0.0
    %4446 = vmatpush1.msra.mxu0 0.0
    %4447 = vmatprep.mubr.f32.mxu0 0.0
    %4448 = vmatmul.mubr.f32.gmra.mrb[0].mxu0 %v4381
    %v4449 = vpop.f32.mrb[0].mxu0
    %v4450 = vadd.f32 %v2328, %v4449
    %v4451 = vpop.f32.mrb[0].mxu0
    %v4452 = vadd.f32 %v2332, %v4451
    %4453 = vdwg.mxu0
    %4455 = vrot.lane.b32.xlu0 %v4450, 32
    %v4456 = vpop.permute.xlu0 %4455
    %v4458 = vadd.f32 %v4450, %v4456
    %v4459 = vxor.u32 %v4458, 2147483648
    %v4460 = vmul.f32 %v4459, 1.442695
    %v4461 = vpow.pop %v4460
    %v4462 = vadd.f32 %v4461, 1.0
    %v4463 = vrcp.pop %v4462
    %v4464 = vmul.f32 1.0, %v4463
    %4466 = vrot.lane.b32.xlu0 %v4452, 32
    %v4467 = vpop.permute.xlu0 %4466
    %v4469 = vadd.f32 %v4450, %v4467
    %v4470 = vxor.u32 %v4469, 2147483648
    %v4471 = vmul.f32 %v4470, 1.442695
    %v4472 = vpow.pop %v4471
    %v4473 = vadd.f32 %v4472, 1.0
    %v4474 = vrcp.pop %v4473
    %v4475 = vmul.f32 1.0, %v4474
    %4476 = vrot.lane.b32.xlu0 %v4452, 96
    %v4477 = vpop.permute.xlu0 %4476
    %v4479 = vmul.f32 %v4464, %v4477
    %4481 = vrot.lane.b32.xlu0 %v4479, 64
    %v4482 = vpop.permute.xlu0 %4481
    %v4484 = vadd.f32 %v4450, %v4482
    %v4485 = vtanh.pop %v4484
    %v4486 = vsub.f32 1.0, %v4475
    %4488 = vrot.lane.b32.xlu0 %v4485, 96
    %v4489 = vpop.permute.xlu0 %4488
    %v4491 = vmul.f32 %v4486, %v4489
    %v4492 = vmul.f32 %v4475, %v4088
    %v4493 = vadd.f32 %v4491, %v4492
    %4495 = vrot.lane.b32.xlu0 %v4493, 96
    %v4496 = vpop.permute.xlu0 %4495
    %v4497 = vsel %vm219, %v4496, 0
    %4499 = vmatprep.subr.mxu0 0.0
    %4500 = vmatpush1.msra.mxu0 %v2449
    %4501 = vmatprep.subr.mxu0 0.0
    %4502 = vmatpush1.msra.mxu0 %v2450
    %4503 = vmatprep.subr.mxu0 0.0
    %4504 = vmatpush1.msra.mxu0 %v2451
    %4505 = vmatprep.subr.mxu0 0.0
    %4506 = vmatpush1.msra.mxu0 %v2452
    %4507 = vmatprep.subr.mxu0 0.0
    %4508 = vmatpush1.msra.mxu0 0.0
    %4509 = vmatprep.subr.mxu0 0.0
    %4510 = vmatpush1.msra.mxu0 0.0
    %4511 = vmatprep.subr.mxu0 0.0
    %4512 = vmatpush1.msra.mxu0 0.0
    %4513 = vmatprep.subr.mxu0 0.0
    %4514 = vmatpush1.msra.mxu0 0.0
    %4515 = vmatprep.subr.mxu0 0.0
    %4516 = vmatpush1.msra.mxu0 0.0
    %4517 = vmatprep.subr.mxu0 0.0
    %4518 = vmatpush1.msra.mxu0 0.0
    %4519 = vmatprep.subr.mxu0 0.0
    %4520 = vmatpush1.msra.mxu0 0.0
    %4521 = vmatprep.subr.mxu0 0.0
    %4522 = vmatpush1.msra.mxu0 0.0
    %4523 = vmatprep.subr.mxu0 0.0
    %4524 = vmatpush1.msra.mxu0 0.0
    %4525 = vmatprep.subr.mxu0 0.0
    %4526 = vmatpush1.msra.mxu0 0.0
    %4527 = vmatprep.subr.mxu0 0.0
    %4528 = vmatpush1.msra.mxu0 0.0
    %4529 = vmatprep.subr.mxu0 0.0
    %4530 = vmatpush1.msra.mxu0 0.0
    %4531 = vmatprep.subr.mxu0 0.0
    %4532 = vmatpush1.msra.mxu0 0.0
    %4533 = vmatprep.subr.mxu0 0.0
    %4534 = vmatpush1.msra.mxu0 0.0
    %4535 = vmatprep.subr.mxu0 0.0
    %4536 = vmatpush1.msra.mxu0 0.0
    %4537 = vmatprep.subr.mxu0 0.0
    %4538 = vmatpush1.msra.mxu0 0.0
    %4539 = vmatprep.subr.mxu0 0.0
    %4540 = vmatpush1.msra.mxu0 0.0
    %4541 = vmatprep.subr.mxu0 0.0
    %4542 = vmatpush1.msra.mxu0 0.0
    %4543 = vmatprep.subr.mxu0 0.0
    %4544 = vmatpush1.msra.mxu0 0.0
    %4545 = vmatprep.subr.mxu0 0.0
    %4546 = vmatpush1.msra.mxu0 0.0
    %4547 = vmatprep.subr.mxu0 0.0
    %4548 = vmatpush1.msra.mxu0 0.0
    %4549 = vmatprep.subr.mxu0 0.0
    %4550 = vmatpush1.msra.mxu0 0.0
    %4551 = vmatprep.subr.mxu0 0.0
    %4552 = vmatpush1.msra.mxu0 0.0
    %4553 = vmatprep.subr.mxu0 0.0
    %4554 = vmatpush1.msra.mxu0 0.0
    %4555 = vmatprep.subr.mxu0 0.0
    %4556 = vmatpush1.msra.mxu0 0.0
    %4557 = vmatprep.subr.mxu0 0.0
    %4558 = vmatpush1.msra.mxu0 0.0
    %4559 = vmatprep.subr.mxu0 0.0
    %4560 = vmatpush1.msra.mxu0 0.0
    %4561 = vmatprep.subr.mxu0 0.0
    %4562 = vmatpush1.msra.mxu0 0.0
    %4563 = vmatprep.mubr.f32.mxu0 0.0
    %4564 = vmatmul.mubr.f32.gmra.mrb[0].mxu0 %v4497
    %v4565 = vpop.f32.mrb[0].mxu0
    %v4566 = vadd.f32 %v2458, %v4565
    %v4567 = vpop.f32.mrb[0].mxu0
    %4568 = vdwg.mxu0
    %v4570 = vrot.slane %v2946, 6
    %v4573 = vrot.slane %v3351, 4
    %v4576 = vrot.slane %v3756, 2
    %v4579 = vrot.slane %v4566, 6
    %vm4581 = vcmask 1041408
    %v4582 = vsel %vm4581, %v2532, %v4570
    %v4583 = vsel %vm2566, %v4582, %v4573
    %vm4584 = vcmask 1045504
    %v4585 = vsel %vm4584, %v4583, %v4576
    %v4586 = vsel %vm4581, %v4161, %v4579
    %4587 = vst [vmem:[%s9] sm:$0xff] %v4585
    %4588 = vst [vmem:[%s9 + $0x8] sm:$0xf] %v4586
    %vm4589 = vcmask 254976
    %4590 = vst.msk [vmem:[#allocation11] sm:$0x3] %vm4589, %v4377
    %s4592 = scalar_lea.vmem [#allocation11], 2
    %4593 = vst.msk [vmem:[%s4592] sm:$0x3] %vm4589, %v4496
    // Predicated region
    $region58: #{seq2seq_forward.1} parent=1 // pred_check
      _
    $region59: #{seq2seq_forward.1} parent=1 // pred_check_branch
      %4595 = sbr.rel (0) target = $region61
    $region60: #{seq2seq_forward.1} parent=1 // pred_region
      _
    $region61: #{seq2seq_forward.1} parent=1 // pred_fallthru
      _
    // Predicated region
    $region62: #{seq2seq_forward.1} parent=1 // pred_check
      _
    $region63: #{seq2seq_forward.1} parent=1 // pred_check_branch
      %4597 = sbr.rel (0) target = $region65
    $region64: #{seq2seq_forward.1} parent=1 // pred_region
      %s4599 = ssub.s32 64, 64
      %4600 = vsyncadd [#allocation4], %s4599
      %s4601 = sshll.u32 [#allocation11], 4
      %s4602 = int_to_ptr.vmem [resolvable:$true] %s4601
      %4607 = dma.vmem_to_hbm [thread:$0]  %s4602, 64, %s10, [#allocation4], 32, 32, 2
    $region65: #{seq2seq_forward.1} parent=1 // pred_fallthru
      _
    // Predicated region
    $region66: #{seq2seq_forward.1} parent=1 // pred_check
      _
    $region67: #{seq2seq_forward.1} parent=1 // pred_check_branch
      %4609 = sbr.rel (0) target = $region69
    $region68: #{seq2seq_forward.1} parent=1 // pred_region
      _
    $region69: #{seq2seq_forward.1} parent=1 // pred_fallthru
      _
    // Predicated region
    $region70: #{seq2seq_forward.1} parent=1 // pred_check
      _
    $region71: #{seq2seq_forward.1} parent=1 // pred_check_branch
      %4611 = sbr.rel (0) target = $region73
    $region72: #{seq2seq_forward.1} parent=1 // pred_region
      %4612 = dma.done [#allocation4], 64
    $region73: #{seq2seq_forward.1} parent=1 // pred_fallthru
      _
    %4613 = vsyncpa [#allocation3], 1
    %4614 = vsyncpa [#allocation6], 1
    %4615 = vsyncpa [#allocation9], 1
    %4616 = vsyncpa [#allocation4], 1

</llo_original>
